<compile_context>
chip_gen: v6e
topology: v6e:2x2x1
jax: 0.10.0
libtpu: 0.0.40
codegen_flags: <defaults>
</compile_context>

<pallas_src>
import math
import numpy as np

import jax
import jax.numpy as jnp
from jax.experimental import pallas as pl
from jax.experimental.pallas import tpu as pltpu


# ----------------------------------------------------------------------------
# Pallas kernel
# ----------------------------------------------------------------------------
def _cmm3(ar, ai, br, bi):
    """(ar + i*ai) @ (br + i*bi) via 3 real MXU matmuls (Gauss), f32 accumulate.

    Operands are expected in bf16; the operand additions run on the VPU.
    """
    f32 = jnp.float32
    k1 = jnp.dot(ar + ai, br, preferred_element_type=f32)
    k2 = jnp.dot(ar, bi - br, preferred_element_type=f32)
    k3 = jnp.dot(ai, br + bi, preferred_element_type=f32)
    return k1 - k3, k1 + k2          # real, imag


def prop_sideband_kernel(xr_ref, xi_ref,
                         ar_ref, ai_ref, br_ref, bi_ref,
                         gyr_ref, gyi_ref, gxr_ref, gxi_ref,
                         hr_ref, hi_ref,
                         out_ref,
                         cr_s, ci_s, accr_s, acci_s):
    bf16 = jnp.bfloat16
    f32 = jnp.float32
    d = pl.program_id(1)
    k = pl.program_id(2)
    nk = pl.num_programs(2)
    ch = hr_ref.shape[1]                                   # chunk rows (2H axis)

    # ---- once per sample (d==0, k==0): padded ASM spectrum c = A @ x @ B ----
    @pl.when(jnp.logical_and(d == 0, k == 0))
    def _():
        xr = xr_ref[0, 0]                                  # (H, W)   bf16
        xi = xi_ref[0, 0]
        tr, ti = _cmm3(ar_ref[...], ai_ref[...], xr, xi)   # (2H, W)  f32
        cr, ci = _cmm3(tr.astype(bf16), ti.astype(bf16),
                       br_ref[...], bi_ref[...])           # (2H, 2W) f32
        cr_s[...] = cr.astype(bf16)
        ci_s[...] = ci.astype(bf16)

    # ---- per (sample, distance): reset the (H, 2W) accumulator at k==0 ----
    @pl.when(k == 0)
    def _():
        accr_s[...] = jnp.zeros_like(accr_s)
        acci_s[...] = jnp.zeros_like(acci_s)

    # ---- chunk of the 2H contraction: acc += GYc[:,chunk] @ (c_chunk * Hd_chunk)
    row0 = pl.multiple_of(k * ch, ch)
    cr = cr_s[pl.ds(row0, ch), :].astype(f32)              # (CH, 2W)
    ci = ci_s[pl.ds(row0, ch), :].astype(f32)
    hr = hr_ref[0].astype(f32)                             # (CH, 2W)
    hi = hi_ref[0].astype(f32)
    ur = (cr * hr - ci * hi).astype(bf16)
    ui = (cr * hi + ci * hr).astype(bf16)
    pr, pi = _cmm3(gyr_ref[...], gyi_ref[...], ur, ui)     # (H, 2W) f32
    accr_s[...] += pr
    acci_s[...] += pi

    # ---- finalize: z = acc @ GXTc, lane-packed [real | imag] writeback ----
    @pl.when(k == nk - 1)
    def _():
        zr, zi = _cmm3(accr_s[...].astype(bf16), acci_s[...].astype(bf16),
                       gxr_ref[...], gxi_ref[...])         # (H, W) f32
        out_ref[0, 0] = jnp.concatenate([zr, zi], axis=-1)  # (H, 2W)


# ----------------------------------------------------------------------------
# Constant construction (numpy, exact) and helpers
# ----------------------------------------------------------------------------
def _make_dft_mats_np(n):
    """F, G so that FT2(x) = F @ x @ F.T and iFT2(X) = G @ X @ G.T (per axis)."""
    eye = np.eye(n, dtype=np.complex128)
    F = np.fft.fftshift(np.fft.fft(eye, axis=0, norm='ortho'), axes=0)
    G = np.fft.ifft(np.fft.ifftshift(eye, axes=0), axis=0, norm='ortho')
    return F, G


def _filter_masks_np(field_res, aperture=1.0, sideband=True):
    """Separable row/col masks of compute_filter(shape='rect', sideband=True)."""
    ny, nx = field_res
    ix = np.linspace(-nx / 2, nx / 2, nx)
    iy = np.linspace(-ny / 2, ny / 2, ny)
    X = ix / np.max(np.abs(ix))
    Y = iy / np.max(np.abs(iy))
    ap = [aperture, aperture]
    if sideband:
        Y = Y - ap[0] / 2
        ap[0] = ap[0] / 2
    row_mask = (np.abs(Y) < ap[0]).astype(np.float64)
    col_mask = (np.abs(X) < ap[1]).astype(np.float64)
    return row_mask, col_mask


def compute_filter_jax(field_res, aperture=1.0, sideband=True):
    """JAX port of compute_filter(shape='rect', sideband=True) (reference only)."""
    ny, nx = field_res
    ix = jnp.linspace(-nx / 2, nx / 2, nx)
    iy = jnp.linspace(-ny / 2, ny / 2, ny)
    Y, X = jnp.meshgrid(iy, ix, indexing='ij')
    X = X / jnp.max(jnp.abs(X))
    Y = Y / jnp.max(jnp.abs(Y))
    ap = [aperture, aperture]
    if sideband:
        Y = Y - ap[0] / 2
        ap[0] = ap[0] / 2
    return ((jnp.abs(Y) < ap[0]) & (jnp.abs(X) < ap[1])).astype(jnp.float32)


def compute_Hs_jax(pad_res, feature_size, prop_dists, wavelength):
    """JAX port of ASM.compute_Hs (on the padded 2H x 2W grid)."""
    ny, nx = pad_res
    dy, dx = feature_size
    dfx = 1.0 / (nx * dx)
    dfy = 1.0 / (ny * dy)
    ix = jnp.linspace(-nx / 2, nx / 2, nx) * dfx
    iy = jnp.linspace(-ny / 2, ny / 2, ny) * dfy
    FY, FX = jnp.meshgrid(iy, ix, indexing='ij')
    Hs = []
    for dist in prop_dists:
        H_exp = 2 * jnp.pi * dist * jnp.sqrt(1 / wavelength ** 2 - FX ** 2 - FY ** 2)
        fy_max = 1 / math.sqrt((2 * dist * (1 / (dy * ny))) ** 2 + 1) / wavelength
        fx_max = 1 / math.sqrt((2 * dist * (1 / (dx * nx))) ** 2 + 1) / wavelength
        Hf = ((jnp.abs(FX) < fx_max) & (jnp.abs(FY) < fy_max)).astype(jnp.float32)
        Hs.append(Hf * jnp.exp(1j * H_exp))
    return jnp.stack(Hs, axis=0).astype(jnp.complex64)      # (D, 2H, 2W)


def _pick_chunk_rows(ny, chunk_rows=None, max_chunk=256):
    """Chunk of the 2H contraction axis.  GYc is blocked along its lane dim,
    so the chunk must be a multiple of 128 (or the whole axis)."""
    if chunk_rows is not None:
        if ny % chunk_rows != 0 or not (chunk_rows == ny or chunk_rows % 128 == 0):
            raise ValueError("chunk_rows must divide 2H and be a multiple of 128 "
                             "(or equal 2H)")
        return chunk_rows
    for c in range(min(max_chunk, ny), 0, -1):
        if ny % c == 0 and (c % 128 == 0 or c == ny):
            return c
    return ny


def _vmem_limit_bytes(H, W, CH):
    """Actual pipelined buffers + in-kernel temporaries, capped below the
    physical per-core VMEM (v7x has only 64 MiB/TC)."""
    ny, nx = 2 * H, 2 * W
    bf, f4 = 2, 4
    buf = 0
    buf += 2 * 2 * H * W * bf            # x r/i blocks (double-buffered)
    buf += 2 * 2 * ny * H * bf           # A r/i
    buf += 2 * 2 * W * nx * bf           # B r/i
    buf += 2 * 2 * H * CH * bf           # GYc chunk r/i
    buf += 2 * 2 * nx * W * bf           # GXTc r/i
    buf += 2 * 2 * CH * nx * bf          # Hs chunk r/i
    buf += 2 * H * (2 * W) * f4          # packed output block (double-buffered)
    buf += 2 * ny * nx * bf              # spectrum scratch r/i (bf16)
    buf += 2 * H * nx * f4               # f32 accumulators
    # in-kernel temporaries: Gauss partials of the once-per-sample spectrum
    # stage (f32, ny x nx), per-chunk f32 upcasts/products, per-chunk partials.
    tmp = 3 * ny * nx * f4 + 6 * CH * nx * f4 + 3 * H * nx * f4 + 3 * ny * W * f4
    need = buf + tmp
    try:
        cap = int(pltpu.get_tpu_info().vmem_capacity_bytes)
    except Exception:
        cap = 64 * 2 ** 20
    return int(max(16 * 2 ** 20, min(int(need * 1.25), int(cap * 0.8))))


# ----------------------------------------------------------------------------
# Wrapper calling the Pallas kernel
# ----------------------------------------------------------------------------
def prop_sideband_forward(x, feature_size, prop_dists, wavelength,
                          sideband_margin=0, aperture=1.0, chunk_rows=None):
    """x: complex64 (N, 1, H, W)  ->  complex64 (N, D, H, W)."""
    N, C, H, W = x.shape
    assert C == 1
    ny, nx = 2 * H, 2 * W
    py, px = (ny - H) // 2, (nx - W) // 2
    D = len(prop_dists)
    CH = _pick_chunk_rows(ny, chunk_rows)
    K = ny // CH

    # ---- fold all linear stages into small complex matrices (numpy, exact) ----
    FY, GY = _make_dft_mats_np(ny)
    FX, GX = _make_dft_mats_np(nx)
    FYp = FY[:, py:py + H]                 # (2H, H)  zero-pad folded into fwd DFT
    FXTp = FX[:, px:px + W].T              # (W, 2W)
    GYc = GY[py:py + H, :]                 # (H, 2H)  crop folded into inv DFT
    GXTc = GX[px:px + W, :].T              # (2W, W)

    row_mask, col_mask = _filter_masks_np((ny, nx), aperture=aperture, sideband=True)

    # sideband row shift (upper half -> center) as a 0/1 selection matrix S
    sp = round(ny / 4 * aperture)
    S = np.zeros((ny, ny), dtype=np.float64)
    src = np.arange(ny // 2 + sideband_margin, ny)
    S[src - sp, src] = 1.0

    # padded ASM spectrum  c = A @ x @ B   (sideband stage + re-pad + fwd DFT)
    A = FYp @ GYc @ S @ (row_mask[:, None] * FYp)      # (2H, H)
    B = (FXTp * col_mask[None, :]) @ GXTc @ FXTp       # (W, 2W)

    Hs = compute_Hs_jax((ny, nx), feature_size, prop_dists, wavelength)   # (D,2H,2W)

    bf16 = jnp.bfloat16
    cst = lambda m: (jnp.asarray(np.real(m), bf16), jnp.asarray(np.imag(m), bf16))
    Ar, Ai = cst(A)
    Br, Bi = cst(B)
    GYr, GYi = cst(GYc)
    GXr, GXi = cst(GXTc)

    xr = jnp.real(x).astype(bf16)
    xi = jnp.imag(x).astype(bf16)
    Hr = jnp.real(Hs).astype(bf16)          # bf16 Hs stream (dominant HBM traffic)
    Hi = jnp.imag(Hs).astype(bf16)

    const2 = lambda n, d, k: (0, 0)

    # Gauss form: 3 real matmuls (2*M*K*N flops each) per complex matmul.
    flops = int(N * 6 * (ny * H * W + ny * W * nx)
                + N * D * 6 * (H * ny * nx + H * nx * W))
    bytes_accessed = int(N * H * W * 2 * 2
                         + (ny * H + W * nx + H * ny + nx * W) * 2 * 2
                         + N * D * ny * nx * 2 * 2
                         + N * D * H * 2 * W * 4)

    out = pl.pallas_call(
        prop_sideband_kernel,
        out_shape=jax.ShapeDtypeStruct((N, D, H, 2 * W), jnp.float32),
        grid_spec=pltpu.PrefetchScalarGridSpec(
            num_scalar_prefetch=0,
            grid=(N, D, K),
            in_specs=[
                pl.BlockSpec((1, 1, H, W), lambda n, d, k: (n, 0, 0, 0)),
                pl.BlockSpec((1, 1, H, W), lambda n, d, k: (n, 0, 0, 0)),
                pl.BlockSpec((ny, H), const2), pl.BlockSpec((ny, H), const2),
                pl.BlockSpec((W, nx), const2), pl.BlockSpec((W, nx), const2),
                pl.BlockSpec((H, CH), lambda n, d, k: (0, k)),
                pl.BlockSpec((H, CH), lambda n, d, k: (0, k)),
                pl.BlockSpec((nx, W), const2), pl.BlockSpec((nx, W), const2),
                pl.BlockSpec((1, CH, nx), lambda n, d, k: (d, k, 0)),
                pl.BlockSpec((1, CH, nx), lambda n, d, k: (d, k, 0)),
            ],
            out_specs=pl.BlockSpec((1, 1, H, 2 * W), lambda n, d, k: (n, d, 0, 0)),
            scratch_shapes=[pltpu.VMEM((ny, nx), jnp.bfloat16),   # spectrum real
                            pltpu.VMEM((ny, nx), jnp.bfloat16),   # spectrum imag
                            pltpu.VMEM((H, nx), jnp.float32),     # acc real
                            pltpu.VMEM((H, nx), jnp.float32)],    # acc imag
        ),
        compiler_params=pltpu.CompilerParams(
            dimension_semantics=("parallel", "arbitrary", "arbitrary"),
            vmem_limit_bytes=_vmem_limit_bytes(H, W, CH),
        ),
        cost_estimate=pl.CostEstimate(flops=flops, transcendentals=0,
                                      bytes_accessed=bytes_accessed),
    )(xr, xi, Ar, Ai, Br, Bi, GYr, GYi, GXr, GXi, Hr, Hi)

    return out[..., :W] + 1j * out[..., W:]


# ----------------------------------------------------------------------------
# Pure-JAX reference (literal translation, using jnp.fft) for validation
# ----------------------------------------------------------------------------
def _FT2(u):
    return jnp.fft.fftshift(jnp.fft.fftn(u, axes=(-2, -1), norm='ortho'), axes=(-2, -1))


def _iFT2(U):
    return jnp.fft.ifftn(jnp.fft.ifftshift(U, axes=(-2, -1)), axes=(-2, -1), norm='ortho')


def prop_sideband_reference(x, feature_size, prop_dists, wavelength,
                            sideband_margin=0, aperture=1.0):
    N, C, H, W = x.shape
    ny, nx = 2 * H, 2 * W
    py, px = H // 2, W // 2
    filt = compute_filter_jax((ny, nx), aperture=aperture, sideband=True)
    Hs = compute_Hs_jax((ny, nx), feature_size, prop_dists, wavelength)

    x = x.astype(jnp.complex64)
    pad = jnp.zeros((N, C, ny, nx), jnp.complex64).at[:, :, py:py + H, px:px + W].set(x)
    ft = _FT2(pad) * filt
    out_ft = jnp.zeros_like(ft)
    sp = round(ny / 4 * aperture)
    m = sideband_margin
    out_ft = out_ft.at[..., ny // 2 + m - sp: ny - sp, :].set(ft[..., ny // 2 + m:, :])
    y = _iFT2(out_ft)[..., py:py + H, px:px + W]

    pad2 = jnp.zeros((N, C, ny, nx), jnp.complex64).at[:, :, py:py + H, px:px + W].set(y)
    U2 = _FT2(pad2) * Hs[None]                  # (N, D, 2H, 2W)
    u2 = _iFT2(U2)[..., py:py + H, px:px + W]   # (N, D, H, W)
    return u2


# ----------------------------------------------------------------------------
if __name__ == "__main__":
    # Small but MXU/lane-aligned shapes; chunk_rows=128 exercises the K=2
    # chunked-accumulation path.
    N, H, W = 2, 128, 128
    feature_size = (6.4e-6, 6.4e-6)
    prop_dists = (1.0e-3, 2.0e-3)
    wavelength = 520e-9
    sideband_margin = 2
    aperture = 1.0

    key = jax.random.PRNGKey(0)
    kr, ki = jax.random.split(key)
    x = (jax.random.normal(kr, (N, 1, H, W), jnp.float32)
         + 1j * jax.random.normal(ki, (N, 1, H, W), jnp.float32)).astype(jnp.complex64)

    out = prop_sideband_forward(x, feature_size, prop_dists, wavelength,
                                sideband_margin, aperture, chunk_rows=128)
    out = jax.block_until_ready(out)

    ref = prop_sideband_reference(x, feature_size, prop_dists, wavelength,
                                  sideband_margin, aperture)
    ref = jax.block_until_ready(ref)

    # bf16 MXU operands + bf16 Hs stream + bf16 spectrum scratch (f32 accumulate):
    # tolerance re-validated for the wider-than-v2 bf16 usage.
    np.testing.assert_allclose(np.asarray(out), np.asarray(ref), rtol=3e-2, atol=3e-2)
    print("KERNEL_OK")
</pallas_src>

<mosaic_0001>
module attributes {stable_mosaic.version = 11 : i64} {
  func.func @prop_sideband_kernel(%arg0: i32, %arg1: i32, %arg2: i32, %arg3: memref<1x1x128x128xbf16, #tpu.memory_space<vmem>>, %arg4: memref<1x1x128x128xbf16, #tpu.memory_space<vmem>>, %arg5: memref<256x128xbf16, #tpu.memory_space<vmem>>, %arg6: memref<256x128xbf16, #tpu.memory_space<vmem>>, %arg7: memref<128x256xbf16, #tpu.memory_space<vmem>>, %arg8: memref<128x256xbf16, #tpu.memory_space<vmem>>, %arg9: memref<128x128xbf16, #tpu.memory_space<vmem>>, %arg10: memref<128x128xbf16, #tpu.memory_space<vmem>>, %arg11: memref<256x128xbf16, #tpu.memory_space<vmem>>, %arg12: memref<256x128xbf16, #tpu.memory_space<vmem>>, %arg13: memref<1x128x256xbf16, #tpu.memory_space<vmem>>, %arg14: memref<1x128x256xbf16, #tpu.memory_space<vmem>>, %arg15: memref<1x1x128x256xf32, #tpu.memory_space<vmem>>, %arg16: memref<256x256xbf16, #tpu.memory_space<vmem>>, %arg17: memref<256x256xbf16, #tpu.memory_space<vmem>>, %arg18: memref<128x256xf32, #tpu.memory_space<vmem>>, %arg19: memref<128x256xf32, #tpu.memory_space<vmem>>) attributes {dimension_semantics = [#tpu.dimension_semantics<parallel>, #tpu.dimension_semantics<arbitrary>, #tpu.dimension_semantics<arbitrary>], iteration_bounds = array<i64: 2, 2, 2>, scalar_prefetch = 0 : i64, scratch_operands = 4 : i64, tpu.core_type = #tpu.core_type<tc>, window_params = [{transform_indices = @transform_0, window_bounds = array<i64: 1, 1, 128, 128>}, {transform_indices = @transform_1, window_bounds = array<i64: 1, 1, 128, 128>}, {pipeline_mode = #tpu.pipeline_mode<synchronous>, transform_indices = @transform_2, window_bounds = array<i64: 256, 128>}, {pipeline_mode = #tpu.pipeline_mode<synchronous>, transform_indices = @transform_3, window_bounds = array<i64: 256, 128>}, {pipeline_mode = #tpu.pipeline_mode<synchronous>, transform_indices = @transform_4, window_bounds = array<i64: 128, 256>}, {pipeline_mode = #tpu.pipeline_mode<synchronous>, transform_indices = @transform_5, window_bounds = array<i64: 128, 256>}, {transform_indices = @transform_6, window_bounds = array<i64: 128, 128>}, {transform_indices = @transform_7, window_bounds = array<i64: 128, 128>}, {pipeline_mode = #tpu.pipeline_mode<synchronous>, transform_indices = @transform_8, window_bounds = array<i64: 256, 128>}, {pipeline_mode = #tpu.pipeline_mode<synchronous>, transform_indices = @transform_9, window_bounds = array<i64: 256, 128>}, {transform_indices = @transform_10, window_bounds = array<i64: 1, 128, 256>}, {transform_indices = @transform_11, window_bounds = array<i64: 1, 128, 256>}, {transform_indices = @transform_12, window_bounds = array<i64: 1, 1, 128, 256>}]} {
    %c0_i32 = arith.constant 0 : i32
    %0 = arith.cmpi eq, %arg1, %c0_i32 : i32
    %c0_i32_0 = arith.constant 0 : i32
    %1 = arith.cmpi eq, %arg2, %c0_i32_0 : i32
    %2 = arith.andi %0, %1 : i1
    %3 = arith.extui %2 : i1 to i32
    %c0_i32_1 = arith.constant 0 : i32
    %4 = arith.cmpi ne, %3, %c0_i32_1 : i32
    scf.if %4 {
      %c0_26 = arith.constant 0 : index
      %c0_27 = arith.constant 0 : index
      %c0_28 = arith.constant 0 : index
      %c0_29 = arith.constant 0 : index
      %49 = vector.load %arg3[%c0_26, %c0_27, %c0_28, %c0_29] : memref<1x1x128x128xbf16, #tpu.memory_space<vmem>>, vector<1x1x128x128xbf16>
      %50 = vector.shape_cast %49 : vector<1x1x128x128xbf16> to vector<128x128xbf16>
      %c0_30 = arith.constant 0 : index
      %c0_31 = arith.constant 0 : index
      %c0_32 = arith.constant 0 : index
      %c0_33 = arith.constant 0 : index
      %51 = vector.load %arg4[%c0_30, %c0_31, %c0_32, %c0_33] : memref<1x1x128x128xbf16, #tpu.memory_space<vmem>>, vector<1x1x128x128xbf16>
      %52 = vector.shape_cast %51 : vector<1x1x128x128xbf16> to vector<128x128xbf16>
      %c0_34 = arith.constant 0 : index
      %c0_35 = arith.constant 0 : index
      %53 = vector.load %arg5[%c0_34, %c0_35] : memref<256x128xbf16, #tpu.memory_space<vmem>>, vector<256x128xbf16>
      %c0_36 = arith.constant 0 : index
      %c0_37 = arith.constant 0 : index
      %54 = vector.load %arg6[%c0_36, %c0_37] : memref<256x128xbf16, #tpu.memory_space<vmem>>, vector<256x128xbf16>
      %55 = arith.addf %53, %54 : vector<256x128xbf16>
      %cst_38 = arith.constant dense<0.000000e+00> : vector<256x128xf32>
      %56 = tpu.matmul %55, %50, %cst_38 {dimension_numbers = #tpu.dot_dimension_numbers<[1], [0], [0], [1], [0, 0, 1, 1], [], []>} : vector<256x128xbf16>, vector<128x128xbf16>, vector<256x128xf32> -> vector<256x128xf32>
      %57 = arith.subf %52, %50 : vector<128x128xbf16>
      %cst_39 = arith.constant dense<0.000000e+00> : vector<256x128xf32>
      %58 = tpu.matmul %53, %57, %cst_39 {dimension_numbers = #tpu.dot_dimension_numbers<[1], [0], [0], [1], [0, 0, 1, 1], [], []>} : vector<256x128xbf16>, vector<128x128xbf16>, vector<256x128xf32> -> vector<256x128xf32>
      %59 = arith.addf %50, %52 : vector<128x128xbf16>
      %cst_40 = arith.constant dense<0.000000e+00> : vector<256x128xf32>
      %60 = tpu.matmul %54, %59, %cst_40 {dimension_numbers = #tpu.dot_dimension_numbers<[1], [0], [0], [1], [0, 0, 1, 1], [], []>} : vector<256x128xbf16>, vector<128x128xbf16>, vector<256x128xf32> -> vector<256x128xf32>
      %61 = arith.subf %56, %60 : vector<256x128xf32>
      %62 = arith.addf %56, %58 : vector<256x128xf32>
      %63 = arith.truncf %61 : vector<256x128xf32> to vector<256x128xbf16>
      %64 = arith.truncf %62 : vector<256x128xf32> to vector<256x128xbf16>
      %c0_41 = arith.constant 0 : index
      %c0_42 = arith.constant 0 : index
      %65 = vector.load %arg7[%c0_41, %c0_42] : memref<128x256xbf16, #tpu.memory_space<vmem>>, vector<128x256xbf16>
      %c0_43 = arith.constant 0 : index
      %c0_44 = arith.constant 0 : index
      %66 = vector.load %arg8[%c0_43, %c0_44] : memref<128x256xbf16, #tpu.memory_space<vmem>>, vector<128x256xbf16>
      %67 = arith.addf %63, %64 : vector<256x128xbf16>
      %cst_45 = arith.constant dense<0.000000e+00> : vector<256x256xf32>
      %68 = tpu.matmul %67, %65, %cst_45 {dimension_numbers = #tpu.dot_dimension_numbers<[1], [0], [0], [1], [0, 0, 1, 1], [], []>} : vector<256x128xbf16>, vector<128x256xbf16>, vector<256x256xf32> -> vector<256x256xf32>
      %69 = arith.subf %66, %65 : vector<128x256xbf16>
      %cst_46 = arith.constant dense<0.000000e+00> : vector<256x256xf32>
      %70 = tpu.matmul %63, %69, %cst_46 {dimension_numbers = #tpu.dot_dimension_numbers<[1], [0], [0], [1], [0, 0, 1, 1], [], []>} : vector<256x128xbf16>, vector<128x256xbf16>, vector<256x256xf32> -> vector<256x256xf32>
      %71 = arith.addf %65, %66 : vector<128x256xbf16>
      %cst_47 = arith.constant dense<0.000000e+00> : vector<256x256xf32>
      %72 = tpu.matmul %64, %71, %cst_47 {dimension_numbers = #tpu.dot_dimension_numbers<[1], [0], [0], [1], [0, 0, 1, 1], [], []>} : vector<256x128xbf16>, vector<128x256xbf16>, vector<256x256xf32> -> vector<256x256xf32>
      %73 = arith.subf %68, %72 : vector<256x256xf32>
      %74 = arith.addf %68, %70 : vector<256x256xf32>
      %75 = arith.truncf %73 : vector<256x256xf32> to vector<256x256xbf16>
      %c0_48 = arith.constant 0 : index
      %c0_49 = arith.constant 0 : index
      %76 = vector.load %arg16[%c0_48, %c0_49] : memref<256x256xbf16, #tpu.memory_space<vmem>>, vector<256x256xbf16>
      tpu.vector_store %arg16[%c0_48, %c0_49], %75 {strides = array<i32>} : memref<256x256xbf16, #tpu.memory_space<vmem>>, vector<256x256xbf16>,
      %77 = arith.truncf %74 : vector<256x256xf32> to vector<256x256xbf16>
      %c0_50 = arith.constant 0 : index
      %c0_51 = arith.constant 0 : index
      %78 = vector.load %arg17[%c0_50, %c0_51] : memref<256x256xbf16, #tpu.memory_space<vmem>>, vector<256x256xbf16>
      tpu.vector_store %arg17[%c0_50, %c0_51], %77 {strides = array<i32>} : memref<256x256xbf16, #tpu.memory_space<vmem>>, vector<256x256xbf16>,
    } else {
    }
    %c0_i32_2 = arith.constant 0 : i32
    %5 = arith.cmpi eq, %arg2, %c0_i32_2 : i32
    %6 = arith.extui %5 : i1 to i32
    %c0_i32_3 = arith.constant 0 : i32
    %7 = arith.cmpi ne, %6, %c0_i32_3 : i32
    scf.if %7 {
      %cst_26 = arith.constant 0.000000e+00 : f32
      %49 = vector.broadcast %cst_26 : f32 to vector<128x256xf32>
      %c0_27 = arith.constant 0 : index
      %c0_28 = arith.constant 0 : index
      %50 = vector.load %arg18[%c0_27, %c0_28] : memref<128x256xf32, #tpu.memory_space<vmem>>, vector<128x256xf32>
      tpu.vector_store %arg18[%c0_27, %c0_28], %49 {strides = array<i32>} : memref<128x256xf32, #tpu.memory_space<vmem>>, vector<128x256xf32>,
      %cst_29 = arith.constant 0.000000e+00 : f32
      %51 = vector.broadcast %cst_29 : f32 to vector<128x256xf32>
      %c0_30 = arith.constant 0 : index
      %c0_31 = arith.constant 0 : index
      %52 = vector.load %arg19[%c0_30, %c0_31] : memref<128x256xf32, #tpu.memory_space<vmem>>, vector<128x256xf32>
      tpu.vector_store %arg19[%c0_30, %c0_31], %51 {strides = array<i32>} : memref<128x256xf32, #tpu.memory_space<vmem>>, vector<128x256xf32>,
    } else {
    }
    %c128_i32 = arith.constant 128 : i32
    %8 = arith.muli %arg2, %c128_i32 : i32
    %9 = tpu.assume_multiple %8, 128 : i32
    %10 = arith.index_cast %9 : i32 to index
    %c0 = arith.constant 0 : index
    %11 = vector.load %arg16[%10, %c0] : memref<256x256xbf16, #tpu.memory_space<vmem>>, vector<128x256xbf16>
    %12 = arith.extf %11 : vector<128x256xbf16> to vector<128x256xf32>
    %13 = arith.index_cast %9 : i32 to index
    %c0_4 = arith.constant 0 : index
    %14 = vector.load %arg17[%13, %c0_4] : memref<256x256xbf16, #tpu.memory_space<vmem>>, vector<128x256xbf16>
    %15 = arith.extf %14 : vector<128x256xbf16> to vector<128x256xf32>
    %c0_5 = arith.constant 0 : index
    %c0_6 = arith.constant 0 : index
    %c0_7 = arith.constant 0 : index
    %16 = vector.load %arg13[%c0_5, %c0_6, %c0_7] : memref<1x128x256xbf16, #tpu.memory_space<vmem>>, vector<1x128x256xbf16>
    %17 = vector.shape_cast %16 : vector<1x128x256xbf16> to vector<128x256xbf16>
    %18 = arith.extf %17 : vector<128x256xbf16> to vector<128x256xf32>
    %c0_8 = arith.constant 0 : index
    %c0_9 = arith.constant 0 : index
    %c0_10 = arith.constant 0 : index
    %19 = vector.load %arg14[%c0_8, %c0_9, %c0_10] : memref<1x128x256xbf16, #tpu.memory_space<vmem>>, vector<1x128x256xbf16>
    %20 = vector.shape_cast %19 : vector<1x128x256xbf16> to vector<128x256xbf16>
    %21 = arith.extf %20 : vector<128x256xbf16> to vector<128x256xf32>
    %22 = arith.mulf %12, %18 : vector<128x256xf32>
    %23 = arith.mulf %15, %21 : vector<128x256xf32>
    %24 = arith.subf %22, %23 : vector<128x256xf32>
    %25 = arith.truncf %24 : vector<128x256xf32> to vector<128x256xbf16>
    %26 = arith.mulf %12, %21 : vector<128x256xf32>
    %27 = arith.mulf %15, %18 : vector<128x256xf32>
    %28 = arith.addf %26, %27 : vector<128x256xf32>
    %29 = arith.truncf %28 : vector<128x256xf32> to vector<128x256xbf16>
    %c0_11 = arith.constant 0 : index
    %c0_12 = arith.constant 0 : index
    %30 = vector.load %arg9[%c0_11, %c0_12] : memref<128x128xbf16, #tpu.memory_space<vmem>>, vector<128x128xbf16>
    %c0_13 = arith.constant 0 : index
    %c0_14 = arith.constant 0 : index
    %31 = vector.load %arg10[%c0_13, %c0_14] : memref<128x128xbf16, #tpu.memory_space<vmem>>, vector<128x128xbf16>
    %32 = arith.addf %30, %31 : vector<128x128xbf16>
    %cst = arith.constant dense<0.000000e+00> : vector<128x256xf32>
    %33 = tpu.matmul %32, %25, %cst {dimension_numbers = #tpu.dot_dimension_numbers<[1], [0], [0], [1], [0, 0, 1, 1], [], []>} : vector<128x128xbf16>, vector<128x256xbf16>, vector<128x256xf32> -> vector<128x256xf32>
    %34 = arith.subf %29, %25 : vector<128x256xbf16>
    %cst_15 = arith.constant dense<0.000000e+00> : vector<128x256xf32>
    %35 = tpu.matmul %30, %34, %cst_15 {dimension_numbers = #tpu.dot_dimension_numbers<[1], [0], [0], [1], [0, 0, 1, 1], [], []>} : vector<128x128xbf16>, vector<128x256xbf16>, vector<128x256xf32> -> vector<128x256xf32>
    %36 = arith.addf %25, %29 : vector<128x256xbf16>
    %cst_16 = arith.constant dense<0.000000e+00> : vector<128x256xf32>
    %37 = tpu.matmul %31, %36, %cst_16 {dimension_numbers = #tpu.dot_dimension_numbers<[1], [0], [0], [1], [0, 0, 1, 1], [], []>} : vector<128x128xbf16>, vector<128x256xbf16>, vector<128x256xf32> -> vector<128x256xf32>
    %38 = arith.subf %33, %37 : vector<128x256xf32>
    %39 = arith.addf %33, %35 : vector<128x256xf32>
    %c0_17 = arith.constant 0 : index
    %c0_18 = arith.constant 0 : index
    %40 = vector.load %arg18[%c0_17, %c0_18] : memref<128x256xf32, #tpu.memory_space<vmem>>, vector<128x256xf32>
    %41 = arith.addf %40, %38 : vector<128x256xf32>
    %c0_19 = arith.constant 0 : index
    %c0_20 = arith.constant 0 : index
    %42 = vector.load %arg18[%c0_19, %c0_20] : memref<128x256xf32, #tpu.memory_space<vmem>>, vector<128x256xf32>
    tpu.vector_store %arg18[%c0_19, %c0_20], %41 {strides = array<i32>} : memref<128x256xf32, #tpu.memory_space<vmem>>, vector<128x256xf32>,
    %c0_21 = arith.constant 0 : index
    %c0_22 = arith.constant 0 : index
    %43 = vector.load %arg19[%c0_21, %c0_22] : memref<128x256xf32, #tpu.memory_space<vmem>>, vector<128x256xf32>
    %44 = arith.addf %43, %39 : vector<128x256xf32>
    %c0_23 = arith.constant 0 : index
    %c0_24 = arith.constant 0 : index
    %45 = vector.load %arg19[%c0_23, %c0_24] : memref<128x256xf32, #tpu.memory_space<vmem>>, vector<128x256xf32>
    tpu.vector_store %arg19[%c0_23, %c0_24], %44 {strides = array<i32>} : memref<128x256xf32, #tpu.memory_space<vmem>>, vector<128x256xf32>,
    %c1_i32 = arith.constant 1 : i32
    %46 = arith.cmpi eq, %arg2, %c1_i32 : i32
    %47 = arith.extui %46 : i1 to i32
    %c0_i32_25 = arith.constant 0 : i32
    %48 = arith.cmpi ne, %47, %c0_i32_25 : i32
    scf.if %48 {
      %c0_26 = arith.constant 0 : index
      %c0_27 = arith.constant 0 : index
      %49 = vector.load %arg18[%c0_26, %c0_27] : memref<128x256xf32, #tpu.memory_space<vmem>>, vector<128x256xf32>
      %50 = arith.truncf %49 : vector<128x256xf32> to vector<128x256xbf16>
      %c0_28 = arith.constant 0 : index
      %c0_29 = arith.constant 0 : index
      %51 = vector.load %arg19[%c0_28, %c0_29] : memref<128x256xf32, #tpu.memory_space<vmem>>, vector<128x256xf32>
      %52 = arith.truncf %51 : vector<128x256xf32> to vector<128x256xbf16>
      %c0_30 = arith.constant 0 : index
      %c0_31 = arith.constant 0 : index
      %53 = vector.load %arg11[%c0_30, %c0_31] : memref<256x128xbf16, #tpu.memory_space<vmem>>, vector<256x128xbf16>
      %c0_32 = arith.constant 0 : index
      %c0_33 = arith.constant 0 : index
      %54 = vector.load %arg12[%c0_32, %c0_33] : memref<256x128xbf16, #tpu.memory_space<vmem>>, vector<256x128xbf16>
      %55 = arith.addf %50, %52 : vector<128x256xbf16>
      %cst_34 = arith.constant dense<0.000000e+00> : vector<128x128xf32>
      %56 = tpu.matmul %55, %53, %cst_34 {dimension_numbers = #tpu.dot_dimension_numbers<[1], [0], [0], [1], [0, 0, 1, 1], [], []>} : vector<128x256xbf16>, vector<256x128xbf16>, vector<128x128xf32> -> vector<128x128xf32>
      %57 = arith.subf %54, %53 : vector<256x128xbf16>
      %cst_35 = arith.constant dense<0.000000e+00> : vector<128x128xf32>
      %58 = tpu.matmul %50, %57, %cst_35 {dimension_numbers = #tpu.dot_dimension_numbers<[1], [0], [0], [1], [0, 0, 1, 1], [], []>} : vector<128x256xbf16>, vector<256x128xbf16>, vector<128x128xf32> -> vector<128x128xf32>
      %59 = arith.addf %53, %54 : vector<256x128xbf16>
      %cst_36 = arith.constant dense<0.000000e+00> : vector<128x128xf32>
      %60 = tpu.matmul %52, %59, %cst_36 {dimension_numbers = #tpu.dot_dimension_numbers<[1], [0], [0], [1], [0, 0, 1, 1], [], []>} : vector<128x256xbf16>, vector<256x128xbf16>, vector<128x128xf32> -> vector<128x128xf32>
      %61 = arith.subf %56, %60 : vector<128x128xf32>
      %62 = arith.addf %56, %58 : vector<128x128xf32>
      %63 = tpu.concatenate %61, %62 in 1 : vector<128x128xf32>, vector<128x128xf32> -> vector<128x256xf32>
      %c0_37 = arith.constant 0 : index
      %c0_38 = arith.constant 0 : index
      %c0_39 = arith.constant 0 : index
      %c0_40 = arith.constant 0 : index
      %64 = vector.load %arg15[%c0_37, %c0_38, %c0_39, %c0_40] : memref<1x1x128x256xf32, #tpu.memory_space<vmem>>, vector<1x1x128x256xf32>
      %65 = vector.shape_cast %64 : vector<1x1x128x256xf32> to vector<128x256xf32>
      %66 = vector.shape_cast %63 : vector<128x256xf32> to vector<1x1x128x256xf32>
      tpu.vector_store %arg15[%c0_37, %c0_38, %c0_39, %c0_40], %66 {strides = array<i32>} : memref<1x1x128x256xf32, #tpu.memory_space<vmem>>, vector<1x1x128x256xf32>,
    } else {
    }
    return
  }
  func.func @transform_0(%arg0: i32, %arg1: i32, %arg2: i32) -> (i32, i32, i32, i32) {
    %c0_i32 = arith.constant 0 : i32
    %c0_i32_0 = arith.constant 0 : i32
    %c0_i32_1 = arith.constant 0 : i32
    %c0_i32_2 = arith.constant 0 : i32
    return %arg0, %c0_i32, %c0_i32_0, %c0_i32_1 : i32, i32, i32, i32
  }
  func.func @transform_1(%arg0: i32, %arg1: i32, %arg2: i32) -> (i32, i32, i32, i32) {
    %c0_i32 = arith.constant 0 : i32
    %c0_i32_0 = arith.constant 0 : i32
    %c0_i32_1 = arith.constant 0 : i32
    %c0_i32_2 = arith.constant 0 : i32
    return %arg0, %c0_i32, %c0_i32_0, %c0_i32_1 : i32, i32, i32, i32
  }
  func.func @transform_2(%arg0: i32, %arg1: i32, %arg2: i32) -> (i32, i32) {
    %c0_i32 = arith.constant 0 : i32
    %c0_i32_0 = arith.constant 0 : i32
    %c0_i32_1 = arith.constant 0 : i32
    return %c0_i32, %c0_i32_0 : i32, i32
  }
  func.func @transform_3(%arg0: i32, %arg1: i32, %arg2: i32) -> (i32, i32) {
    %c0_i32 = arith.constant 0 : i32
    %c0_i32_0 = arith.constant 0 : i32
    %c0_i32_1 = arith.constant 0 : i32
    return %c0_i32, %c0_i32_0 : i32, i32
  }
  func.func @transform_4(%arg0: i32, %arg1: i32, %arg2: i32) -> (i32, i32) {
    %c0_i32 = arith.constant 0 : i32
    %c0_i32_0 = arith.constant 0 : i32
    %c0_i32_1 = arith.constant 0 : i32
    return %c0_i32, %c0_i32_0 : i32, i32
  }
  func.func @transform_5(%arg0: i32, %arg1: i32, %arg2: i32) -> (i32, i32) {
    %c0_i32 = arith.constant 0 : i32
    %c0_i32_0 = arith.constant 0 : i32
    %c0_i32_1 = arith.constant 0 : i32
    return %c0_i32, %c0_i32_0 : i32, i32
  }
  func.func @transform_6(%arg0: i32, %arg1: i32, %arg2: i32) -> (i32, i32) {
    %c0_i32 = arith.constant 0 : i32
    %c0_i32_0 = arith.constant 0 : i32
    return %c0_i32, %arg2 : i32, i32
  }
  func.func @transform_7(%arg0: i32, %arg1: i32, %arg2: i32) -> (i32, i32) {
    %c0_i32 = arith.constant 0 : i32
    %c0_i32_0 = arith.constant 0 : i32
    return %c0_i32, %arg2 : i32, i32
  }
  func.func @transform_8(%arg0: i32, %arg1: i32, %arg2: i32) -> (i32, i32) {
    %c0_i32 = arith.constant 0 : i32
    %c0_i32_0 = arith.constant 0 : i32
    %c0_i32_1 = arith.constant 0 : i32
    return %c0_i32, %c0_i32_0 : i32, i32
  }
  func.func @transform_9(%arg0: i32, %arg1: i32, %arg2: i32) -> (i32, i32) {
    %c0_i32 = arith.constant 0 : i32
    %c0_i32_0 = arith.constant 0 : i32
    %c0_i32_1 = arith.constant 0 : i32
    return %c0_i32, %c0_i32_0 : i32, i32
  }
  func.func @transform_10(%arg0: i32, %arg1: i32, %arg2: i32) -> (i32, i32, i32) {
    %c0_i32 = arith.constant 0 : i32
    %c0_i32_0 = arith.constant 0 : i32
    return %arg1, %arg2, %c0_i32 : i32, i32, i32
  }
  func.func @transform_11(%arg0: i32, %arg1: i32, %arg2: i32) -> (i32, i32, i32) {
    %c0_i32 = arith.constant 0 : i32
    %c0_i32_0 = arith.constant 0 : i32
    return %arg1, %arg2, %c0_i32 : i32, i32, i32
  }
  func.func @transform_12(%arg0: i32, %arg1: i32, %arg2: i32) -> (i32, i32, i32, i32) {
    %c0_i32 = arith.constant 0 : i32
    %c0_i32_0 = arith.constant 0 : i32
    %c0_i32_1 = arith.constant 0 : i32
    return %arg0, %arg1, %c0_i32, %c0_i32_0 : i32, i32, i32, i32
  }
}

</mosaic_0001>

<llo_original>
// kernel: tpu_custom_call.1
$region0: #{tpu_custom_call.1}
  #allocation0 [shape = 'u32[]', space=smem, size = 0x4, offset = 0x4, fixed_abs, tag = 'smem constant byte address 0x4 - core index']
  #allocation1 [shape = 'u32[144,128]{1,0:T(1,128)}', space=vmem, size = 0x12000, scoped, tag = 'internal scratch']
  #allocation2 [shape = 'bf16[256,256]{1,0:T(8,128)(2,1)}', space=vmem, size = 0x20000, scoped, tag = 'scratch operand']
  #allocation3 [shape = 'bf16[256,256]{1,0:T(8,128)(2,1)}', space=vmem, size = 0x20000, scoped, tag = 'scratch operand']
  #allocation4 [shape = 'f32[128,256]{1,0:T(8,128)}', space=vmem, size = 0x20000, scoped, tag = 'scratch operand']
  #allocation5 [shape = 'f32[128,256]{1,0:T(8,128)}', space=vmem, size = 0x20000, scoped, tag = 'scratch operand']
  %s0 = inlined_call_operand.hbm [shape: bf16[2,1,128,128], index: 0, kind: input, shape index: {}]
  %s1 = inlined_call_operand.hbm [shape: bf16[2,1,128,128], index: 1, kind: input, shape index: {}]
  %s2 = inlined_call_operand.hbm [shape: bf16[256,128], index: 2, kind: input, shape index: {}]
  %s3 = inlined_call_operand.hbm [shape: bf16[256,128], index: 3, kind: input, shape index: {}]
  %s4 = inlined_call_operand.hbm [shape: bf16[128,256], index: 4, kind: input, shape index: {}]
  %s5 = inlined_call_operand.hbm [shape: bf16[128,256], index: 5, kind: input, shape index: {}]
  %s6 = inlined_call_operand.hbm [shape: bf16[128,256], index: 6, kind: input, shape index: {}]
  %s7 = inlined_call_operand.hbm [shape: bf16[128,256], index: 7, kind: input, shape index: {}]
  %s8 = inlined_call_operand.hbm [shape: bf16[256,128], index: 8, kind: input, shape index: {}]
  %s9 = inlined_call_operand.hbm [shape: bf16[256,128], index: 9, kind: input, shape index: {}]
  %s10 = inlined_call_operand.hbm [shape: bf16[2,256,256], index: 10, kind: input, shape index: {}]
  %s11 = inlined_call_operand.hbm [shape: bf16[2,256,256], index: 11, kind: input, shape index: {}]
  %s12 = inlined_call_operand.hbm [shape: f32[2,2,128,256], index: 12, kind: output, shape index: {}]
  %s13 = sld [smem:[#allocation0]]
  $region141: #{tpu_custom_call.1} parent=0
    _
  %s15 = ssub.s32 1, %s13
  %s16 = scalar_select 0, %s15, %s13
  $region1: #{tpu_custom_call.1} parent=0
    #allocation6 [shape = 'u8[65536]{0}', space=vmem, size = 0x10000, scoped, tag = 'input window, operand 0']
    #allocation7 [shape = 's32[2]{0}', space=sflag, size = 0x8, scoped, tag = 'scoped memory for tpu_custom_call.1']
    #allocation8 [shape = 's32[2]{0}', space=sflag, size = 0x8, scoped, tag = 'scoped memory for tpu_custom_call.1']
    #allocation9 [shape = 'u8[65536]{0}', space=vmem, size = 0x10000, scoped, tag = 'input window, operand 1']
    #allocation10 [shape = 's32[2]{0}', space=sflag, size = 0x8, scoped, tag = 'scoped memory for tpu_custom_call.1']
    #allocation11 [shape = 'u8[65536]{0}', space=vmem, size = 0x10000, scoped, tag = 'input window, operand 2, single buffered']
    #allocation12 [shape = 'u8[65536]{0}', space=vmem, size = 0x10000, scoped, tag = 'input window, operand 3, single buffered']
    #allocation13 [shape = 's32[1]{0}', space=sflag, size = 0x4, scoped, tag = 'scoped memory for tpu_custom_call.1']
    #allocation14 [shape = 'u8[65536]{0}', space=vmem, size = 0x10000, scoped, tag = 'input window, operand 4, single buffered']
    #allocation15 [shape = 'u8[65536]{0}', space=vmem, size = 0x10000, scoped, tag = 'input window, operand 5, single buffered']
    #allocation16 [shape = 's32[1]{0}', space=sflag, size = 0x4, scoped, tag = 'scoped memory for tpu_custom_call.1']
    #allocation17 [shape = 'u8[65536]{0}', space=vmem, size = 0x10000, scoped, tag = 'input window, operand 6']
    #allocation18 [shape = 'u8[65536]{0}', space=vmem, size = 0x10000, scoped, tag = 'input window, operand 7']
    #allocation19 [shape = 'u8[65536]{0}', space=vmem, size = 0x10000, scoped, tag = 'input window, operand 8, single buffered']
    #allocation20 [shape = 'u8[65536]{0}', space=vmem, size = 0x10000, scoped, tag = 'input window, operand 9, single buffered']
    #allocation21 [shape = 'u8[131072]{0}', space=vmem, size = 0x20000, scoped, tag = 'input window, operand 10']
    #allocation22 [shape = 's32[2]{0}', space=sflag, size = 0x8, scoped, tag = 'scoped memory for tpu_custom_call.1']
    #allocation23 [shape = 'u8[131072]{0}', space=vmem, size = 0x20000, scoped, tag = 'input window, operand 11']
    #allocation24 [shape = 'u8[262144]{0}', space=vmem, size = 0x40000, scoped, tag = 'output window, operand 0']
    %17 = vsyncpa [#allocation7], 0
    %s18 = scalar_lea.sflag [#allocation7], 1
    %19 = vsyncpa %s18, 0
    %20 = vsyncpa [#allocation10], 0
    %s21 = scalar_lea.sflag [#allocation10], 1
    %22 = vsyncpa %s21, 0
    %23 = vsyncpa [#allocation13], 0
    %24 = vsyncpa [#allocation16], 0
    %25 = vsyncpa [#allocation22], 0
    %s26 = scalar_lea.sflag [#allocation22], 1
    %27 = vsyncpa %s26, 0
    %28 = vsyncpa [#allocation8], 0
    %s29 = scalar_lea.sflag [#allocation8], 1
    %30 = vsyncpa %s29, 0
    loop: start=0, step=1, limit=10
    $region2: #{tpu_custom_call.1} parent=1 // loop_pre_header
      _
    $region3: #{tpu_custom_call.1} parent=1 // loop_header
      %s32 = sphi 0, %s36
      %p33 = scmp.ge.s32.totalorder %s32, 10
      %s39 = sphi 0, %s58
      %s40 = sphi 0, %s54
      %s41 = sphi 0, %s50
      %s42 = sphi 0, %s39
      %s43 = sphi 0, %s40
      %s44 = sphi 0, %s41
      %s45 = sphi 0, %s42
      %s46 = sphi 0, %s43
      %s47 = sphi 0, %s44
      %s61 = sphi 0, %s63
      %s64 = sphi 0, %s61
      %s65 = sphi 0, %s64
      %s81 = sphi 0, %s65
      %s87 = sphi 0, %s89
      %s90 = sphi 0, %s87
      %s91 = sphi 0, %s90
      %s107 = sphi 0, %s91
      %s111 = sphi 0, %s111
      %s113 = sphi 0, %s111
      %s114 = sphi 0, %s113
      %s128 = sphi 0, %s114
      %s132 = sphi 0, %s132
      %s134 = sphi 0, %s132
      %s135 = sphi 0, %s134
      %s149 = sphi 0, %s135
      %s153 = sphi 0, %s153
      %s155 = sphi 0, %s153
      %s156 = sphi 0, %s155
      %s170 = sphi 0, %s156
      %s174 = sphi 0, %s174
      %s176 = sphi 0, %s174
      %s177 = sphi 0, %s176
      %s191 = sphi 0, %s177
      %s197 = sphi 0, %s199
      %s200 = sphi 0, %s197
      %s201 = sphi 0, %s200
      %s217 = sphi 0, %s201
      %s223 = sphi 0, %s225
      %s226 = sphi 0, %s223
      %s227 = sphi 0, %s226
      %s243 = sphi 0, %s227
      %s247 = sphi 0, %s247
      %s249 = sphi 0, %s247
      %s250 = sphi 0, %s249
      %s264 = sphi 0, %s250
      %s268 = sphi 0, %s268
      %s270 = sphi 0, %s268
      %s271 = sphi 0, %s270
      %s285 = sphi 0, %s271
      %s293 = sphi 0, %s295
      %s296 = sphi 0, %s293
      %s297 = sphi 0, %s296
      %s313 = sphi 0, %s297
      %s321 = sphi 0, %s323
      %s324 = sphi 0, %s321
      %s325 = sphi 0, %s324
      %s341 = sphi 0, %s325
      %s349 = sphi 0, %s351
      %s352 = sphi 0, %s349
      %s353 = sphi 0, %s352
      %s369 = sphi 0, %s353
    $region4: #{tpu_custom_call.1} parent=1 // loop_header_branch
      %35 = sbr.rel (%p33) target = $region8
    $region5: #{tpu_custom_call.1} parent=1 // loop_body
      %s37 = ssub.s32 %s32, 1
      %s38 = ssub.s32 %s32, 2
      %s48 = sadd.s32 1, %s41
      %p49 = scmp.ge.s32.totalorder %s48, 2
      %s50 = scalar_select %p49, 0, %s48
      %s51 = sadd.s32 1, %s40
      %s52 = scalar_select %p49, %s51, %s40
      %p53 = scmp.ge.s32.totalorder %s52, 2
      %s54 = scalar_select %p53, 0, %s52
      %s55 = sadd.s32 1, %s39
      %s56 = scalar_select %p53, %s55, %s39
      %p57 = scmp.ge.s32.totalorder %s56, 2
      %s58 = scalar_select %p57, 0, %s56
      %s59 = ssub.s32 %s39, %s58
      %p60 = scmp.eq.s32.totalorder %s59, 0
      %s62 = sadd.s32 %s61, 1
      %s63 = scalar_select %p60, %s61, %s62
      %p66 = pneg %p60
      %p67 = scmp.eq.s32.totalorder %s32, 7
      %p68 = por %p66, %p67
      %p69 = scmp.ne.s32.totalorder %s61, %s64
      %p70 = scmp.eq.s32.totalorder %s32, 0
      %p71 = por %p69, %p70
      %p72 = scmp.ne.s32.totalorder %s61, %s64
      %p73 = scmp.eq.s32.totalorder %s37, 7
      %p74 = por %p72, %p73
      %p75 = scmp.ne.s32.totalorder %s64, %s65
      %p76 = scmp.eq.s32.totalorder %s37, 0
      %p77 = por %p75, %p76
      %p78 = scmp.ne.s32.totalorder %s64, %s65
      %p79 = scmp.eq.s32.totalorder %s38, 7
      %p80 = por %p78, %p79
      %p82 = scmp.ne.s32.totalorder %s65, %s81
      %p83 = scmp.eq.s32.totalorder %s38, 0
      %p84 = por %p82, %p83
      %s85 = ssub.s32 %s39, %s58
      %p86 = scmp.eq.s32.totalorder %s85, 0
      %s88 = sadd.s32 %s87, 1
      %s89 = scalar_select %p86, %s87, %s88
      %p92 = pneg %p86
      %p93 = scmp.eq.s32.totalorder %s32, 7
      %p94 = por %p92, %p93
      %p95 = scmp.ne.s32.totalorder %s87, %s90
      %p96 = scmp.eq.s32.totalorder %s32, 0
      %p97 = por %p95, %p96
      %p98 = scmp.ne.s32.totalorder %s87, %s90
      %p99 = scmp.eq.s32.totalorder %s37, 7
      %p100 = por %p98, %p99
      %p101 = scmp.ne.s32.totalorder %s90, %s91
      %p102 = scmp.eq.s32.totalorder %s37, 0
      %p103 = por %p101, %p102
      %p104 = scmp.ne.s32.totalorder %s90, %s91
      %p105 = scmp.eq.s32.totalorder %s38, 7
      %p106 = por %p104, %p105
      %p108 = scmp.ne.s32.totalorder %s91, %s107
      %p109 = scmp.eq.s32.totalorder %s38, 0
      %p110 = por %p108, %p109
      %s112 = sadd.s32 %s111, 1
      %p115 = scmp.eq.s32.totalorder %s32, 7
      %p116 = scmp.ne.s32.totalorder %s111, %s113
      %p117 = scmp.eq.s32.totalorder %s32, 0
      %p118 = por %p116, %p117
      %p119 = scmp.ne.s32.totalorder %s111, %s113
      %p120 = scmp.eq.s32.totalorder %s37, 7
      %p121 = por %p119, %p120
      %p122 = scmp.ne.s32.totalorder %s113, %s114
      %p123 = scmp.eq.s32.totalorder %s37, 0
      %p124 = por %p122, %p123
      %p125 = scmp.ne.s32.totalorder %s113, %s114
      %p126 = scmp.eq.s32.totalorder %s38, 7
      %p127 = por %p125, %p126
      %p129 = scmp.ne.s32.totalorder %s114, %s128
      %p130 = scmp.eq.s32.totalorder %s38, 0
      %p131 = por %p129, %p130
      %s133 = sadd.s32 %s132, 1
      %p136 = scmp.eq.s32.totalorder %s32, 7
      %p137 = scmp.ne.s32.totalorder %s132, %s134
      %p138 = scmp.eq.s32.totalorder %s32, 0
      %p139 = por %p137, %p138
      %p140 = scmp.ne.s32.totalorder %s132, %s134
      %p141 = scmp.eq.s32.totalorder %s37, 7
      %p142 = por %p140, %p141
      %p143 = scmp.ne.s32.totalorder %s134, %s135
      %p144 = scmp.eq.s32.totalorder %s37, 0
      %p145 = por %p143, %p144
      %p146 = scmp.ne.s32.totalorder %s134, %s135
      %p147 = scmp.eq.s32.totalorder %s38, 7
      %p148 = por %p146, %p147
      %p150 = scmp.ne.s32.totalorder %s135, %s149
      %p151 = scmp.eq.s32.totalorder %s38, 0
      %p152 = por %p150, %p151
      %s154 = sadd.s32 %s153, 1
      %p157 = scmp.eq.s32.totalorder %s32, 7
      %p158 = scmp.ne.s32.totalorder %s153, %s155
      %p159 = scmp.eq.s32.totalorder %s32, 0
      %p160 = por %p158, %p159
      %p161 = scmp.ne.s32.totalorder %s153, %s155
      %p162 = scmp.eq.s32.totalorder %s37, 7
      %p163 = por %p161, %p162
      %p164 = scmp.ne.s32.totalorder %s155, %s156
      %p165 = scmp.eq.s32.totalorder %s37, 0
      %p166 = por %p164, %p165
      %p167 = scmp.ne.s32.totalorder %s155, %s156
      %p168 = scmp.eq.s32.totalorder %s38, 7
      %p169 = por %p167, %p168
      %p171 = scmp.ne.s32.totalorder %s156, %s170
      %p172 = scmp.eq.s32.totalorder %s38, 0
      %p173 = por %p171, %p172
      %s175 = sadd.s32 %s174, 1
      %p178 = scmp.eq.s32.totalorder %s32, 7
      %p179 = scmp.ne.s32.totalorder %s174, %s176
      %p180 = scmp.eq.s32.totalorder %s32, 0
      %p181 = por %p179, %p180
      %p182 = scmp.ne.s32.totalorder %s174, %s176
      %p183 = scmp.eq.s32.totalorder %s37, 7
      %p184 = por %p182, %p183
      %p185 = scmp.ne.s32.totalorder %s176, %s177
      %p186 = scmp.eq.s32.totalorder %s37, 0
      %p187 = por %p185, %p186
      %p188 = scmp.ne.s32.totalorder %s176, %s177
      %p189 = scmp.eq.s32.totalorder %s38, 7
      %p190 = por %p188, %p189
      %p192 = scmp.ne.s32.totalorder %s177, %s191
      %p193 = scmp.eq.s32.totalorder %s38, 0
      %p194 = por %p192, %p193
      %s195 = ssub.s32 %s41, %s50
      %p196 = scmp.eq.s32.totalorder %s195, 0
      %s198 = sadd.s32 %s197, 1
      %s199 = scalar_select %p196, %s197, %s198
      %p202 = pneg %p196
      %p203 = scmp.eq.s32.totalorder %s32, 7
      %p204 = por %p202, %p203
      %p205 = scmp.ne.s32.totalorder %s197, %s200
      %p206 = scmp.eq.s32.totalorder %s32, 0
      %p207 = por %p205, %p206
      %p208 = scmp.ne.s32.totalorder %s197, %s200
      %p209 = scmp.eq.s32.totalorder %s37, 7
      %p210 = por %p208, %p209
      %p211 = scmp.ne.s32.totalorder %s200, %s201
      %p212 = scmp.eq.s32.totalorder %s37, 0
      %p213 = por %p211, %p212
      %p214 = scmp.ne.s32.totalorder %s200, %s201
      %p215 = scmp.eq.s32.totalorder %s38, 7
      %p216 = por %p214, %p215
      %p218 = scmp.ne.s32.totalorder %s201, %s217
      %p219 = scmp.eq.s32.totalorder %s38, 0
      %p220 = por %p218, %p219
      %s221 = ssub.s32 %s41, %s50
      %p222 = scmp.eq.s32.totalorder %s221, 0
      %s224 = sadd.s32 %s223, 1
      %s225 = scalar_select %p222, %s223, %s224
      %p228 = pneg %p222
      %p229 = scmp.eq.s32.totalorder %s32, 7
      %p230 = por %p228, %p229
      %p231 = scmp.ne.s32.totalorder %s223, %s226
      %p232 = scmp.eq.s32.totalorder %s32, 0
      %p233 = por %p231, %p232
      %p234 = scmp.ne.s32.totalorder %s223, %s226
      %p235 = scmp.eq.s32.totalorder %s37, 7
      %p236 = por %p234, %p235
      %p237 = scmp.ne.s32.totalorder %s226, %s227
      %p238 = scmp.eq.s32.totalorder %s37, 0
      %p239 = por %p237, %p238
      %p240 = scmp.ne.s32.totalorder %s226, %s227
      %p241 = scmp.eq.s32.totalorder %s38, 7
      %p242 = por %p240, %p241
      %p244 = scmp.ne.s32.totalorder %s227, %s243
      %p245 = scmp.eq.s32.totalorder %s38, 0
      %p246 = por %p244, %p245
      %s248 = sadd.s32 %s247, 1
      %p251 = scmp.eq.s32.totalorder %s32, 7
      %p252 = scmp.ne.s32.totalorder %s247, %s249
      %p253 = scmp.eq.s32.totalorder %s32, 0
      %p254 = por %p252, %p253
      %p255 = scmp.ne.s32.totalorder %s247, %s249
      %p256 = scmp.eq.s32.totalorder %s37, 7
      %p257 = por %p255, %p256
      %p258 = scmp.ne.s32.totalorder %s249, %s250
      %p259 = scmp.eq.s32.totalorder %s37, 0
      %p260 = por %p258, %p259
      %p261 = scmp.ne.s32.totalorder %s249, %s250
      %p262 = scmp.eq.s32.totalorder %s38, 7
      %p263 = por %p261, %p262
      %p265 = scmp.ne.s32.totalorder %s250, %s264
      %p266 = scmp.eq.s32.totalorder %s38, 0
      %p267 = por %p265, %p266
      %s269 = sadd.s32 %s268, 1
      %p272 = scmp.eq.s32.totalorder %s32, 7
      %p273 = scmp.ne.s32.totalorder %s268, %s270
      %p274 = scmp.eq.s32.totalorder %s32, 0
      %p275 = por %p273, %p274
      %p276 = scmp.ne.s32.totalorder %s268, %s270
      %p277 = scmp.eq.s32.totalorder %s37, 7
      %p278 = por %p276, %p277
      %p279 = scmp.ne.s32.totalorder %s270, %s271
      %p280 = scmp.eq.s32.totalorder %s37, 0
      %p281 = por %p279, %p280
      %p282 = scmp.ne.s32.totalorder %s270, %s271
      %p283 = scmp.eq.s32.totalorder %s38, 7
      %p284 = por %p282, %p283
      %p286 = scmp.ne.s32.totalorder %s271, %s285
      %p287 = scmp.eq.s32.totalorder %s38, 0
      %p288 = por %p286, %p287
      %s289 = ssub.s32 %s40, %s54
      %s290 = ssub.s32 %s41, %s50
      %s291 = sor.u32 %s289, %s290
      %p292 = scmp.eq.s32.totalorder %s291, 0
      %s294 = sadd.s32 %s293, 1
      %s295 = scalar_select %p292, %s293, %s294
      %p298 = pneg %p292
      %p299 = scmp.eq.s32.totalorder %s32, 7
      %p300 = por %p298, %p299
      %p301 = scmp.ne.s32.totalorder %s293, %s296
      %p302 = scmp.eq.s32.totalorder %s32, 0
      %p303 = por %p301, %p302
      %p304 = scmp.ne.s32.totalorder %s293, %s296
      %p305 = scmp.eq.s32.totalorder %s37, 7
      %p306 = por %p304, %p305
      %p307 = scmp.ne.s32.totalorder %s296, %s297
      %p308 = scmp.eq.s32.totalorder %s37, 0
      %p309 = por %p307, %p308
      %p310 = scmp.ne.s32.totalorder %s296, %s297
      %p311 = scmp.eq.s32.totalorder %s38, 7
      %p312 = por %p310, %p311
      %p314 = scmp.ne.s32.totalorder %s297, %s313
      %p315 = scmp.eq.s32.totalorder %s38, 0
      %p316 = por %p314, %p315
      %s317 = ssub.s32 %s40, %s54
      %s318 = ssub.s32 %s41, %s50
      %s319 = sor.u32 %s317, %s318
      %p320 = scmp.eq.s32.totalorder %s319, 0
      %s322 = sadd.s32 %s321, 1
      %s323 = scalar_select %p320, %s321, %s322
      %p326 = pneg %p320
      %p327 = scmp.eq.s32.totalorder %s32, 7
      %p328 = por %p326, %p327
      %p329 = scmp.ne.s32.totalorder %s321, %s324
      %p330 = scmp.eq.s32.totalorder %s32, 0
      %p331 = por %p329, %p330
      %p332 = scmp.ne.s32.totalorder %s321, %s324
      %p333 = scmp.eq.s32.totalorder %s37, 7
      %p334 = por %p332, %p333
      %p335 = scmp.ne.s32.totalorder %s324, %s325
      %p336 = scmp.eq.s32.totalorder %s37, 0
      %p337 = por %p335, %p336
      %p338 = scmp.ne.s32.totalorder %s324, %s325
      %p339 = scmp.eq.s32.totalorder %s38, 7
      %p340 = por %p338, %p339
      %p342 = scmp.ne.s32.totalorder %s325, %s341
      %p343 = scmp.eq.s32.totalorder %s38, 0
      %p344 = por %p342, %p343
      %s345 = ssub.s32 %s39, %s58
      %s346 = ssub.s32 %s40, %s54
      %s347 = sor.u32 %s345, %s346
      %p348 = scmp.eq.s32.totalorder %s347, 0
      %s350 = sadd.s32 %s349, 1
      %s351 = scalar_select %p348, %s349, %s350
      %p354 = pneg %p348
      %p355 = scmp.eq.s32.totalorder %s32, 7
      %p356 = por %p354, %p355
      %p357 = scmp.ne.s32.totalorder %s349, %s352
      %p358 = scmp.eq.s32.totalorder %s32, 0
      %p359 = por %p357, %p358
      %p360 = scmp.ne.s32.totalorder %s349, %s352
      %p361 = scmp.eq.s32.totalorder %s37, 7
      %p362 = por %p360, %p361
      %p363 = scmp.ne.s32.totalorder %s352, %s353
      %p364 = scmp.eq.s32.totalorder %s37, 0
      %p365 = por %p363, %p364
      %p366 = scmp.ne.s32.totalorder %s352, %s353
      %p367 = scmp.eq.s32.totalorder %s38, 7
      %p368 = por %p366, %p367
      %p370 = scmp.ne.s32.totalorder %s353, %s369
      %p371 = scmp.eq.s32.totalorder %s38, 0
      %p372 = por %p370, %p371
      %p373 = scmp.le.s32.totalorder 1, %s32
      %p374 = scmp.lt.s32.totalorder %s32, 9
      %p375 = pnand %p373, %p374
      %p376 = pneg %p375
      // Predicated region
      $region9: #{tpu_custom_call.1} parent=5 // pred_check
        _
      $region10: #{tpu_custom_call.1} parent=5 // pred_check_branch
        %378 = sbr.rel (%p375) target = $region12
      $region11: #{tpu_custom_call.1} parent=5 // pred_region
        %s379 = ssub.s32 %s32, 1
        // Predicated region
        $region13: #{tpu_custom_call.1} parent=11 // pred_check
          %p380 = pneg %p124
        $region14: #{tpu_custom_call.1} parent=11 // pred_check_branch
          %382 = sbr.rel (%p380) target = $region16
        $region15: #{tpu_custom_call.1} parent=11 // pred_region
          %s384 = ssub.s32 2048, 2048
          %385 = vsyncadd [#allocation10], %s384
          %s386 = sshll.u32 [#allocation11], 4
          %s387 = int_to_ptr.vmem [resolvable:$true] %s386
          %392 = dma.hbm_to_vmem [thread:$0]  %s2, 2048, %s387, [#allocation10], 64, 64, 4
        $region16: #{tpu_custom_call.1} parent=11 // pred_fallthru
          _
        // Predicated region
        $region17: #{tpu_custom_call.1} parent=11 // pred_check
          %p393 = pneg %p145
        $region18: #{tpu_custom_call.1} parent=11 // pred_check_branch
          %395 = sbr.rel (%p393) target = $region20
        $region19: #{tpu_custom_call.1} parent=11 // pred_region
          %s397 = ssub.s32 2048, 2048
          %398 = vsyncadd [#allocation13], %s397
          %s399 = sshll.u32 [#allocation12], 4
          %s400 = int_to_ptr.vmem [resolvable:$true] %s399
          %405 = dma.hbm_to_vmem [thread:$0]  %s3, 2048, %s400, [#allocation13], 64, 64, 4
        $region20: #{tpu_custom_call.1} parent=11 // pred_fallthru
          _
        // Predicated region
        $region21: #{tpu_custom_call.1} parent=11 // pred_check
          %p406 = pneg %p166
        $region22: #{tpu_custom_call.1} parent=11 // pred_check_branch
          %408 = sbr.rel (%p406) target = $region24
        $region23: #{tpu_custom_call.1} parent=11 // pred_region
          %s410 = ssub.s32 2048, 2048
          %411 = vsyncadd [#allocation13], %s410
          %s412 = sshll.u32 [#allocation14], 4
          %s413 = int_to_ptr.vmem [resolvable:$true] %s412
          %418 = dma.hbm_to_vmem [thread:$0]  %s4, 2048, %s413, [#allocation13], 128, 128, 8
        $region24: #{tpu_custom_call.1} parent=11 // pred_fallthru
          _
        // Predicated region
        $region25: #{tpu_custom_call.1} parent=11 // pred_check
          %p419 = pneg %p187
        $region26: #{tpu_custom_call.1} parent=11 // pred_check_branch
          %421 = sbr.rel (%p419) target = $region28
        $region27: #{tpu_custom_call.1} parent=11 // pred_region
          %s423 = ssub.s32 2048, 2048
          %424 = vsyncadd [#allocation16], %s423
          %s425 = sshll.u32 [#allocation15], 4
          %s426 = int_to_ptr.vmem [resolvable:$true] %s425
          %431 = dma.hbm_to_vmem [thread:$0]  %s5, 2048, %s426, [#allocation16], 128, 128, 8
        $region28: #{tpu_custom_call.1} parent=11 // pred_fallthru
          _
        // Predicated region
        $region29: #{tpu_custom_call.1} parent=11 // pred_check
          %p432 = pneg %p260
        $region30: #{tpu_custom_call.1} parent=11 // pred_check_branch
          %434 = sbr.rel (%p432) target = $region32
        $region31: #{tpu_custom_call.1} parent=11 // pred_region
          %s436 = ssub.s32 2048, 2048
          %437 = vsyncadd [#allocation13], %s436
          %s438 = sshll.u32 [#allocation19], 4
          %s439 = int_to_ptr.vmem [resolvable:$true] %s438
          %444 = dma.hbm_to_vmem [thread:$0]  %s8, 2048, %s439, [#allocation13], 64, 64, 4
        $region32: #{tpu_custom_call.1} parent=11 // pred_fallthru
          _
        // Predicated region
        $region33: #{tpu_custom_call.1} parent=11 // pred_check
          %p445 = pneg %p281
        $region34: #{tpu_custom_call.1} parent=11 // pred_check_branch
          %447 = sbr.rel (%p445) target = $region36
        $region35: #{tpu_custom_call.1} parent=11 // pred_region
          %s449 = ssub.s32 2048, 2048
          %450 = vsyncadd [#allocation16], %s449
          %s451 = sshll.u32 [#allocation20], 4
          %s452 = int_to_ptr.vmem [resolvable:$true] %s451
          %457 = dma.hbm_to_vmem [thread:$0]  %s9, 2048, %s452, [#allocation16], 64, 64, 4
        $region36: #{tpu_custom_call.1} parent=11 // pred_fallthru
          _
      $region12: #{tpu_custom_call.1} parent=5 // pred_fallthru
        _
      %p458 = scmp.lt.s32.totalorder %s32, 8
      // Predicated region
      $region37: #{tpu_custom_call.1} parent=5 // pred_check
        %p459 = pneg %p458
      $region38: #{tpu_custom_call.1} parent=5 // pred_check_branch
        %461 = sbr.rel (%p459) target = $region40
      $region39: #{tpu_custom_call.1} parent=5 // pred_region
        // Predicated region
        $region41: #{tpu_custom_call.1} parent=39 // pred_check
          %p462 = pneg %p71
        $region42: #{tpu_custom_call.1} parent=39 // pred_check_branch
          %464 = sbr.rel (%p462) target = $region44
        $region43: #{tpu_custom_call.1} parent=39 // pred_region
          %s465 = sand.u32 %s32, 1
          %s466 = scalar_lea.sflag [#allocation7], %s465
          %s467 = sand.u32 %s61, 1
          %s468 = smul.addr %s467, 64
          %s469 = scalar_lea.vmem [#allocation6], %s468
          %s471 = ssub.s32 1024, 1024
          %472 = vsyncadd %s466, %s471
          %s473 = smul.addr %s39, 16
          %s474 = smul.addr %s473, 64
          %s475 = scalar_lea.hbm %s0, %s474
          %s476 = sshll.u32 %s469, 4
          %s477 = int_to_ptr.vmem [resolvable:$true] %s476
          %482 = dma.hbm_to_vmem [thread:$0]  %s475, 1024, %s477, %s466, 64, 64, 4
        $region44: #{tpu_custom_call.1} parent=39 // pred_fallthru
          _
        // Predicated region
        $region45: #{tpu_custom_call.1} parent=39 // pred_check
          %p483 = pneg %p97
        $region46: #{tpu_custom_call.1} parent=39 // pred_check_branch
          %485 = sbr.rel (%p483) target = $region48
        $region47: #{tpu_custom_call.1} parent=39 // pred_region
          %s486 = sand.u32 %s32, 1
          %s487 = scalar_lea.sflag [#allocation10], %s486
          %s488 = sand.u32 %s87, 1
          %s489 = smul.addr %s488, 64
          %s490 = scalar_lea.vmem [#allocation9], %s489
          %s492 = ssub.s32 1024, 1024
          %493 = vsyncadd %s487, %s492
          %s494 = smul.addr %s39, 16
          %s495 = smul.addr %s494, 64
          %s496 = scalar_lea.hbm %s1, %s495
          %s497 = sshll.u32 %s490, 4
          %s498 = int_to_ptr.vmem [resolvable:$true] %s497
          %503 = dma.hbm_to_vmem [thread:$0]  %s496, 1024, %s498, %s487, 64, 64, 4
        $region48: #{tpu_custom_call.1} parent=39 // pred_fallthru
          _
        // Predicated region
        $region49: #{tpu_custom_call.1} parent=39 // pred_check
          %p504 = pneg %p207
        $region50: #{tpu_custom_call.1} parent=39 // pred_check_branch
          %506 = sbr.rel (%p504) target = $region52
        $region51: #{tpu_custom_call.1} parent=39 // pred_region
          %s507 = sand.u32 %s32, 1
          %s508 = scalar_lea.sflag [#allocation7], %s507
          %s509 = sand.u32 %s197, 1
          %s510 = smul.addr %s509, 64
          %s511 = scalar_lea.vmem [#allocation17], %s510
          %s513 = ssub.s32 1024, 1024
          %514 = vsyncadd %s508, %s513
          %s515 = smul.addr %s41, 64
          %s516 = scalar_lea.hbm %s6, %s515
          %s517 = sshll.u32 %s511, 4
          %s518 = int_to_ptr.vmem [resolvable:$true] %s517
          %523 = dma.hbm_to_vmem [thread:$0]  %s516, 1024, %s518, %s508, 128, 64, 4
        $region52: #{tpu_custom_call.1} parent=39 // pred_fallthru
          _
        // Predicated region
        $region53: #{tpu_custom_call.1} parent=39 // pred_check
          %p524 = pneg %p233
        $region54: #{tpu_custom_call.1} parent=39 // pred_check_branch
          %526 = sbr.rel (%p524) target = $region56
        $region55: #{tpu_custom_call.1} parent=39 // pred_region
          %s527 = sand.u32 %s32, 1
          %s528 = scalar_lea.sflag [#allocation10], %s527
          %s529 = sand.u32 %s223, 1
          %s530 = smul.addr %s529, 64
          %s531 = scalar_lea.vmem [#allocation18], %s530
          %s533 = ssub.s32 1024, 1024
          %534 = vsyncadd %s528, %s533
          %s535 = smul.addr %s41, 64
          %s536 = scalar_lea.hbm %s7, %s535
          %s537 = sshll.u32 %s531, 4
          %s538 = int_to_ptr.vmem [resolvable:$true] %s537
          %543 = dma.hbm_to_vmem [thread:$0]  %s536, 1024, %s538, %s528, 128, 64, 4
        $region56: #{tpu_custom_call.1} parent=39 // pred_fallthru
          _
        // Predicated region
        $region57: #{tpu_custom_call.1} parent=39 // pred_check
          %p544 = pneg %p303
        $region58: #{tpu_custom_call.1} parent=39 // pred_check_branch
          %546 = sbr.rel (%p544) target = $region60
        $region59: #{tpu_custom_call.1} parent=39 // pred_region
          %s547 = sand.u32 %s32, 1
          %s548 = scalar_lea.sflag [#allocation22], %s547
          %s549 = sand.u32 %s293, 1
          %s550 = smul.addr %s549, 128
          %s551 = scalar_lea.vmem [#allocation21], %s550
          %s552 = smul.u32 16, %s41
          %s554 = ssub.s32 2048, 2048
          %555 = vsyncadd %s548, %s554
          %s556 = smul.addr %s552, 2
          %s557 = smul.addr %s40, 64
          %s558 = sadd.s32 %s556, %s557
          %s559 = smul.addr %s558, 64
          %s560 = scalar_lea.hbm %s10, %s559
          %s561 = sshll.u32 %s551, 4
          %s562 = int_to_ptr.vmem [resolvable:$true] %s561
          %567 = dma.hbm_to_vmem [thread:$0]  %s560, 2048, %s562, %s548, 128, 128, 8
        $region60: #{tpu_custom_call.1} parent=39 // pred_fallthru
          _
        // Predicated region
        $region61: #{tpu_custom_call.1} parent=39 // pred_check
          %p568 = pneg %p331
        $region62: #{tpu_custom_call.1} parent=39 // pred_check_branch
          %570 = sbr.rel (%p568) target = $region64
        $region63: #{tpu_custom_call.1} parent=39 // pred_region
          %s571 = sand.u32 %s32, 1
          %s572 = scalar_lea.sflag [#allocation22], %s571
          %s573 = sand.u32 %s321, 1
          %s574 = smul.addr %s573, 128
          %s575 = scalar_lea.vmem [#allocation23], %s574
          %s576 = smul.u32 16, %s41
          %s578 = ssub.s32 2048, 2048
          %579 = vsyncadd %s572, %s578
          %s580 = smul.addr %s576, 2
          %s581 = smul.addr %s40, 64
          %s582 = sadd.s32 %s580, %s581
          %s583 = smul.addr %s582, 64
          %s584 = scalar_lea.hbm %s11, %s583
          %s585 = sshll.u32 %s575, 4
          %s586 = int_to_ptr.vmem [resolvable:$true] %s585
          %591 = dma.hbm_to_vmem [thread:$0]  %s584, 2048, %s586, %s572, 128, 128, 8
        $region64: #{tpu_custom_call.1} parent=39 // pred_fallthru
          _
      $region40: #{tpu_custom_call.1} parent=5 // pred_fallthru
        _
      %p592 = scmp.le.s32.totalorder 1, %s32
      %p593 = scmp.lt.s32.totalorder %s32, 9
      %p594 = pnand %p592, %p593
      %p595 = pneg %p594
      // Predicated region
      $region65: #{tpu_custom_call.1} parent=5 // pred_check
        _
      $region66: #{tpu_custom_call.1} parent=5 // pred_check_branch
        %597 = sbr.rel (%p594) target = $region68
      $region67: #{tpu_custom_call.1} parent=5 // pred_region
        %s598 = ssub.s32 %s32, 1
        %s599 = sand.u32 %s37, 1
        %s600 = scalar_lea.sflag [#allocation7], %s599
        %s601 = sand.u32 %s64, 1
        %s602 = smul.addr %s601, 64
        %s603 = scalar_lea.vmem [#allocation6], %s602
        // Predicated region
        $region69: #{tpu_custom_call.1} parent=67 // pred_check
          %p604 = pneg %p77
        $region70: #{tpu_custom_call.1} parent=67 // pred_check_branch
          %606 = sbr.rel (%p604) target = $region72
        $region71: #{tpu_custom_call.1} parent=67 // pred_region
          %607 = dma.done %s600, 1024
        $region72: #{tpu_custom_call.1} parent=67 // pred_fallthru
          _
        %s608 = sand.u32 %s37, 1
        %s609 = scalar_lea.sflag [#allocation10], %s608
        %s610 = sand.u32 %s90, 1
        %s611 = smul.addr %s610, 64
        %s612 = scalar_lea.vmem [#allocation9], %s611
        // Predicated region
        $region73: #{tpu_custom_call.1} parent=67 // pred_check
          %p613 = pneg %p103
        $region74: #{tpu_custom_call.1} parent=67 // pred_check_branch
          %615 = sbr.rel (%p613) target = $region76
        $region75: #{tpu_custom_call.1} parent=67 // pred_region
          %616 = dma.done %s609, 1024
        $region76: #{tpu_custom_call.1} parent=67 // pred_fallthru
          _
        // Predicated region
        $region77: #{tpu_custom_call.1} parent=67 // pred_check
          %p617 = pneg %p124
        $region78: #{tpu_custom_call.1} parent=67 // pred_check_branch
          %619 = sbr.rel (%p617) target = $region80
        $region79: #{tpu_custom_call.1} parent=67 // pred_region
          %620 = dma.done [#allocation10], 2048
        $region80: #{tpu_custom_call.1} parent=67 // pred_fallthru
          _
        // Predicated region
        $region81: #{tpu_custom_call.1} parent=67 // pred_check
          %p621 = pneg %p145
        $region82: #{tpu_custom_call.1} parent=67 // pred_check_branch
          %623 = sbr.rel (%p621) target = $region84
        $region83: #{tpu_custom_call.1} parent=67 // pred_region
          %624 = dma.done [#allocation13], 2048
        $region84: #{tpu_custom_call.1} parent=67 // pred_fallthru
          _
        // Predicated region
        $region85: #{tpu_custom_call.1} parent=67 // pred_check
          %p625 = pneg %p166
        $region86: #{tpu_custom_call.1} parent=67 // pred_check_branch
          %627 = sbr.rel (%p625) target = $region88
        $region87: #{tpu_custom_call.1} parent=67 // pred_region
          %628 = dma.done [#allocation13], 2048
        $region88: #{tpu_custom_call.1} parent=67 // pred_fallthru
          _
        // Predicated region
        $region89: #{tpu_custom_call.1} parent=67 // pred_check
          %p629 = pneg %p187
        $region90: #{tpu_custom_call.1} parent=67 // pred_check_branch
          %631 = sbr.rel (%p629) target = $region92
        $region91: #{tpu_custom_call.1} parent=67 // pred_region
          %632 = dma.done [#allocation16], 2048
        $region92: #{tpu_custom_call.1} parent=67 // pred_fallthru
          _
        %s633 = sand.u32 %s37, 1
        %s634 = scalar_lea.sflag [#allocation7], %s633
        %s635 = sand.u32 %s200, 1
        %s636 = smul.addr %s635, 64
        %s637 = scalar_lea.vmem [#allocation17], %s636
        // Predicated region
        $region93: #{tpu_custom_call.1} parent=67 // pred_check
          %p638 = pneg %p213
        $region94: #{tpu_custom_call.1} parent=67 // pred_check_branch
          %640 = sbr.rel (%p638) target = $region96
        $region95: #{tpu_custom_call.1} parent=67 // pred_region
          %641 = dma.done %s634, 1024
        $region96: #{tpu_custom_call.1} parent=67 // pred_fallthru
          _
        %s642 = sand.u32 %s37, 1
        %s643 = scalar_lea.sflag [#allocation10], %s642
        %s644 = sand.u32 %s226, 1
        %s645 = smul.addr %s644, 64
        %s646 = scalar_lea.vmem [#allocation18], %s645
        // Predicated region
        $region97: #{tpu_custom_call.1} parent=67 // pred_check
          %p647 = pneg %p239
        $region98: #{tpu_custom_call.1} parent=67 // pred_check_branch
          %649 = sbr.rel (%p647) target = $region100
        $region99: #{tpu_custom_call.1} parent=67 // pred_region
          %650 = dma.done %s643, 1024
        $region100: #{tpu_custom_call.1} parent=67 // pred_fallthru
          _
        // Predicated region
        $region101: #{tpu_custom_call.1} parent=67 // pred_check
          %p651 = pneg %p260
        $region102: #{tpu_custom_call.1} parent=67 // pred_check_branch
          %653 = sbr.rel (%p651) target = $region104
        $region103: #{tpu_custom_call.1} parent=67 // pred_region
          %654 = dma.done [#allocation13], 2048
        $region104: #{tpu_custom_call.1} parent=67 // pred_fallthru
          _
        // Predicated region
        $region105: #{tpu_custom_call.1} parent=67 // pred_check
          %p655 = pneg %p281
        $region106: #{tpu_custom_call.1} parent=67 // pred_check_branch
          %657 = sbr.rel (%p655) target = $region108
        $region107: #{tpu_custom_call.1} parent=67 // pred_region
          %658 = dma.done [#allocation16], 2048
        $region108: #{tpu_custom_call.1} parent=67 // pred_fallthru
          _
        %s659 = sand.u32 %s37, 1
        %s660 = scalar_lea.sflag [#allocation22], %s659
        %s661 = sand.u32 %s296, 1
        %s662 = smul.addr %s661, 128
        %s663 = scalar_lea.vmem [#allocation21], %s662
        // Predicated region
        $region109: #{tpu_custom_call.1} parent=67 // pred_check
          %p664 = pneg %p309
        $region110: #{tpu_custom_call.1} parent=67 // pred_check_branch
          %666 = sbr.rel (%p664) target = $region112
        $region111: #{tpu_custom_call.1} parent=67 // pred_region
          %667 = dma.done %s660, 2048
        $region112: #{tpu_custom_call.1} parent=67 // pred_fallthru
          _
        %s668 = sand.u32 %s37, 1
        %s669 = scalar_lea.sflag [#allocation22], %s668
        %s670 = sand.u32 %s324, 1
        %s671 = smul.addr %s670, 128
        %s672 = scalar_lea.vmem [#allocation23], %s671
        // Predicated region
        $region113: #{tpu_custom_call.1} parent=67 // pred_check
          %p673 = pneg %p337
        $region114: #{tpu_custom_call.1} parent=67 // pred_check_branch
          %675 = sbr.rel (%p673) target = $region116
        $region115: #{tpu_custom_call.1} parent=67 // pred_region
          %676 = dma.done %s669, 2048
        $region116: #{tpu_custom_call.1} parent=67 // pred_fallthru
          _
        %s677 = sand.u32 %s37, 1
        %s678 = scalar_lea.sflag [#allocation7], %s677
        %s679 = sand.u32 %s64, 1
        %s680 = smul.addr %s679, 64
        %s681 = scalar_lea.vmem [#allocation6], %s680
        %p682 = pneg %p77
        %p683 = pneg %p74
        %s684 = sand.u32 %s37, 1
        %s685 = scalar_lea.sflag [#allocation10], %s684
        %s686 = sand.u32 %s90, 1
        %s687 = smul.addr %s686, 64
        %s688 = scalar_lea.vmem [#allocation9], %s687
        %p689 = pneg %p103
        %p690 = pneg %p100
        %p691 = pneg %p124
        %p692 = pneg %p121
        %p693 = pneg %p145
        %p694 = pneg %p142
        %p695 = pneg %p166
        %p696 = pneg %p163
        %p697 = pneg %p187
        %p698 = pneg %p184
        %s699 = sand.u32 %s37, 1
        %s700 = scalar_lea.sflag [#allocation7], %s699
        %s701 = sand.u32 %s200, 1
        %s702 = smul.addr %s701, 64
        %s703 = scalar_lea.vmem [#allocation17], %s702
        %p704 = pneg %p213
        %p705 = pneg %p210
        %s706 = sand.u32 %s37, 1
        %s707 = scalar_lea.sflag [#allocation10], %s706
        %s708 = sand.u32 %s226, 1
        %s709 = smul.addr %s708, 64
        %s710 = scalar_lea.vmem [#allocation18], %s709
        %p711 = pneg %p239
        %p712 = pneg %p236
        %p713 = pneg %p260
        %p714 = pneg %p257
        %p715 = pneg %p281
        %p716 = pneg %p278
        %s717 = sand.u32 %s37, 1
        %s718 = scalar_lea.sflag [#allocation22], %s717
        %s719 = sand.u32 %s296, 1
        %s720 = smul.addr %s719, 128
        %s721 = scalar_lea.vmem [#allocation21], %s720
        %p722 = pneg %p309
        %p723 = pneg %p306
        %s724 = sand.u32 %s37, 1
        %s725 = scalar_lea.sflag [#allocation22], %s724
        %s726 = sand.u32 %s324, 1
        %s727 = smul.addr %s726, 128
        %s728 = scalar_lea.vmem [#allocation23], %s727
        %p729 = pneg %p337
        %p730 = pneg %p334
        %p731 = pneg %p365
        %p732 = pneg %p362
        %s733 = sand.u32 %s352, 1
        %s734 = scalar_lea.sflag [#allocation8], %s733
        %s735 = sand.u32 %s352, 1
        %s736 = smul.addr %s735, 256
        %s737 = scalar_lea.vmem [#allocation24], %s736
        %s738 = smul.u32 16, %s44
        %s739 = smul.u32 16, %s44
        %p741 = scmp.eq.s32.totalorder %s43, 0
        %p742 = scmp.eq.s32.totalorder %s44, 0
        %p743 = pnand %p741, %p742
        %p744 = pneg %p743
        // Predicated region
        $region117: #{tpu_custom_call.1} parent=67 // pred_check
          _
        $region118: #{tpu_custom_call.1} parent=67 // pred_check_branch
          %746 = sbr.rel (%p743) target = $region120
        $region119: #{tpu_custom_call.1} parent=67 // pred_region
          %v747 = vld [vmem:[%s603] sm:$0xf]
          %v748 = vld [vmem:[%s603 + $0x4] sm:$0xf]
          %v749 = vld [vmem:[%s603 + $0x8] sm:$0xf]
          %v750 = vld [vmem:[%s603 + $0xc] sm:$0xf]
          %v751 = vld [vmem:[%s603 + $0x10] sm:$0xf]
          %v752 = vld [vmem:[%s603 + $0x14] sm:$0xf]
          %v753 = vld [vmem:[%s603 + $0x18] sm:$0xf]
          %v754 = vld [vmem:[%s603 + $0x1c] sm:$0xf]
          %v755 = vld [vmem:[%s603 + $0x20] sm:$0xf]
          %v756 = vld [vmem:[%s603 + $0x24] sm:$0xf]
          %v757 = vld [vmem:[%s603 + $0x28] sm:$0xf]
          %v758 = vld [vmem:[%s603 + $0x2c] sm:$0xf]
          %v759 = vld [vmem:[%s603 + $0x30] sm:$0xf]
          %v760 = vld [vmem:[%s603 + $0x34] sm:$0xf]
          %v761 = vld [vmem:[%s603 + $0x38] sm:$0xf]
          %v762 = vld [vmem:[%s603 + $0x3c] sm:$0xf]
          %v763 = vld [vmem:[%s612] sm:$0xf]
          %v764 = vld [vmem:[%s612 + $0x4] sm:$0xf]
          %v765 = vld [vmem:[%s612 + $0x8] sm:$0xf]
          %v766 = vld [vmem:[%s612 + $0xc] sm:$0xf]
          %v767 = vld [vmem:[%s612 + $0x10] sm:$0xf]
          %v768 = vld [vmem:[%s612 + $0x14] sm:$0xf]
          %v769 = vld [vmem:[%s612 + $0x18] sm:$0xf]
          %v770 = vld [vmem:[%s612 + $0x1c] sm:$0xf]
          %v771 = vld [vmem:[%s612 + $0x20] sm:$0xf]
          %v772 = vld [vmem:[%s612 + $0x24] sm:$0xf]
          %v773 = vld [vmem:[%s612 + $0x28] sm:$0xf]
          %v774 = vld [vmem:[%s612 + $0x2c] sm:$0xf]
          %v775 = vld [vmem:[%s612 + $0x30] sm:$0xf]
          %v776 = vld [vmem:[%s612 + $0x34] sm:$0xf]
          %v777 = vld [vmem:[%s612 + $0x38] sm:$0xf]
          %v778 = vld [vmem:[%s612 + $0x3c] sm:$0xf]
          %v779 = vld [vmem:[#allocation11] sm:$0xf]
          %v780 = vld [vmem:[#allocation11 + $0x4] sm:$0xf]
          %v781 = vld [vmem:[#allocation11 + $0x8] sm:$0xf]
          %v782 = vld [vmem:[#allocation11 + $0xc] sm:$0xf]
          %v783 = vld [vmem:[#allocation11 + $0x10] sm:$0xf]
          %v784 = vld [vmem:[#allocation11 + $0x14] sm:$0xf]
          %v785 = vld [vmem:[#allocation11 + $0x18] sm:$0xf]
          %v786 = vld [vmem:[#allocation11 + $0x1c] sm:$0xf]
          %v787 = vld [vmem:[#allocation11 + $0x20] sm:$0xf]
          %v788 = vld [vmem:[#allocation11 + $0x24] sm:$0xf]
          %v789 = vld [vmem:[#allocation11 + $0x28] sm:$0xf]
          %v790 = vld [vmem:[#allocation11 + $0x2c] sm:$0xf]
          %v791 = vld [vmem:[#allocation11 + $0x30] sm:$0xf]
          %v792 = vld [vmem:[#allocation11 + $0x34] sm:$0xf]
          %v793 = vld [vmem:[#allocation11 + $0x38] sm:$0xf]
          %v794 = vld [vmem:[#allocation11 + $0x3c] sm:$0xf]
          %v795 = vld [vmem:[#allocation11 + $0x40] sm:$0xf]
          %v796 = vld [vmem:[#allocation11 + $0x44] sm:$0xf]
          %v797 = vld [vmem:[#allocation11 + $0x48] sm:$0xf]
          %v798 = vld [vmem:[#allocation11 + $0x4c] sm:$0xf]
          %v799 = vld [vmem:[#allocation11 + $0x50] sm:$0xf]
          %v800 = vld [vmem:[#allocation11 + $0x54] sm:$0xf]
          %v801 = vld [vmem:[#allocation11 + $0x58] sm:$0xf]
          %v802 = vld [vmem:[#allocation11 + $0x5c] sm:$0xf]
          %v803 = vld [vmem:[#allocation11 + $0x60] sm:$0xf]
          %v804 = vld [vmem:[#allocation11 + $0x64] sm:$0xf]
          %v805 = vld [vmem:[#allocation11 + $0x68] sm:$0xf]
          %v806 = vld [vmem:[#allocation11 + $0x6c] sm:$0xf]
          %v807 = vld [vmem:[#allocation11 + $0x70] sm:$0xf]
          %v808 = vld [vmem:[#allocation11 + $0x74] sm:$0xf]
          %v809 = vld [vmem:[#allocation11 + $0x78] sm:$0xf]
          %v810 = vld [vmem:[#allocation11 + $0x7c] sm:$0xf]
          %v811 = vld [vmem:[#allocation12] sm:$0xf]
          %v812 = vld [vmem:[#allocation12 + $0x4] sm:$0xf]
          %v813 = vld [vmem:[#allocation12 + $0x8] sm:$0xf]
          %v814 = vld [vmem:[#allocation12 + $0xc] sm:$0xf]
          %v815 = vld [vmem:[#allocation12 + $0x10] sm:$0xf]
          %v816 = vld [vmem:[#allocation12 + $0x14] sm:$0xf]
          %v817 = vld [vmem:[#allocation12 + $0x18] sm:$0xf]
          %v818 = vld [vmem:[#allocation12 + $0x1c] sm:$0xf]
          %v819 = vld [vmem:[#allocation12 + $0x20] sm:$0xf]
          %v820 = vld [vmem:[#allocation12 + $0x24] sm:$0xf]
          %v821 = vld [vmem:[#allocation12 + $0x28] sm:$0xf]
          %v822 = vld [vmem:[#allocation12 + $0x2c] sm:$0xf]
          %v823 = vld [vmem:[#allocation12 + $0x30] sm:$0xf]
          %v824 = vld [vmem:[#allocation12 + $0x34] sm:$0xf]
          %v825 = vld [vmem:[#allocation12 + $0x38] sm:$0xf]
          %v826 = vld [vmem:[#allocation12 + $0x3c] sm:$0xf]
          %v827 = vld [vmem:[#allocation12 + $0x40] sm:$0xf]
          %v828 = vld [vmem:[#allocation12 + $0x44] sm:$0xf]
          %v829 = vld [vmem:[#allocation12 + $0x48] sm:$0xf]
          %v830 = vld [vmem:[#allocation12 + $0x4c] sm:$0xf]
          %v831 = vld [vmem:[#allocation12 + $0x50] sm:$0xf]
          %v832 = vld [vmem:[#allocation12 + $0x54] sm:$0xf]
          %v833 = vld [vmem:[#allocation12 + $0x58] sm:$0xf]
          %v834 = vld [vmem:[#allocation12 + $0x5c] sm:$0xf]
          %v835 = vld [vmem:[#allocation12 + $0x60] sm:$0xf]
          %v836 = vld [vmem:[#allocation12 + $0x64] sm:$0xf]
          %v837 = vld [vmem:[#allocation12 + $0x68] sm:$0xf]
          %v838 = vld [vmem:[#allocation12 + $0x6c] sm:$0xf]
          %v839 = vld [vmem:[#allocation12 + $0x70] sm:$0xf]
          %v840 = vld [vmem:[#allocation12 + $0x74] sm:$0xf]
          %v841 = vld [vmem:[#allocation12 + $0x78] sm:$0xf]
          %v842 = vld [vmem:[#allocation12 + $0x7c] sm:$0xf]
          %v843 = vadd.bf16 %v779, %v811
          %v844 = vadd.bf16 %v780, %v812
          %v845 = vadd.bf16 %v781, %v813
          %v846 = vadd.bf16 %v782, %v814
          %v847 = vadd.bf16 %v783, %v815
          %v848 = vadd.bf16 %v784, %v816
          %v849 = vadd.bf16 %v785, %v817
          %v850 = vadd.bf16 %v786, %v818
          %v851 = vadd.bf16 %v787, %v819
          %v852 = vadd.bf16 %v788, %v820
          %v853 = vadd.bf16 %v789, %v821
          %v854 = vadd.bf16 %v790, %v822
          %v855 = vadd.bf16 %v791, %v823
          %v856 = vadd.bf16 %v792, %v824
          %v857 = vadd.bf16 %v793, %v825
          %v858 = vadd.bf16 %v794, %v826
          %v859 = vadd.bf16 %v795, %v827
          %v860 = vadd.bf16 %v796, %v828
          %v861 = vadd.bf16 %v797, %v829
          %v862 = vadd.bf16 %v798, %v830
          %v863 = vadd.bf16 %v799, %v831
          %v864 = vadd.bf16 %v800, %v832
          %v865 = vadd.bf16 %v801, %v833
          %v866 = vadd.bf16 %v802, %v834
          %v867 = vadd.bf16 %v803, %v835
          %v868 = vadd.bf16 %v804, %v836
          %v869 = vadd.bf16 %v805, %v837
          %v870 = vadd.bf16 %v806, %v838
          %v871 = vadd.bf16 %v807, %v839
          %v872 = vadd.bf16 %v808, %v840
          %v873 = vadd.bf16 %v809, %v841
          %v874 = vadd.bf16 %v810, %v842
          %v907 = vunpack.c.l.b16 %v843
          %v908 = vunpack.c.l.b16 %v844
          %v909 = vunpack.c.l.b16 %v845
          %v910 = vunpack.c.l.b16 %v846
          %v911 = vunpack.c.l.b16 %v847
          %v912 = vunpack.c.l.b16 %v848
          %v913 = vunpack.c.l.b16 %v849
          %v914 = vunpack.c.l.b16 %v850
          %v915 = vunpack.c.l.b16 %v851
          %v916 = vunpack.c.l.b16 %v852
          %v917 = vunpack.c.l.b16 %v853
          %v918 = vunpack.c.l.b16 %v854
          %v919 = vunpack.c.l.b16 %v855
          %v920 = vunpack.c.l.b16 %v856
          %v921 = vunpack.c.l.b16 %v857
          %v922 = vunpack.c.l.b16 %v858
          %v923 = vunpack.c.l.b16 %v859
          %v924 = vunpack.c.l.b16 %v860
          %v925 = vunpack.c.l.b16 %v861
          %v926 = vunpack.c.l.b16 %v862
          %v927 = vunpack.c.l.b16 %v863
          %v928 = vunpack.c.l.b16 %v864
          %v929 = vunpack.c.l.b16 %v865
          %v930 = vunpack.c.l.b16 %v866
          %v931 = vunpack.c.l.b16 %v867
          %v932 = vunpack.c.l.b16 %v868
          %v933 = vunpack.c.l.b16 %v869
          %v934 = vunpack.c.l.b16 %v870
          %v935 = vunpack.c.l.b16 %v871
          %v936 = vunpack.c.l.b16 %v872
          %v937 = vunpack.c.l.b16 %v873
          %v938 = vunpack.c.l.b16 %v874
          %v939 = vpack.c.b16 %v908, %v907
          %v940 = vpack.c.b16 %v910, %v909
          %v941 = vpack.c.b16 %v912, %v911
          %v942 = vpack.c.b16 %v914, %v913
          %v943 = vpack.c.b16 %v916, %v915
          %v944 = vpack.c.b16 %v918, %v917
          %v945 = vpack.c.b16 %v920, %v919
          %v946 = vpack.c.b16 %v922, %v921
          %v947 = vpack.c.b16 %v924, %v923
          %v948 = vpack.c.b16 %v926, %v925
          %v949 = vpack.c.b16 %v928, %v927
          %v950 = vpack.c.b16 %v930, %v929
          %v951 = vpack.c.b16 %v932, %v931
          %v952 = vpack.c.b16 %v934, %v933
          %v953 = vpack.c.b16 %v936, %v935
          %v954 = vpack.c.b16 %v938, %v937
          %v987 = vunpack.c.l.b16 %v747
          %v988 = vunpack.c.l.b16 %v748
          %v989 = vunpack.c.l.b16 %v749
          %v990 = vunpack.c.l.b16 %v750
          %v991 = vunpack.c.l.b16 %v751
          %v992 = vunpack.c.l.b16 %v752
          %v993 = vunpack.c.l.b16 %v753
          %v994 = vunpack.c.l.b16 %v754
          %v995 = vunpack.c.l.b16 %v755
          %v996 = vunpack.c.l.b16 %v756
          %v997 = vunpack.c.l.b16 %v757
          %v998 = vunpack.c.l.b16 %v758
          %v999 = vunpack.c.l.b16 %v759
          %v1000 = vunpack.c.l.b16 %v760
          %v1001 = vunpack.c.l.b16 %v761
          %v1002 = vunpack.c.l.b16 %v762
          %v1003 = vpack.c.b16 %v988, %v987
          %v1004 = vpack.c.b16 %v990, %v989
          %v1005 = vpack.c.b16 %v992, %v991
          %v1006 = vpack.c.b16 %v994, %v993
          %v1007 = vpack.c.b16 %v996, %v995
          %v1008 = vpack.c.b16 %v998, %v997
          %v1009 = vpack.c.b16 %v1000, %v999
          %v1010 = vpack.c.b16 %v1002, %v1001
          %1019 = vmatprep.subr.bf16.mxu0 0
          %1020 = vmatpush1.bf16.msra.mxu0 %v1010
          %1021 = vmatprep.subr.bf16.mxu0 0
          %1022 = vmatpush1.bf16.msra.mxu0 %v1009
          %1023 = vmatprep.subr.bf16.mxu0 0
          %1024 = vmatpush1.bf16.msra.mxu0 %v1008
          %1025 = vmatprep.subr.bf16.mxu0 0
          %1026 = vmatpush1.bf16.msra.mxu0 %v1007
          %1027 = vmatprep.subr.bf16.mxu0 0
          %1028 = vmatpush1.bf16.msra.mxu0 %v1006
          %1029 = vmatprep.subr.bf16.mxu0 0
          %1030 = vmatpush1.bf16.msra.mxu0 %v1005
          %1031 = vmatprep.subr.bf16.mxu0 0
          %1032 = vmatpush1.bf16.msra.mxu0 %v1004
          %1033 = vmatprep.subr.bf16.mxu0 0
          %1034 = vmatpush1.bf16.msra.mxu0 %v1003
          %1035 = vmatprep.subr.bf16.mxu0 0
          %1036 = vmatpush2.bf16.msra.mxu0 0
          %1037 = vmatprep.subr.bf16.mxu0 0
          %1038 = vmatpush2.bf16.msra.mxu0 0
          %1039 = vmatprep.subr.bf16.mxu0 0
          %1040 = vmatpush2.bf16.msra.mxu0 0
          %1041 = vmatprep.subr.bf16.mxu0 0
          %1042 = vmatpush2.bf16.msra.mxu0 0
          %1043 = vmatprep.subr.bf16.mxu0 0
          %1044 = vmatpush2.bf16.msra.mxu0 0
          %1045 = vmatprep.subr.bf16.mxu0 0
          %1046 = vmatpush2.bf16.msra.mxu0 0
          %1047 = vmatprep.subr.bf16.mxu0 0
          %1048 = vmatpush2.bf16.msra.mxu0 0
          %1049 = vmatprep.subr.bf16.mxu0 0
          %1050 = vmatpush2.bf16.msra.mxu0 0
          %1051 = vmatprep.mubr.bf16.mxu0 0
          %1052 = vmatmul.mubr.bf16.gmra.mxu0 %v939
          %v1053 = vpop.f32.mrf.mxu0
          %v1054 = vadd.f32 0.0, %v1053
          %v1055 = vpop.f32.mrf.mxu0
          %v1056 = vpop.f32.mrf.mxu0
          %v1057 = vadd.f32 0.0, %v1056
          %v1058 = vpop.f32.mrf.mxu0
          %1059 = vmatprep.mubr.bf16.mxu0 0
          %1060 = vmatmul.mubr.bf16.gmra.mxu0 %v940
          %v1061 = vpop.f32.mrf.mxu0
          %v1062 = vadd.f32 0.0, %v1061
          %v1063 = vpop.f32.mrf.mxu0
          %v1064 = vpop.f32.mrf.mxu0
          %v1065 = vadd.f32 0.0, %v1064
          %v1066 = vpop.f32.mrf.mxu0
          %1067 = vmatprep.mubr.bf16.mxu0 0
          %1068 = vmatmul.mubr.bf16.gmra.mxu0 %v941
          %v1069 = vpop.f32.mrf.mxu0
          %v1070 = vadd.f32 0.0, %v1069
          %v1071 = vpop.f32.mrf.mxu0
          %v1072 = vpop.f32.mrf.mxu0
          %v1073 = vadd.f32 0.0, %v1072
          %v1074 = vpop.f32.mrf.mxu0
          %1075 = vmatprep.mubr.bf16.mxu0 0
          %1076 = vmatmul.mubr.bf16.gmra.mxu0 %v942
          %v1077 = vpop.f32.mrf.mxu0
          %v1078 = vadd.f32 0.0, %v1077
          %v1079 = vpop.f32.mrf.mxu0
          %v1080 = vpop.f32.mrf.mxu0
          %v1081 = vadd.f32 0.0, %v1080
          %v1082 = vpop.f32.mrf.mxu0
          %1083 = vmatprep.mubr.bf16.mxu0 0
          %1084 = vmatmul.mubr.bf16.gmra.mxu0 %v943
          %v1085 = vpop.f32.mrf.mxu0
          %v1086 = vadd.f32 0.0, %v1085
          %v1087 = vpop.f32.mrf.mxu0
          %v1088 = vpop.f32.mrf.mxu0
          %v1089 = vadd.f32 0.0, %v1088
          %v1090 = vpop.f32.mrf.mxu0
          %1091 = vmatprep.mubr.bf16.mxu0 0
          %1092 = vmatmul.mubr.bf16.gmra.mxu0 %v944
          %v1093 = vpop.f32.mrf.mxu0
          %v1094 = vadd.f32 0.0, %v1093
          %v1095 = vpop.f32.mrf.mxu0
          %v1096 = vpop.f32.mrf.mxu0
          %v1097 = vadd.f32 0.0, %v1096
          %v1098 = vpop.f32.mrf.mxu0
          %1099 = vmatprep.mubr.bf16.mxu0 0
          %1100 = vmatmul.mubr.bf16.gmra.mxu0 %v945
          %v1101 = vpop.f32.mrf.mxu0
          %v1102 = vadd.f32 0.0, %v1101
          %v1103 = vpop.f32.mrf.mxu0
          %v1104 = vpop.f32.mrf.mxu0
          %v1105 = vadd.f32 0.0, %v1104
          %v1106 = vpop.f32.mrf.mxu0
          %1107 = vmatprep.mubr.bf16.mxu0 0
          %1108 = vmatmul.mubr.bf16.gmra.mxu0 %v946
          %v1109 = vpop.f32.mrf.mxu0
          %v1110 = vadd.f32 0.0, %v1109
          %v1111 = vpop.f32.mrf.mxu0
          %v1112 = vpop.f32.mrf.mxu0
          %v1113 = vadd.f32 0.0, %v1112
          %v1114 = vpop.f32.mrf.mxu0
          %1115 = vmatprep.mubr.bf16.mxu0 0
          %1116 = vmatmul.mubr.bf16.gmra.mxu0 %v947
          %v1117 = vpop.f32.mrf.mxu0
          %v1118 = vadd.f32 0.0, %v1117
          %v1119 = vpop.f32.mrf.mxu0
          %v1120 = vpop.f32.mrf.mxu0
          %v1121 = vadd.f32 0.0, %v1120
          %v1122 = vpop.f32.mrf.mxu0
          %1123 = vmatprep.mubr.bf16.mxu0 0
          %1124 = vmatmul.mubr.bf16.gmra.mxu0 %v948
          %v1125 = vpop.f32.mrf.mxu0
          %v1126 = vadd.f32 0.0, %v1125
          %v1127 = vpop.f32.mrf.mxu0
          %v1128 = vpop.f32.mrf.mxu0
          %v1129 = vadd.f32 0.0, %v1128
          %v1130 = vpop.f32.mrf.mxu0
          %1131 = vmatprep.mubr.bf16.mxu0 0
          %1132 = vmatmul.mubr.bf16.gmra.mxu0 %v949
          %v1133 = vpop.f32.mrf.mxu0
          %v1134 = vadd.f32 0.0, %v1133
          %v1135 = vpop.f32.mrf.mxu0
          %v1136 = vpop.f32.mrf.mxu0
          %v1137 = vadd.f32 0.0, %v1136
          %v1138 = vpop.f32.mrf.mxu0
          %1139 = vmatprep.mubr.bf16.mxu0 0
          %1140 = vmatmul.mubr.bf16.gmra.mxu0 %v950
          %v1141 = vpop.f32.mrf.mxu0
          %v1142 = vadd.f32 0.0, %v1141
          %v1143 = vpop.f32.mrf.mxu0
          %v1144 = vpop.f32.mrf.mxu0
          %v1145 = vadd.f32 0.0, %v1144
          %v1146 = vpop.f32.mrf.mxu0
          %1147 = vmatprep.mubr.bf16.mxu0 0
          %1148 = vmatmul.mubr.bf16.gmra.mxu0 %v951
          %v1149 = vpop.f32.mrf.mxu0
          %v1150 = vadd.f32 0.0, %v1149
          %v1151 = vpop.f32.mrf.mxu0
          %v1152 = vpop.f32.mrf.mxu0
          %v1153 = vadd.f32 0.0, %v1152
          %v1154 = vpop.f32.mrf.mxu0
          %1155 = vmatprep.mubr.bf16.mxu0 0
          %1156 = vmatmul.mubr.bf16.gmra.mxu0 %v952
          %v1157 = vpop.f32.mrf.mxu0
          %v1158 = vadd.f32 0.0, %v1157
          %v1159 = vpop.f32.mrf.mxu0
          %v1160 = vpop.f32.mrf.mxu0
          %v1161 = vadd.f32 0.0, %v1160
          %v1162 = vpop.f32.mrf.mxu0
          %1163 = vmatprep.mubr.bf16.mxu0 0
          %1164 = vmatmul.mubr.bf16.gmra.mxu0 %v953
          %v1165 = vpop.f32.mrf.mxu0
          %v1166 = vadd.f32 0.0, %v1165
          %v1167 = vpop.f32.mrf.mxu0
          %v1168 = vpop.f32.mrf.mxu0
          %v1169 = vadd.f32 0.0, %v1168
          %v1170 = vpop.f32.mrf.mxu0
          %1171 = vmatprep.mubr.bf16.mxu0 0
          %1172 = vmatmul.mubr.bf16.gmra.mxu0 %v954
          %v1173 = vpop.f32.mrf.mxu0
          %v1174 = vadd.f32 0.0, %v1173
          %v1175 = vpop.f32.mrf.mxu0
          %v1176 = vpop.f32.mrf.mxu0
          %v1177 = vadd.f32 0.0, %v1176
          %v1178 = vpop.f32.mrf.mxu0
          %1179 = vdwg.mxu0
          %v1180 = vsub.bf16 %v763, %v747
          %v1181 = vsub.bf16 %v764, %v748
          %v1182 = vsub.bf16 %v765, %v749
          %v1183 = vsub.bf16 %v766, %v750
          %v1184 = vsub.bf16 %v767, %v751
          %v1185 = vsub.bf16 %v768, %v752
          %v1186 = vsub.bf16 %v769, %v753
          %v1187 = vsub.bf16 %v770, %v754
          %v1188 = vsub.bf16 %v771, %v755
          %v1189 = vsub.bf16 %v772, %v756
          %v1190 = vsub.bf16 %v773, %v757
          %v1191 = vsub.bf16 %v774, %v758
          %v1192 = vsub.bf16 %v775, %v759
          %v1193 = vsub.bf16 %v776, %v760
          %v1194 = vsub.bf16 %v777, %v761
          %v1195 = vsub.bf16 %v778, %v762
          %v1228 = vunpack.c.l.b16 %v779
          %v1229 = vunpack.c.l.b16 %v780
          %v1230 = vunpack.c.l.b16 %v781
          %v1231 = vunpack.c.l.b16 %v782
          %v1232 = vunpack.c.l.b16 %v783
          %v1233 = vunpack.c.l.b16 %v784
          %v1234 = vunpack.c.l.b16 %v785
          %v1235 = vunpack.c.l.b16 %v786
          %v1236 = vunpack.c.l.b16 %v787
          %v1237 = vunpack.c.l.b16 %v788
          %v1238 = vunpack.c.l.b16 %v789
          %v1239 = vunpack.c.l.b16 %v790
          %v1240 = vunpack.c.l.b16 %v791
          %v1241 = vunpack.c.l.b16 %v792
          %v1242 = vunpack.c.l.b16 %v793
          %v1243 = vunpack.c.l.b16 %v794
          %v1244 = vunpack.c.l.b16 %v795
          %v1245 = vunpack.c.l.b16 %v796
          %v1246 = vunpack.c.l.b16 %v797
          %v1247 = vunpack.c.l.b16 %v798
          %v1248 = vunpack.c.l.b16 %v799
          %v1249 = vunpack.c.l.b16 %v800
          %v1250 = vunpack.c.l.b16 %v801
          %v1251 = vunpack.c.l.b16 %v802
          %v1252 = vunpack.c.l.b16 %v803
          %v1253 = vunpack.c.l.b16 %v804
          %v1254 = vunpack.c.l.b16 %v805
          %v1255 = vunpack.c.l.b16 %v806
          %v1256 = vunpack.c.l.b16 %v807
          %v1257 = vunpack.c.l.b16 %v808
          %v1258 = vunpack.c.l.b16 %v809
          %v1259 = vunpack.c.l.b16 %v810
          %v1260 = vpack.c.b16 %v1229, %v1228
          %v1261 = vpack.c.b16 %v1231, %v1230
          %v1262 = vpack.c.b16 %v1233, %v1232
          %v1263 = vpack.c.b16 %v1235, %v1234
          %v1264 = vpack.c.b16 %v1237, %v1236
          %v1265 = vpack.c.b16 %v1239, %v1238
          %v1266 = vpack.c.b16 %v1241, %v1240
          %v1267 = vpack.c.b16 %v1243, %v1242
          %v1268 = vpack.c.b16 %v1245, %v1244
          %v1269 = vpack.c.b16 %v1247, %v1246
          %v1270 = vpack.c.b16 %v1249, %v1248
          %v1271 = vpack.c.b16 %v1251, %v1250
          %v1272 = vpack.c.b16 %v1253, %v1252
          %v1273 = vpack.c.b16 %v1255, %v1254
          %v1274 = vpack.c.b16 %v1257, %v1256
          %v1275 = vpack.c.b16 %v1259, %v1258
          %v1308 = vunpack.c.l.b16 %v1180
          %v1309 = vunpack.c.l.b16 %v1181
          %v1310 = vunpack.c.l.b16 %v1182
          %v1311 = vunpack.c.l.b16 %v1183
          %v1312 = vunpack.c.l.b16 %v1184
          %v1313 = vunpack.c.l.b16 %v1185
          %v1314 = vunpack.c.l.b16 %v1186
          %v1315 = vunpack.c.l.b16 %v1187
          %v1316 = vunpack.c.l.b16 %v1188
          %v1317 = vunpack.c.l.b16 %v1189
          %v1318 = vunpack.c.l.b16 %v1190
          %v1319 = vunpack.c.l.b16 %v1191
          %v1320 = vunpack.c.l.b16 %v1192
          %v1321 = vunpack.c.l.b16 %v1193
          %v1322 = vunpack.c.l.b16 %v1194
          %v1323 = vunpack.c.l.b16 %v1195
          %v1324 = vpack.c.b16 %v1309, %v1308
          %v1325 = vpack.c.b16 %v1311, %v1310
          %v1326 = vpack.c.b16 %v1313, %v1312
          %v1327 = vpack.c.b16 %v1315, %v1314
          %v1328 = vpack.c.b16 %v1317, %v1316
          %v1329 = vpack.c.b16 %v1319, %v1318
          %v1330 = vpack.c.b16 %v1321, %v1320
          %v1331 = vpack.c.b16 %v1323, %v1322
          %1340 = vmatprep.subr.bf16.mxu0 0
          %1341 = vmatpush1.bf16.msra.mxu0 %v1331
          %1342 = vmatprep.subr.bf16.mxu0 0
          %1343 = vmatpush1.bf16.msra.mxu0 %v1330
          %1344 = vmatprep.subr.bf16.mxu0 0
          %1345 = vmatpush1.bf16.msra.mxu0 %v1329
          %1346 = vmatprep.subr.bf16.mxu0 0
          %1347 = vmatpush1.bf16.msra.mxu0 %v1328
          %1348 = vmatprep.subr.bf16.mxu0 0
          %1349 = vmatpush1.bf16.msra.mxu0 %v1327
          %1350 = vmatprep.subr.bf16.mxu0 0
          %1351 = vmatpush1.bf16.msra.mxu0 %v1326
          %1352 = vmatprep.subr.bf16.mxu0 0
          %1353 = vmatpush1.bf16.msra.mxu0 %v1325
          %1354 = vmatprep.subr.bf16.mxu0 0
          %1355 = vmatpush1.bf16.msra.mxu0 %v1324
          %1356 = vmatprep.subr.bf16.mxu0 0
          %1357 = vmatpush2.bf16.msra.mxu0 0
          %1358 = vmatprep.subr.bf16.mxu0 0
          %1359 = vmatpush2.bf16.msra.mxu0 0
          %1360 = vmatprep.subr.bf16.mxu0 0
          %1361 = vmatpush2.bf16.msra.mxu0 0
          %1362 = vmatprep.subr.bf16.mxu0 0
          %1363 = vmatpush2.bf16.msra.mxu0 0
          %1364 = vmatprep.subr.bf16.mxu0 0
          %1365 = vmatpush2.bf16.msra.mxu0 0
          %1366 = vmatprep.subr.bf16.mxu0 0
          %1367 = vmatpush2.bf16.msra.mxu0 0
          %1368 = vmatprep.subr.bf16.mxu0 0
          %1369 = vmatpush2.bf16.msra.mxu0 0
          %1370 = vmatprep.subr.bf16.mxu0 0
          %1371 = vmatpush2.bf16.msra.mxu0 0
          %1372 = vmatprep.mubr.bf16.mxu0 0
          %1373 = vmatmul.mubr.bf16.gmra.mxu0 %v1260
          %v1374 = vpop.f32.mrf.mxu0
          %v1375 = vadd.f32 0.0, %v1374
          %v1376 = vpop.f32.mrf.mxu0
          %v1377 = vpop.f32.mrf.mxu0
          %v1378 = vadd.f32 0.0, %v1377
          %v1379 = vpop.f32.mrf.mxu0
          %1380 = vmatprep.mubr.bf16.mxu0 0
          %1381 = vmatmul.mubr.bf16.gmra.mxu0 %v1261
          %v1382 = vpop.f32.mrf.mxu0
          %v1383 = vadd.f32 0.0, %v1382
          %v1384 = vpop.f32.mrf.mxu0
          %v1385 = vpop.f32.mrf.mxu0
          %v1386 = vadd.f32 0.0, %v1385
          %v1387 = vpop.f32.mrf.mxu0
          %1388 = vmatprep.mubr.bf16.mxu0 0
          %1389 = vmatmul.mubr.bf16.gmra.mxu0 %v1262
          %v1390 = vpop.f32.mrf.mxu0
          %v1391 = vadd.f32 0.0, %v1390
          %v1392 = vpop.f32.mrf.mxu0
          %v1393 = vpop.f32.mrf.mxu0
          %v1394 = vadd.f32 0.0, %v1393
          %v1395 = vpop.f32.mrf.mxu0
          %1396 = vmatprep.mubr.bf16.mxu0 0
          %1397 = vmatmul.mubr.bf16.gmra.mxu0 %v1263
          %v1398 = vpop.f32.mrf.mxu0
          %v1399 = vadd.f32 0.0, %v1398
          %v1400 = vpop.f32.mrf.mxu0
          %v1401 = vpop.f32.mrf.mxu0
          %v1402 = vadd.f32 0.0, %v1401
          %v1403 = vpop.f32.mrf.mxu0
          %1404 = vmatprep.mubr.bf16.mxu0 0
          %1405 = vmatmul.mubr.bf16.gmra.mxu0 %v1264
          %v1406 = vpop.f32.mrf.mxu0
          %v1407 = vadd.f32 0.0, %v1406
          %v1408 = vpop.f32.mrf.mxu0
          %v1409 = vpop.f32.mrf.mxu0
          %v1410 = vadd.f32 0.0, %v1409
          %v1411 = vpop.f32.mrf.mxu0
          %1412 = vmatprep.mubr.bf16.mxu0 0
          %1413 = vmatmul.mubr.bf16.gmra.mxu0 %v1265
          %v1414 = vpop.f32.mrf.mxu0
          %v1415 = vadd.f32 0.0, %v1414
          %v1416 = vpop.f32.mrf.mxu0
          %v1417 = vpop.f32.mrf.mxu0
          %v1418 = vadd.f32 0.0, %v1417
          %v1419 = vpop.f32.mrf.mxu0
          %1420 = vmatprep.mubr.bf16.mxu0 0
          %1421 = vmatmul.mubr.bf16.gmra.mxu0 %v1266
          %v1422 = vpop.f32.mrf.mxu0
          %v1423 = vadd.f32 0.0, %v1422
          %v1424 = vpop.f32.mrf.mxu0
          %v1425 = vpop.f32.mrf.mxu0
          %v1426 = vadd.f32 0.0, %v1425
          %v1427 = vpop.f32.mrf.mxu0
          %1428 = vmatprep.mubr.bf16.mxu0 0
          %1429 = vmatmul.mubr.bf16.gmra.mxu0 %v1267
          %v1430 = vpop.f32.mrf.mxu0
          %v1431 = vadd.f32 0.0, %v1430
          %v1432 = vpop.f32.mrf.mxu0
          %v1433 = vpop.f32.mrf.mxu0
          %v1434 = vadd.f32 0.0, %v1433
          %v1435 = vpop.f32.mrf.mxu0
          %1436 = vmatprep.mubr.bf16.mxu0 0
          %1437 = vmatmul.mubr.bf16.gmra.mxu0 %v1268
          %v1438 = vpop.f32.mrf.mxu0
          %v1439 = vadd.f32 0.0, %v1438
          %v1440 = vpop.f32.mrf.mxu0
          %v1441 = vpop.f32.mrf.mxu0
          %v1442 = vadd.f32 0.0, %v1441
          %v1443 = vpop.f32.mrf.mxu0
          %1444 = vmatprep.mubr.bf16.mxu0 0
          %1445 = vmatmul.mubr.bf16.gmra.mxu0 %v1269
          %v1446 = vpop.f32.mrf.mxu0
          %v1447 = vadd.f32 0.0, %v1446
          %v1448 = vpop.f32.mrf.mxu0
          %v1449 = vpop.f32.mrf.mxu0
          %v1450 = vadd.f32 0.0, %v1449
          %v1451 = vpop.f32.mrf.mxu0
          %1452 = vmatprep.mubr.bf16.mxu0 0
          %1453 = vmatmul.mubr.bf16.gmra.mxu0 %v1270
          %v1454 = vpop.f32.mrf.mxu0
          %v1455 = vadd.f32 0.0, %v1454
          %v1456 = vpop.f32.mrf.mxu0
          %v1457 = vpop.f32.mrf.mxu0
          %v1458 = vadd.f32 0.0, %v1457
          %v1459 = vpop.f32.mrf.mxu0
          %1460 = vmatprep.mubr.bf16.mxu0 0
          %1461 = vmatmul.mubr.bf16.gmra.mxu0 %v1271
          %v1462 = vpop.f32.mrf.mxu0
          %v1463 = vadd.f32 0.0, %v1462
          %v1464 = vpop.f32.mrf.mxu0
          %v1465 = vpop.f32.mrf.mxu0
          %v1466 = vadd.f32 0.0, %v1465
          %v1467 = vpop.f32.mrf.mxu0
          %1468 = vmatprep.mubr.bf16.mxu0 0
          %1469 = vmatmul.mubr.bf16.gmra.mxu0 %v1272
          %v1470 = vpop.f32.mrf.mxu0
          %v1471 = vadd.f32 0.0, %v1470
          %v1472 = vpop.f32.mrf.mxu0
          %v1473 = vpop.f32.mrf.mxu0
          %v1474 = vadd.f32 0.0, %v1473
          %v1475 = vpop.f32.mrf.mxu0
          %1476 = vmatprep.mubr.bf16.mxu0 0
          %1477 = vmatmul.mubr.bf16.gmra.mxu0 %v1273
          %v1478 = vpop.f32.mrf.mxu0
          %v1479 = vadd.f32 0.0, %v1478
          %v1480 = vpop.f32.mrf.mxu0
          %v1481 = vpop.f32.mrf.mxu0
          %v1482 = vadd.f32 0.0, %v1481
          %v1483 = vpop.f32.mrf.mxu0
          %1484 = vmatprep.mubr.bf16.mxu0 0
          %1485 = vmatmul.mubr.bf16.gmra.mxu0 %v1274
          %v1486 = vpop.f32.mrf.mxu0
          %v1487 = vadd.f32 0.0, %v1486
          %v1488 = vpop.f32.mrf.mxu0
          %v1489 = vpop.f32.mrf.mxu0
          %v1490 = vadd.f32 0.0, %v1489
          %v1491 = vpop.f32.mrf.mxu0
          %1492 = vmatprep.mubr.bf16.mxu0 0
          %1493 = vmatmul.mubr.bf16.gmra.mxu0 %v1275
          %v1494 = vpop.f32.mrf.mxu0
          %v1495 = vadd.f32 0.0, %v1494
          %v1496 = vpop.f32.mrf.mxu0
          %v1497 = vpop.f32.mrf.mxu0
          %v1498 = vadd.f32 0.0, %v1497
          %v1499 = vpop.f32.mrf.mxu0
          %1500 = vdwg.mxu0
          %v1501 = vadd.bf16 %v747, %v763
          %v1502 = vadd.bf16 %v748, %v764
          %v1503 = vadd.bf16 %v749, %v765
          %v1504 = vadd.bf16 %v750, %v766
          %v1505 = vadd.bf16 %v751, %v767
          %v1506 = vadd.bf16 %v752, %v768
          %v1507 = vadd.bf16 %v753, %v769
          %v1508 = vadd.bf16 %v754, %v770
          %v1509 = vadd.bf16 %v755, %v771
          %v1510 = vadd.bf16 %v756, %v772
          %v1511 = vadd.bf16 %v757, %v773
          %v1512 = vadd.bf16 %v758, %v774
          %v1513 = vadd.bf16 %v759, %v775
          %v1514 = vadd.bf16 %v760, %v776
          %v1515 = vadd.bf16 %v761, %v777
          %v1516 = vadd.bf16 %v762, %v778
          %v1549 = vunpack.c.l.b16 %v811
          %v1550 = vunpack.c.l.b16 %v812
          %v1551 = vunpack.c.l.b16 %v813
          %v1552 = vunpack.c.l.b16 %v814
          %v1553 = vunpack.c.l.b16 %v815
          %v1554 = vunpack.c.l.b16 %v816
          %v1555 = vunpack.c.l.b16 %v817
          %v1556 = vunpack.c.l.b16 %v818
          %v1557 = vunpack.c.l.b16 %v819
          %v1558 = vunpack.c.l.b16 %v820
          %v1559 = vunpack.c.l.b16 %v821
          %v1560 = vunpack.c.l.b16 %v822
          %v1561 = vunpack.c.l.b16 %v823
          %v1562 = vunpack.c.l.b16 %v824
          %v1563 = vunpack.c.l.b16 %v825
          %v1564 = vunpack.c.l.b16 %v826
          %v1565 = vunpack.c.l.b16 %v827
          %v1566 = vunpack.c.l.b16 %v828
          %v1567 = vunpack.c.l.b16 %v829
          %v1568 = vunpack.c.l.b16 %v830
          %v1569 = vunpack.c.l.b16 %v831
          %v1570 = vunpack.c.l.b16 %v832
          %v1571 = vunpack.c.l.b16 %v833
          %v1572 = vunpack.c.l.b16 %v834
          %v1573 = vunpack.c.l.b16 %v835
          %v1574 = vunpack.c.l.b16 %v836
          %v1575 = vunpack.c.l.b16 %v837
          %v1576 = vunpack.c.l.b16 %v838
          %v1577 = vunpack.c.l.b16 %v839
          %v1578 = vunpack.c.l.b16 %v840
          %v1579 = vunpack.c.l.b16 %v841
          %v1580 = vunpack.c.l.b16 %v842
          %v1581 = vpack.c.b16 %v1550, %v1549
          %v1582 = vpack.c.b16 %v1552, %v1551
          %v1583 = vpack.c.b16 %v1554, %v1553
          %v1584 = vpack.c.b16 %v1556, %v1555
          %v1585 = vpack.c.b16 %v1558, %v1557
          %v1586 = vpack.c.b16 %v1560, %v1559
          %v1587 = vpack.c.b16 %v1562, %v1561
          %v1588 = vpack.c.b16 %v1564, %v1563
          %v1589 = vpack.c.b16 %v1566, %v1565
          %v1590 = vpack.c.b16 %v1568, %v1567
          %v1591 = vpack.c.b16 %v1570, %v1569
          %v1592 = vpack.c.b16 %v1572, %v1571
          %v1593 = vpack.c.b16 %v1574, %v1573
          %v1594 = vpack.c.b16 %v1576, %v1575
          %v1595 = vpack.c.b16 %v1578, %v1577
          %v1596 = vpack.c.b16 %v1580, %v1579
          %v1629 = vunpack.c.l.b16 %v1501
          %v1630 = vunpack.c.l.b16 %v1502
          %v1631 = vunpack.c.l.b16 %v1503
          %v1632 = vunpack.c.l.b16 %v1504
          %v1633 = vunpack.c.l.b16 %v1505
          %v1634 = vunpack.c.l.b16 %v1506
          %v1635 = vunpack.c.l.b16 %v1507
          %v1636 = vunpack.c.l.b16 %v1508
          %v1637 = vunpack.c.l.b16 %v1509
          %v1638 = vunpack.c.l.b16 %v1510
          %v1639 = vunpack.c.l.b16 %v1511
          %v1640 = vunpack.c.l.b16 %v1512
          %v1641 = vunpack.c.l.b16 %v1513
          %v1642 = vunpack.c.l.b16 %v1514
          %v1643 = vunpack.c.l.b16 %v1515
          %v1644 = vunpack.c.l.b16 %v1516
          %v1645 = vpack.c.b16 %v1630, %v1629
          %v1646 = vpack.c.b16 %v1632, %v1631
          %v1647 = vpack.c.b16 %v1634, %v1633
          %v1648 = vpack.c.b16 %v1636, %v1635
          %v1649 = vpack.c.b16 %v1638, %v1637
          %v1650 = vpack.c.b16 %v1640, %v1639
          %v1651 = vpack.c.b16 %v1642, %v1641
          %v1652 = vpack.c.b16 %v1644, %v1643
          %1661 = vmatprep.subr.bf16.mxu0 0
          %1662 = vmatpush1.bf16.msra.mxu0 %v1652
          %1663 = vmatprep.subr.bf16.mxu0 0
          %1664 = vmatpush1.bf16.msra.mxu0 %v1651
          %1665 = vmatprep.subr.bf16.mxu0 0
          %1666 = vmatpush1.bf16.msra.mxu0 %v1650
          %1667 = vmatprep.subr.bf16.mxu0 0
          %1668 = vmatpush1.bf16.msra.mxu0 %v1649
          %1669 = vmatprep.subr.bf16.mxu0 0
          %1670 = vmatpush1.bf16.msra.mxu0 %v1648
          %1671 = vmatprep.subr.bf16.mxu0 0
          %1672 = vmatpush1.bf16.msra.mxu0 %v1647
          %1673 = vmatprep.subr.bf16.mxu0 0
          %1674 = vmatpush1.bf16.msra.mxu0 %v1646
          %1675 = vmatprep.subr.bf16.mxu0 0
          %1676 = vmatpush1.bf16.msra.mxu0 %v1645
          %1677 = vmatprep.subr.bf16.mxu0 0
          %1678 = vmatpush2.bf16.msra.mxu0 0
          %1679 = vmatprep.subr.bf16.mxu0 0
          %1680 = vmatpush2.bf16.msra.mxu0 0
          %1681 = vmatprep.subr.bf16.mxu0 0
          %1682 = vmatpush2.bf16.msra.mxu0 0
          %1683 = vmatprep.subr.bf16.mxu0 0
          %1684 = vmatpush2.bf16.msra.mxu0 0
          %1685 = vmatprep.subr.bf16.mxu0 0
          %1686 = vmatpush2.bf16.msra.mxu0 0
          %1687 = vmatprep.subr.bf16.mxu0 0
          %1688 = vmatpush2.bf16.msra.mxu0 0
          %1689 = vmatprep.subr.bf16.mxu0 0
          %1690 = vmatpush2.bf16.msra.mxu0 0
          %1691 = vmatprep.subr.bf16.mxu0 0
          %1692 = vmatpush2.bf16.msra.mxu0 0
          %1693 = vmatprep.mubr.bf16.mxu0 0
          %1694 = vmatmul.mubr.bf16.gmra.mxu0 %v1581
          %v1695 = vpop.f32.mrf.mxu0
          %v1696 = vadd.f32 0.0, %v1695
          %v1697 = vpop.f32.mrf.mxu0
          %v1698 = vpop.f32.mrf.mxu0
          %v1699 = vadd.f32 0.0, %v1698
          %v1700 = vpop.f32.mrf.mxu0
          %1701 = vmatprep.mubr.bf16.mxu0 0
          %1702 = vmatmul.mubr.bf16.gmra.mxu0 %v1582
          %v1703 = vpop.f32.mrf.mxu0
          %v1704 = vadd.f32 0.0, %v1703
          %v1705 = vpop.f32.mrf.mxu0
          %v1706 = vpop.f32.mrf.mxu0
          %v1707 = vadd.f32 0.0, %v1706
          %v1708 = vpop.f32.mrf.mxu0
          %1709 = vmatprep.mubr.bf16.mxu0 0
          %1710 = vmatmul.mubr.bf16.gmra.mxu0 %v1583
          %v1711 = vpop.f32.mrf.mxu0
          %v1712 = vadd.f32 0.0, %v1711
          %v1713 = vpop.f32.mrf.mxu0
          %v1714 = vpop.f32.mrf.mxu0
          %v1715 = vadd.f32 0.0, %v1714
          %v1716 = vpop.f32.mrf.mxu0
          %1717 = vmatprep.mubr.bf16.mxu0 0
          %1718 = vmatmul.mubr.bf16.gmra.mxu0 %v1584
          %v1719 = vpop.f32.mrf.mxu0
          %v1720 = vadd.f32 0.0, %v1719
          %v1721 = vpop.f32.mrf.mxu0
          %v1722 = vpop.f32.mrf.mxu0
          %v1723 = vadd.f32 0.0, %v1722
          %v1724 = vpop.f32.mrf.mxu0
          %1725 = vmatprep.mubr.bf16.mxu0 0
          %1726 = vmatmul.mubr.bf16.gmra.mxu0 %v1585
          %v1727 = vpop.f32.mrf.mxu0
          %v1728 = vadd.f32 0.0, %v1727
          %v1729 = vpop.f32.mrf.mxu0
          %v1730 = vpop.f32.mrf.mxu0
          %v1731 = vadd.f32 0.0, %v1730
          %v1732 = vpop.f32.mrf.mxu0
          %1733 = vmatprep.mubr.bf16.mxu0 0
          %1734 = vmatmul.mubr.bf16.gmra.mxu0 %v1586
          %v1735 = vpop.f32.mrf.mxu0
          %v1736 = vadd.f32 0.0, %v1735
          %v1737 = vpop.f32.mrf.mxu0
          %v1738 = vpop.f32.mrf.mxu0
          %v1739 = vadd.f32 0.0, %v1738
          %v1740 = vpop.f32.mrf.mxu0
          %1741 = vmatprep.mubr.bf16.mxu0 0
          %1742 = vmatmul.mubr.bf16.gmra.mxu0 %v1587
          %v1743 = vpop.f32.mrf.mxu0
          %v1744 = vadd.f32 0.0, %v1743
          %v1745 = vpop.f32.mrf.mxu0
          %v1746 = vpop.f32.mrf.mxu0
          %v1747 = vadd.f32 0.0, %v1746
          %v1748 = vpop.f32.mrf.mxu0
          %1749 = vmatprep.mubr.bf16.mxu0 0
          %1750 = vmatmul.mubr.bf16.gmra.mxu0 %v1588
          %v1751 = vpop.f32.mrf.mxu0
          %v1752 = vadd.f32 0.0, %v1751
          %v1753 = vpop.f32.mrf.mxu0
          %v1754 = vpop.f32.mrf.mxu0
          %v1755 = vadd.f32 0.0, %v1754
          %v1756 = vpop.f32.mrf.mxu0
          %1757 = vmatprep.mubr.bf16.mxu0 0
          %1758 = vmatmul.mubr.bf16.gmra.mxu0 %v1589
          %v1759 = vpop.f32.mrf.mxu0
          %v1760 = vadd.f32 0.0, %v1759
          %v1761 = vpop.f32.mrf.mxu0
          %v1762 = vpop.f32.mrf.mxu0
          %v1763 = vadd.f32 0.0, %v1762
          %v1764 = vpop.f32.mrf.mxu0
          %1765 = vmatprep.mubr.bf16.mxu0 0
          %1766 = vmatmul.mubr.bf16.gmra.mxu0 %v1590
          %v1767 = vpop.f32.mrf.mxu0
          %v1768 = vadd.f32 0.0, %v1767
          %v1769 = vpop.f32.mrf.mxu0
          %v1770 = vpop.f32.mrf.mxu0
          %v1771 = vadd.f32 0.0, %v1770
          %v1772 = vpop.f32.mrf.mxu0
          %1773 = vmatprep.mubr.bf16.mxu0 0
          %1774 = vmatmul.mubr.bf16.gmra.mxu0 %v1591
          %v1775 = vpop.f32.mrf.mxu0
          %v1776 = vadd.f32 0.0, %v1775
          %v1777 = vpop.f32.mrf.mxu0
          %v1778 = vpop.f32.mrf.mxu0
          %v1779 = vadd.f32 0.0, %v1778
          %v1780 = vpop.f32.mrf.mxu0
          %1781 = vmatprep.mubr.bf16.mxu0 0
          %1782 = vmatmul.mubr.bf16.gmra.mxu0 %v1592
          %v1783 = vpop.f32.mrf.mxu0
          %v1784 = vadd.f32 0.0, %v1783
          %v1785 = vpop.f32.mrf.mxu0
          %v1786 = vpop.f32.mrf.mxu0
          %v1787 = vadd.f32 0.0, %v1786
          %v1788 = vpop.f32.mrf.mxu0
          %1789 = vmatprep.mubr.bf16.mxu0 0
          %1790 = vmatmul.mubr.bf16.gmra.mxu0 %v1593
          %v1791 = vpop.f32.mrf.mxu0
          %v1792 = vadd.f32 0.0, %v1791
          %v1793 = vpop.f32.mrf.mxu0
          %v1794 = vpop.f32.mrf.mxu0
          %v1795 = vadd.f32 0.0, %v1794
          %v1796 = vpop.f32.mrf.mxu0
          %1797 = vmatprep.mubr.bf16.mxu0 0
          %1798 = vmatmul.mubr.bf16.gmra.mxu0 %v1594
          %v1799 = vpop.f32.mrf.mxu0
          %v1800 = vadd.f32 0.0, %v1799
          %v1801 = vpop.f32.mrf.mxu0
          %v1802 = vpop.f32.mrf.mxu0
          %v1803 = vadd.f32 0.0, %v1802
          %v1804 = vpop.f32.mrf.mxu0
          %1805 = vmatprep.mubr.bf16.mxu0 0
          %1806 = vmatmul.mubr.bf16.gmra.mxu0 %v1595
          %v1807 = vpop.f32.mrf.mxu0
          %v1808 = vadd.f32 0.0, %v1807
          %v1809 = vpop.f32.mrf.mxu0
          %v1810 = vpop.f32.mrf.mxu0
          %v1811 = vadd.f32 0.0, %v1810
          %v1812 = vpop.f32.mrf.mxu0
          %1813 = vmatprep.mubr.bf16.mxu0 0
          %1814 = vmatmul.mubr.bf16.gmra.mxu0 %v1596
          %v1815 = vpop.f32.mrf.mxu0
          %v1816 = vadd.f32 0.0, %v1815
          %v1817 = vpop.f32.mrf.mxu0
          %v1818 = vpop.f32.mrf.mxu0
          %v1819 = vadd.f32 0.0, %v1818
          %v1820 = vpop.f32.mrf.mxu0
          %1821 = vdwg.mxu0
          %v1822 = vsub.f32 %v1054, %v1696
          %v1823 = vsub.f32 %v1057, %v1699
          %v1824 = vsub.f32 %v1062, %v1704
          %v1825 = vsub.f32 %v1065, %v1707
          %v1826 = vsub.f32 %v1070, %v1712
          %v1827 = vsub.f32 %v1073, %v1715
          %v1828 = vsub.f32 %v1078, %v1720
          %v1829 = vsub.f32 %v1081, %v1723
          %v1830 = vsub.f32 %v1086, %v1728
          %v1831 = vsub.f32 %v1089, %v1731
          %v1832 = vsub.f32 %v1094, %v1736
          %v1833 = vsub.f32 %v1097, %v1739
          %v1834 = vsub.f32 %v1102, %v1744
          %v1835 = vsub.f32 %v1105, %v1747
          %v1836 = vsub.f32 %v1110, %v1752
          %v1837 = vsub.f32 %v1113, %v1755
          %v1838 = vsub.f32 %v1118, %v1760
          %v1839 = vsub.f32 %v1121, %v1763
          %v1840 = vsub.f32 %v1126, %v1768
          %v1841 = vsub.f32 %v1129, %v1771
          %v1842 = vsub.f32 %v1134, %v1776
          %v1843 = vsub.f32 %v1137, %v1779
          %v1844 = vsub.f32 %v1142, %v1784
          %v1845 = vsub.f32 %v1145, %v1787
          %v1846 = vsub.f32 %v1150, %v1792
          %v1847 = vsub.f32 %v1153, %v1795
          %v1848 = vsub.f32 %v1158, %v1800
          %v1849 = vsub.f32 %v1161, %v1803
          %v1850 = vsub.f32 %v1166, %v1808
          %v1851 = vsub.f32 %v1169, %v1811
          %v1852 = vsub.f32 %v1174, %v1816
          %v1853 = vsub.f32 %v1177, %v1819
          %v1854 = vadd.f32 %v1054, %v1375
          %v1855 = vadd.f32 %v1057, %v1378
          %v1856 = vadd.f32 %v1062, %v1383
          %v1857 = vadd.f32 %v1065, %v1386
          %v1858 = vadd.f32 %v1070, %v1391
          %v1859 = vadd.f32 %v1073, %v1394
          %v1860 = vadd.f32 %v1078, %v1399
          %v1861 = vadd.f32 %v1081, %v1402
          %v1862 = vadd.f32 %v1086, %v1407
          %v1863 = vadd.f32 %v1089, %v1410
          %v1864 = vadd.f32 %v1094, %v1415
          %v1865 = vadd.f32 %v1097, %v1418
          %v1866 = vadd.f32 %v1102, %v1423
          %v1867 = vadd.f32 %v1105, %v1426
          %v1868 = vadd.f32 %v1110, %v1431
          %v1869 = vadd.f32 %v1113, %v1434
          %v1870 = vadd.f32 %v1118, %v1439
          %v1871 = vadd.f32 %v1121, %v1442
          %v1872 = vadd.f32 %v1126, %v1447
          %v1873 = vadd.f32 %v1129, %v1450
          %v1874 = vadd.f32 %v1134, %v1455
          %v1875 = vadd.f32 %v1137, %v1458
          %v1876 = vadd.f32 %v1142, %v1463
          %v1877 = vadd.f32 %v1145, %v1466
          %v1878 = vadd.f32 %v1150, %v1471
          %v1879 = vadd.f32 %v1153, %v1474
          %v1880 = vadd.f32 %v1158, %v1479
          %v1881 = vadd.f32 %v1161, %v1482
          %v1882 = vadd.f32 %v1166, %v1487
          %v1883 = vadd.f32 %v1169, %v1490
          %v1884 = vadd.f32 %v1174, %v1495
          %v1885 = vadd.f32 %v1177, %v1498
          %v1886 = vpack.c.bf16 %v1823, %v1822
          %v1887 = vpack.c.bf16 %v1825, %v1824
          %v1888 = vpack.c.bf16 %v1827, %v1826
          %v1889 = vpack.c.bf16 %v1829, %v1828
          %v1890 = vpack.c.bf16 %v1831, %v1830
          %v1891 = vpack.c.bf16 %v1833, %v1832
          %v1892 = vpack.c.bf16 %v1835, %v1834
          %v1893 = vpack.c.bf16 %v1837, %v1836
          %v1894 = vpack.c.bf16 %v1839, %v1838
          %v1895 = vpack.c.bf16 %v1841, %v1840
          %v1896 = vpack.c.bf16 %v1843, %v1842
          %v1897 = vpack.c.bf16 %v1845, %v1844
          %v1898 = vpack.c.bf16 %v1847, %v1846
          %v1899 = vpack.c.bf16 %v1849, %v1848
          %v1900 = vpack.c.bf16 %v1851, %v1850
          %v1901 = vpack.c.bf16 %v1853, %v1852
          %v1902 = vpack.c.bf16 %v1855, %v1854
          %v1903 = vpack.c.bf16 %v1857, %v1856
          %v1904 = vpack.c.bf16 %v1859, %v1858
          %v1905 = vpack.c.bf16 %v1861, %v1860
          %v1906 = vpack.c.bf16 %v1863, %v1862
          %v1907 = vpack.c.bf16 %v1865, %v1864
          %v1908 = vpack.c.bf16 %v1867, %v1866
          %v1909 = vpack.c.bf16 %v1869, %v1868
          %v1910 = vpack.c.bf16 %v1871, %v1870
          %v1911 = vpack.c.bf16 %v1873, %v1872
          %v1912 = vpack.c.bf16 %v1875, %v1874
          %v1913 = vpack.c.bf16 %v1877, %v1876
          %v1914 = vpack.c.bf16 %v1879, %v1878
          %v1915 = vpack.c.bf16 %v1881, %v1880
          %v1916 = vpack.c.bf16 %v1883, %v1882
          %v1917 = vpack.c.bf16 %v1885, %v1884
          %v1918 = vld [vmem:[#allocation14] sm:$0xff]
          %v1919 = vld [vmem:[#allocation14 + $0x8] sm:$0xff]
          %v1920 = vld [vmem:[#allocation14 + $0x10] sm:$0xff]
          %v1921 = vld [vmem:[#allocation14 + $0x18] sm:$0xff]
          %v1922 = vld [vmem:[#allocation14 + $0x20] sm:$0xff]
          %v1923 = vld [vmem:[#allocation14 + $0x28] sm:$0xff]
          %v1924 = vld [vmem:[#allocation14 + $0x30] sm:$0xff]
          %v1925 = vld [vmem:[#allocation14 + $0x38] sm:$0xff]
          %v1926 = vld [vmem:[#allocation14 + $0x40] sm:$0xff]
          %v1927 = vld [vmem:[#allocation14 + $0x48] sm:$0xff]
          %v1928 = vld [vmem:[#allocation14 + $0x50] sm:$0xff]
          %v1929 = vld [vmem:[#allocation14 + $0x58] sm:$0xff]
          %v1930 = vld [vmem:[#allocation14 + $0x60] sm:$0xff]
          %v1931 = vld [vmem:[#allocation14 + $0x68] sm:$0xff]
          %v1932 = vld [vmem:[#allocation14 + $0x70] sm:$0xff]
          %v1933 = vld [vmem:[#allocation14 + $0x78] sm:$0xff]
          %v1934 = vld [vmem:[#allocation15] sm:$0xff]
          %v1935 = vld [vmem:[#allocation15 + $0x8] sm:$0xff]
          %v1936 = vld [vmem:[#allocation15 + $0x10] sm:$0xff]
          %v1937 = vld [vmem:[#allocation15 + $0x18] sm:$0xff]
          %v1938 = vld [vmem:[#allocation15 + $0x20] sm:$0xff]
          %v1939 = vld [vmem:[#allocation15 + $0x28] sm:$0xff]
          %v1940 = vld [vmem:[#allocation15 + $0x30] sm:$0xff]
          %v1941 = vld [vmem:[#allocation15 + $0x38] sm:$0xff]
          %v1942 = vld [vmem:[#allocation15 + $0x40] sm:$0xff]
          %v1943 = vld [vmem:[#allocation15 + $0x48] sm:$0xff]
          %v1944 = vld [vmem:[#allocation15 + $0x50] sm:$0xff]
          %v1945 = vld [vmem:[#allocation15 + $0x58] sm:$0xff]
          %v1946 = vld [vmem:[#allocation15 + $0x60] sm:$0xff]
          %v1947 = vld [vmem:[#allocation15 + $0x68] sm:$0xff]
          %v1948 = vld [vmem:[#allocation15 + $0x70] sm:$0xff]
          %v1949 = vld [vmem:[#allocation15 + $0x78] sm:$0xff]
          %v1950 = vadd.bf16 %v1886, %v1902
          %v1951 = vadd.bf16 %v1887, %v1903
          %v1952 = vadd.bf16 %v1888, %v1904
          %v1953 = vadd.bf16 %v1889, %v1905
          %v1954 = vadd.bf16 %v1890, %v1906
          %v1955 = vadd.bf16 %v1891, %v1907
          %v1956 = vadd.bf16 %v1892, %v1908
          %v1957 = vadd.bf16 %v1893, %v1909
          %v1958 = vadd.bf16 %v1894, %v1910
          %v1959 = vadd.bf16 %v1895, %v1911
          %v1960 = vadd.bf16 %v1896, %v1912
          %v1961 = vadd.bf16 %v1897, %v1913
          %v1962 = vadd.bf16 %v1898, %v1914
          %v1963 = vadd.bf16 %v1899, %v1915
          %v1964 = vadd.bf16 %v1900, %v1916
          %v1965 = vadd.bf16 %v1901, %v1917
          %v1982 = vunpack.c.l.b16 %v1918
          %v1983 = vunpack.c.h.b16 %v1918
          %v1984 = vunpack.c.l.b16 %v1919
          %v1985 = vunpack.c.h.b16 %v1919
          %v1986 = vunpack.c.l.b16 %v1920
          %v1987 = vunpack.c.h.b16 %v1920
          %v1988 = vunpack.c.l.b16 %v1921
          %v1989 = vunpack.c.h.b16 %v1921
          %v1990 = vunpack.c.l.b16 %v1922
          %v1991 = vunpack.c.h.b16 %v1922
          %v1992 = vunpack.c.l.b16 %v1923
          %v1993 = vunpack.c.h.b16 %v1923
          %v1994 = vunpack.c.l.b16 %v1924
          %v1995 = vunpack.c.h.b16 %v1924
          %v1996 = vunpack.c.l.b16 %v1925
          %v1997 = vunpack.c.h.b16 %v1925
          %v1998 = vunpack.c.l.b16 %v1926
          %v1999 = vunpack.c.h.b16 %v1926
          %v2000 = vunpack.c.l.b16 %v1927
          %v2001 = vunpack.c.h.b16 %v1927
          %v2002 = vunpack.c.l.b16 %v1928
          %v2003 = vunpack.c.h.b16 %v1928
          %v2004 = vunpack.c.l.b16 %v1929
          %v2005 = vunpack.c.h.b16 %v1929
          %v2006 = vunpack.c.l.b16 %v1930
          %v2007 = vunpack.c.h.b16 %v1930
          %v2008 = vunpack.c.l.b16 %v1931
          %v2009 = vunpack.c.h.b16 %v1931
          %v2010 = vunpack.c.l.b16 %v1932
          %v2011 = vunpack.c.h.b16 %v1932
          %v2012 = vunpack.c.l.b16 %v1933
          %v2013 = vunpack.c.h.b16 %v1933
          %v2014 = vpack.c.b16 %v1984, %v1982
          %v2015 = vpack.c.b16 %v1985, %v1983
          %v2016 = vpack.c.b16 %v1988, %v1986
          %v2017 = vpack.c.b16 %v1989, %v1987
          %v2018 = vpack.c.b16 %v1992, %v1990
          %v2019 = vpack.c.b16 %v1993, %v1991
          %v2020 = vpack.c.b16 %v1996, %v1994
          %v2021 = vpack.c.b16 %v1997, %v1995
          %v2022 = vpack.c.b16 %v2000, %v1998
          %v2023 = vpack.c.b16 %v2001, %v1999
          %v2024 = vpack.c.b16 %v2004, %v2002
          %v2025 = vpack.c.b16 %v2005, %v2003
          %v2026 = vpack.c.b16 %v2008, %v2006
          %v2027 = vpack.c.b16 %v2009, %v2007
          %v2028 = vpack.c.b16 %v2012, %v2010
          %v2029 = vpack.c.b16 %v2013, %v2011
          %2046 = vmatprep.subr.bf16.mxu0 %v2029
          %2047 = vmatpush1.bf16.msra.mxu0 %v2028
          %2048 = vmatprep.subr.bf16.mxu0 %v2027
          %2049 = vmatpush1.bf16.msra.mxu0 %v2026
          %2050 = vmatprep.subr.bf16.mxu0 %v2025
          %2051 = vmatpush1.bf16.msra.mxu0 %v2024
          %2052 = vmatprep.subr.bf16.mxu0 %v2023
          %2053 = vmatpush1.bf16.msra.mxu0 %v2022
          %2054 = vmatprep.subr.bf16.mxu0 %v2021
          %2055 = vmatpush1.bf16.msra.mxu0 %v2020
          %2056 = vmatprep.subr.bf16.mxu0 %v2019
          %2057 = vmatpush1.bf16.msra.mxu0 %v2018
          %2058 = vmatprep.subr.bf16.mxu0 %v2017
          %2059 = vmatpush1.bf16.msra.mxu0 %v2016
          %2060 = vmatprep.subr.bf16.mxu0 %v2015
          %2061 = vmatpush1.bf16.msra.mxu0 %v2014
          %2062 = vmatprep.subr.bf16.mxu0 0
          %2063 = vmatpush2.bf16.msra.mxu0 0
          %2064 = vmatprep.subr.bf16.mxu0 0
          %2065 = vmatpush2.bf16.msra.mxu0 0
          %2066 = vmatprep.subr.bf16.mxu0 0
          %2067 = vmatpush2.bf16.msra.mxu0 0
          %2068 = vmatprep.subr.bf16.mxu0 0
          %2069 = vmatpush2.bf16.msra.mxu0 0
          %2070 = vmatprep.subr.bf16.mxu0 0
          %2071 = vmatpush2.bf16.msra.mxu0 0
          %2072 = vmatprep.subr.bf16.mxu0 0
          %2073 = vmatpush2.bf16.msra.mxu0 0
          %2074 = vmatprep.subr.bf16.mxu0 0
          %2075 = vmatpush2.bf16.msra.mxu0 0
          %2076 = vmatprep.subr.bf16.mxu0 0
          %2077 = vmatpush2.bf16.msra.mxu0 0
          %2078 = vmatprep.mubr.bf16.mxu0 0
          %2079 = vmatmul.mubr.bf16.gmra.mxu0 %v1950
          %v2080 = vpop.f32.mrf.mxu0
          %v2081 = vadd.f32 0.0, %v2080
          %v2082 = vpop.f32.mrf.mxu0
          %v2083 = vadd.f32 0.0, %v2082
          %v2084 = vpop.f32.mrf.mxu0
          %v2085 = vadd.f32 0.0, %v2084
          %v2086 = vpop.f32.mrf.mxu0
          %v2087 = vadd.f32 0.0, %v2086
          %2088 = vmatprep.mubr.bf16.mxu0 0
          %2089 = vmatmul.mubr.bf16.gmra.mxu0 %v1951
          %v2090 = vpop.f32.mrf.mxu0
          %v2091 = vadd.f32 0.0, %v2090
          %v2092 = vpop.f32.mrf.mxu0
          %v2093 = vadd.f32 0.0, %v2092
          %v2094 = vpop.f32.mrf.mxu0
          %v2095 = vadd.f32 0.0, %v2094
          %v2096 = vpop.f32.mrf.mxu0
          %v2097 = vadd.f32 0.0, %v2096
          %2098 = vmatprep.mubr.bf16.mxu0 0
          %2099 = vmatmul.mubr.bf16.gmra.mxu0 %v1952
          %v2100 = vpop.f32.mrf.mxu0
          %v2101 = vadd.f32 0.0, %v2100
          %v2102 = vpop.f32.mrf.mxu0
          %v2103 = vadd.f32 0.0, %v2102
          %v2104 = vpop.f32.mrf.mxu0
          %v2105 = vadd.f32 0.0, %v2104
          %v2106 = vpop.f32.mrf.mxu0
          %v2107 = vadd.f32 0.0, %v2106
          %2108 = vmatprep.mubr.bf16.mxu0 0
          %2109 = vmatmul.mubr.bf16.gmra.mxu0 %v1953
          %v2110 = vpop.f32.mrf.mxu0
          %v2111 = vadd.f32 0.0, %v2110
          %v2112 = vpop.f32.mrf.mxu0
          %v2113 = vadd.f32 0.0, %v2112
          %v2114 = vpop.f32.mrf.mxu0
          %v2115 = vadd.f32 0.0, %v2114
          %v2116 = vpop.f32.mrf.mxu0
          %v2117 = vadd.f32 0.0, %v2116
          %2118 = vmatprep.mubr.bf16.mxu0 0
          %2119 = vmatmul.mubr.bf16.gmra.mxu0 %v1954
          %v2120 = vpop.f32.mrf.mxu0
          %v2121 = vadd.f32 0.0, %v2120
          %v2122 = vpop.f32.mrf.mxu0
          %v2123 = vadd.f32 0.0, %v2122
          %v2124 = vpop.f32.mrf.mxu0
          %v2125 = vadd.f32 0.0, %v2124
          %v2126 = vpop.f32.mrf.mxu0
          %v2127 = vadd.f32 0.0, %v2126
          %2128 = vmatprep.mubr.bf16.mxu0 0
          %2129 = vmatmul.mubr.bf16.gmra.mxu0 %v1955
          %v2130 = vpop.f32.mrf.mxu0
          %v2131 = vadd.f32 0.0, %v2130
          %v2132 = vpop.f32.mrf.mxu0
          %v2133 = vadd.f32 0.0, %v2132
          %v2134 = vpop.f32.mrf.mxu0
          %v2135 = vadd.f32 0.0, %v2134
          %v2136 = vpop.f32.mrf.mxu0
          %v2137 = vadd.f32 0.0, %v2136
          %2138 = vmatprep.mubr.bf16.mxu0 0
          %2139 = vmatmul.mubr.bf16.gmra.mxu0 %v1956
          %v2140 = vpop.f32.mrf.mxu0
          %v2141 = vadd.f32 0.0, %v2140
          %v2142 = vpop.f32.mrf.mxu0
          %v2143 = vadd.f32 0.0, %v2142
          %v2144 = vpop.f32.mrf.mxu0
          %v2145 = vadd.f32 0.0, %v2144
          %v2146 = vpop.f32.mrf.mxu0
          %v2147 = vadd.f32 0.0, %v2146
          %2148 = vmatprep.mubr.bf16.mxu0 0
          %2149 = vmatmul.mubr.bf16.gmra.mxu0 %v1957
          %v2150 = vpop.f32.mrf.mxu0
          %v2151 = vadd.f32 0.0, %v2150
          %v2152 = vpop.f32.mrf.mxu0
          %v2153 = vadd.f32 0.0, %v2152
          %v2154 = vpop.f32.mrf.mxu0
          %v2155 = vadd.f32 0.0, %v2154
          %v2156 = vpop.f32.mrf.mxu0
          %v2157 = vadd.f32 0.0, %v2156
          %2158 = vmatprep.mubr.bf16.mxu0 0
          %2159 = vmatmul.mubr.bf16.gmra.mxu0 %v1958
          %v2160 = vpop.f32.mrf.mxu0
          %v2161 = vadd.f32 0.0, %v2160
          %v2162 = vpop.f32.mrf.mxu0
          %v2163 = vadd.f32 0.0, %v2162
          %v2164 = vpop.f32.mrf.mxu0
          %v2165 = vadd.f32 0.0, %v2164
          %v2166 = vpop.f32.mrf.mxu0
          %v2167 = vadd.f32 0.0, %v2166
          %2168 = vmatprep.mubr.bf16.mxu0 0
          %2169 = vmatmul.mubr.bf16.gmra.mxu0 %v1959
          %v2170 = vpop.f32.mrf.mxu0
          %v2171 = vadd.f32 0.0, %v2170
          %v2172 = vpop.f32.mrf.mxu0
          %v2173 = vadd.f32 0.0, %v2172
          %v2174 = vpop.f32.mrf.mxu0
          %v2175 = vadd.f32 0.0, %v2174
          %v2176 = vpop.f32.mrf.mxu0
          %v2177 = vadd.f32 0.0, %v2176
          %2178 = vmatprep.mubr.bf16.mxu0 0
          %2179 = vmatmul.mubr.bf16.gmra.mxu0 %v1960
          %v2180 = vpop.f32.mrf.mxu0
          %v2181 = vadd.f32 0.0, %v2180
          %v2182 = vpop.f32.mrf.mxu0
          %v2183 = vadd.f32 0.0, %v2182
          %v2184 = vpop.f32.mrf.mxu0
          %v2185 = vadd.f32 0.0, %v2184
          %v2186 = vpop.f32.mrf.mxu0
          %v2187 = vadd.f32 0.0, %v2186
          %2188 = vmatprep.mubr.bf16.mxu0 0
          %2189 = vmatmul.mubr.bf16.gmra.mxu0 %v1961
          %v2190 = vpop.f32.mrf.mxu0
          %v2191 = vadd.f32 0.0, %v2190
          %v2192 = vpop.f32.mrf.mxu0
          %v2193 = vadd.f32 0.0, %v2192
          %v2194 = vpop.f32.mrf.mxu0
          %v2195 = vadd.f32 0.0, %v2194
          %v2196 = vpop.f32.mrf.mxu0
          %v2197 = vadd.f32 0.0, %v2196
          %2198 = vmatprep.mubr.bf16.mxu0 0
          %2199 = vmatmul.mubr.bf16.gmra.mxu0 %v1962
          %v2200 = vpop.f32.mrf.mxu0
          %v2201 = vadd.f32 0.0, %v2200
          %v2202 = vpop.f32.mrf.mxu0
          %v2203 = vadd.f32 0.0, %v2202
          %v2204 = vpop.f32.mrf.mxu0
          %v2205 = vadd.f32 0.0, %v2204
          %v2206 = vpop.f32.mrf.mxu0
          %v2207 = vadd.f32 0.0, %v2206
          %2208 = vmatprep.mubr.bf16.mxu0 0
          %2209 = vmatmul.mubr.bf16.gmra.mxu0 %v1963
          %v2210 = vpop.f32.mrf.mxu0
          %v2211 = vadd.f32 0.0, %v2210
          %v2212 = vpop.f32.mrf.mxu0
          %v2213 = vadd.f32 0.0, %v2212
          %v2214 = vpop.f32.mrf.mxu0
          %v2215 = vadd.f32 0.0, %v2214
          %v2216 = vpop.f32.mrf.mxu0
          %v2217 = vadd.f32 0.0, %v2216
          %2218 = vmatprep.mubr.bf16.mxu0 0
          %2219 = vmatmul.mubr.bf16.gmra.mxu0 %v1964
          %v2220 = vpop.f32.mrf.mxu0
          %v2221 = vadd.f32 0.0, %v2220
          %v2222 = vpop.f32.mrf.mxu0
          %v2223 = vadd.f32 0.0, %v2222
          %v2224 = vpop.f32.mrf.mxu0
          %v2225 = vadd.f32 0.0, %v2224
          %v2226 = vpop.f32.mrf.mxu0
          %v2227 = vadd.f32 0.0, %v2226
          %2228 = vmatprep.mubr.bf16.mxu0 0
          %2229 = vmatmul.mubr.bf16.gmra.mxu0 %v1965
          %v2230 = vpop.f32.mrf.mxu0
          %v2231 = vadd.f32 0.0, %v2230
          %v2232 = vpop.f32.mrf.mxu0
          %v2233 = vadd.f32 0.0, %v2232
          %v2234 = vpop.f32.mrf.mxu0
          %v2235 = vadd.f32 0.0, %v2234
          %v2236 = vpop.f32.mrf.mxu0
          %v2237 = vadd.f32 0.0, %v2236
          %2238 = vdwg.mxu0
          %v2239 = vsub.bf16 %v1934, %v1918
          %v2240 = vsub.bf16 %v1935, %v1919
          %v2241 = vsub.bf16 %v1936, %v1920
          %v2242 = vsub.bf16 %v1937, %v1921
          %v2243 = vsub.bf16 %v1938, %v1922
          %v2244 = vsub.bf16 %v1939, %v1923
          %v2245 = vsub.bf16 %v1940, %v1924
          %v2246 = vsub.bf16 %v1941, %v1925
          %v2247 = vsub.bf16 %v1942, %v1926
          %v2248 = vsub.bf16 %v1943, %v1927
          %v2249 = vsub.bf16 %v1944, %v1928
          %v2250 = vsub.bf16 %v1945, %v1929
          %v2251 = vsub.bf16 %v1946, %v1930
          %v2252 = vsub.bf16 %v1947, %v1931
          %v2253 = vsub.bf16 %v1948, %v1932
          %v2254 = vsub.bf16 %v1949, %v1933
          %v2271 = vunpack.c.l.b16 %v2239
          %v2272 = vunpack.c.h.b16 %v2239
          %v2273 = vunpack.c.l.b16 %v2240
          %v2274 = vunpack.c.h.b16 %v2240
          %v2275 = vunpack.c.l.b16 %v2241
          %v2276 = vunpack.c.h.b16 %v2241
          %v2277 = vunpack.c.l.b16 %v2242
          %v2278 = vunpack.c.h.b16 %v2242
          %v2279 = vunpack.c.l.b16 %v2243
          %v2280 = vunpack.c.h.b16 %v2243
          %v2281 = vunpack.c.l.b16 %v2244
          %v2282 = vunpack.c.h.b16 %v2244
          %v2283 = vunpack.c.l.b16 %v2245
          %v2284 = vunpack.c.h.b16 %v2245
          %v2285 = vunpack.c.l.b16 %v2246
          %v2286 = vunpack.c.h.b16 %v2246
          %v2287 = vunpack.c.l.b16 %v2247
          %v2288 = vunpack.c.h.b16 %v2247
          %v2289 = vunpack.c.l.b16 %v2248
          %v2290 = vunpack.c.h.b16 %v2248
          %v2291 = vunpack.c.l.b16 %v2249
          %v2292 = vunpack.c.h.b16 %v2249
          %v2293 = vunpack.c.l.b16 %v2250
          %v2294 = vunpack.c.h.b16 %v2250
          %v2295 = vunpack.c.l.b16 %v2251
          %v2296 = vunpack.c.h.b16 %v2251
          %v2297 = vunpack.c.l.b16 %v2252
          %v2298 = vunpack.c.h.b16 %v2252
          %v2299 = vunpack.c.l.b16 %v2253
          %v2300 = vunpack.c.h.b16 %v2253
          %v2301 = vunpack.c.l.b16 %v2254
          %v2302 = vunpack.c.h.b16 %v2254
          %v2303 = vpack.c.b16 %v2273, %v2271
          %v2304 = vpack.c.b16 %v2274, %v2272
          %v2305 = vpack.c.b16 %v2277, %v2275
          %v2306 = vpack.c.b16 %v2278, %v2276
          %v2307 = vpack.c.b16 %v2281, %v2279
          %v2308 = vpack.c.b16 %v2282, %v2280
          %v2309 = vpack.c.b16 %v2285, %v2283
          %v2310 = vpack.c.b16 %v2286, %v2284
          %v2311 = vpack.c.b16 %v2289, %v2287
          %v2312 = vpack.c.b16 %v2290, %v2288
          %v2313 = vpack.c.b16 %v2293, %v2291
          %v2314 = vpack.c.b16 %v2294, %v2292
          %v2315 = vpack.c.b16 %v2297, %v2295
          %v2316 = vpack.c.b16 %v2298, %v2296
          %v2317 = vpack.c.b16 %v2301, %v2299
          %v2318 = vpack.c.b16 %v2302, %v2300
          %2335 = vmatprep.subr.bf16.mxu0 %v2318
          %2336 = vmatpush1.bf16.msra.mxu0 %v2317
          %2337 = vmatprep.subr.bf16.mxu0 %v2316
          %2338 = vmatpush1.bf16.msra.mxu0 %v2315
          %2339 = vmatprep.subr.bf16.mxu0 %v2314
          %2340 = vmatpush1.bf16.msra.mxu0 %v2313
          %2341 = vmatprep.subr.bf16.mxu0 %v2312
          %2342 = vmatpush1.bf16.msra.mxu0 %v2311
          %2343 = vmatprep.subr.bf16.mxu0 %v2310
          %2344 = vmatpush1.bf16.msra.mxu0 %v2309
          %2345 = vmatprep.subr.bf16.mxu0 %v2308
          %2346 = vmatpush1.bf16.msra.mxu0 %v2307
          %2347 = vmatprep.subr.bf16.mxu0 %v2306
          %2348 = vmatpush1.bf16.msra.mxu0 %v2305
          %2349 = vmatprep.subr.bf16.mxu0 %v2304
          %2350 = vmatpush1.bf16.msra.mxu0 %v2303
          %2351 = vmatprep.subr.bf16.mxu0 0
          %2352 = vmatpush2.bf16.msra.mxu0 0
          %2353 = vmatprep.subr.bf16.mxu0 0
          %2354 = vmatpush2.bf16.msra.mxu0 0
          %2355 = vmatprep.subr.bf16.mxu0 0
          %2356 = vmatpush2.bf16.msra.mxu0 0
          %2357 = vmatprep.subr.bf16.mxu0 0
          %2358 = vmatpush2.bf16.msra.mxu0 0
          %2359 = vmatprep.subr.bf16.mxu0 0
          %2360 = vmatpush2.bf16.msra.mxu0 0
          %2361 = vmatprep.subr.bf16.mxu0 0
          %2362 = vmatpush2.bf16.msra.mxu0 0
          %2363 = vmatprep.subr.bf16.mxu0 0
          %2364 = vmatpush2.bf16.msra.mxu0 0
          %2365 = vmatprep.subr.bf16.mxu0 0
          %2366 = vmatpush2.bf16.msra.mxu0 0
          %2367 = vmatprep.mubr.bf16.mxu0 0
          %2368 = vmatmul.mubr.bf16.gmra.mxu0 %v1886
          %v2369 = vpop.f32.mrf.mxu0
          %v2370 = vadd.f32 0.0, %v2369
          %v2371 = vpop.f32.mrf.mxu0
          %v2372 = vadd.f32 0.0, %v2371
          %v2373 = vpop.f32.mrf.mxu0
          %v2374 = vadd.f32 0.0, %v2373
          %v2375 = vpop.f32.mrf.mxu0
          %v2376 = vadd.f32 0.0, %v2375
          %2377 = vmatprep.mubr.bf16.mxu0 0
          %2378 = vmatmul.mubr.bf16.gmra.mxu0 %v1887
          %v2379 = vpop.f32.mrf.mxu0
          %v2380 = vadd.f32 0.0, %v2379
          %v2381 = vpop.f32.mrf.mxu0
          %v2382 = vadd.f32 0.0, %v2381
          %v2383 = vpop.f32.mrf.mxu0
          %v2384 = vadd.f32 0.0, %v2383
          %v2385 = vpop.f32.mrf.mxu0
          %v2386 = vadd.f32 0.0, %v2385
          %2387 = vmatprep.mubr.bf16.mxu0 0
          %2388 = vmatmul.mubr.bf16.gmra.mxu0 %v1888
          %v2389 = vpop.f32.mrf.mxu0
          %v2390 = vadd.f32 0.0, %v2389
          %v2391 = vpop.f32.mrf.mxu0
          %v2392 = vadd.f32 0.0, %v2391
          %v2393 = vpop.f32.mrf.mxu0
          %v2394 = vadd.f32 0.0, %v2393
          %v2395 = vpop.f32.mrf.mxu0
          %v2396 = vadd.f32 0.0, %v2395
          %2397 = vmatprep.mubr.bf16.mxu0 0
          %2398 = vmatmul.mubr.bf16.gmra.mxu0 %v1889
          %v2399 = vpop.f32.mrf.mxu0
          %v2400 = vadd.f32 0.0, %v2399
          %v2401 = vpop.f32.mrf.mxu0
          %v2402 = vadd.f32 0.0, %v2401
          %v2403 = vpop.f32.mrf.mxu0
          %v2404 = vadd.f32 0.0, %v2403
          %v2405 = vpop.f32.mrf.mxu0
          %v2406 = vadd.f32 0.0, %v2405
          %2407 = vmatprep.mubr.bf16.mxu0 0
          %2408 = vmatmul.mubr.bf16.gmra.mxu0 %v1890
          %v2409 = vpop.f32.mrf.mxu0
          %v2410 = vadd.f32 0.0, %v2409
          %v2411 = vpop.f32.mrf.mxu0
          %v2412 = vadd.f32 0.0, %v2411
          %v2413 = vpop.f32.mrf.mxu0
          %v2414 = vadd.f32 0.0, %v2413
          %v2415 = vpop.f32.mrf.mxu0
          %v2416 = vadd.f32 0.0, %v2415
          %2417 = vmatprep.mubr.bf16.mxu0 0
          %2418 = vmatmul.mubr.bf16.gmra.mxu0 %v1891
          %v2419 = vpop.f32.mrf.mxu0
          %v2420 = vadd.f32 0.0, %v2419
          %v2421 = vpop.f32.mrf.mxu0
          %v2422 = vadd.f32 0.0, %v2421
          %v2423 = vpop.f32.mrf.mxu0
          %v2424 = vadd.f32 0.0, %v2423
          %v2425 = vpop.f32.mrf.mxu0
          %v2426 = vadd.f32 0.0, %v2425
          %2427 = vmatprep.mubr.bf16.mxu0 0
          %2428 = vmatmul.mubr.bf16.gmra.mxu0 %v1892
          %v2429 = vpop.f32.mrf.mxu0
          %v2430 = vadd.f32 0.0, %v2429
          %v2431 = vpop.f32.mrf.mxu0
          %v2432 = vadd.f32 0.0, %v2431
          %v2433 = vpop.f32.mrf.mxu0
          %v2434 = vadd.f32 0.0, %v2433
          %v2435 = vpop.f32.mrf.mxu0
          %v2436 = vadd.f32 0.0, %v2435
          %2437 = vmatprep.mubr.bf16.mxu0 0
          %2438 = vmatmul.mubr.bf16.gmra.mxu0 %v1893
          %v2439 = vpop.f32.mrf.mxu0
          %v2440 = vadd.f32 0.0, %v2439
          %v2441 = vpop.f32.mrf.mxu0
          %v2442 = vadd.f32 0.0, %v2441
          %v2443 = vpop.f32.mrf.mxu0
          %v2444 = vadd.f32 0.0, %v2443
          %v2445 = vpop.f32.mrf.mxu0
          %v2446 = vadd.f32 0.0, %v2445
          %2447 = vmatprep.mubr.bf16.mxu0 0
          %2448 = vmatmul.mubr.bf16.gmra.mxu0 %v1894
          %v2449 = vpop.f32.mrf.mxu0
          %v2450 = vadd.f32 0.0, %v2449
          %v2451 = vpop.f32.mrf.mxu0
          %v2452 = vadd.f32 0.0, %v2451
          %v2453 = vpop.f32.mrf.mxu0
          %v2454 = vadd.f32 0.0, %v2453
          %v2455 = vpop.f32.mrf.mxu0
          %v2456 = vadd.f32 0.0, %v2455
          %2457 = vmatprep.mubr.bf16.mxu0 0
          %2458 = vmatmul.mubr.bf16.gmra.mxu0 %v1895
          %v2459 = vpop.f32.mrf.mxu0
          %v2460 = vadd.f32 0.0, %v2459
          %v2461 = vpop.f32.mrf.mxu0
          %v2462 = vadd.f32 0.0, %v2461
          %v2463 = vpop.f32.mrf.mxu0
          %v2464 = vadd.f32 0.0, %v2463
          %v2465 = vpop.f32.mrf.mxu0
          %v2466 = vadd.f32 0.0, %v2465
          %2467 = vmatprep.mubr.bf16.mxu0 0
          %2468 = vmatmul.mubr.bf16.gmra.mxu0 %v1896
          %v2469 = vpop.f32.mrf.mxu0
          %v2470 = vadd.f32 0.0, %v2469
          %v2471 = vpop.f32.mrf.mxu0
          %v2472 = vadd.f32 0.0, %v2471
          %v2473 = vpop.f32.mrf.mxu0
          %v2474 = vadd.f32 0.0, %v2473
          %v2475 = vpop.f32.mrf.mxu0
          %v2476 = vadd.f32 0.0, %v2475
          %2477 = vmatprep.mubr.bf16.mxu0 0
          %2478 = vmatmul.mubr.bf16.gmra.mxu0 %v1897
          %v2479 = vpop.f32.mrf.mxu0
          %v2480 = vadd.f32 0.0, %v2479
          %v2481 = vpop.f32.mrf.mxu0
          %v2482 = vadd.f32 0.0, %v2481
          %v2483 = vpop.f32.mrf.mxu0
          %v2484 = vadd.f32 0.0, %v2483
          %v2485 = vpop.f32.mrf.mxu0
          %v2486 = vadd.f32 0.0, %v2485
          %2487 = vmatprep.mubr.bf16.mxu0 0
          %2488 = vmatmul.mubr.bf16.gmra.mxu0 %v1898
          %v2489 = vpop.f32.mrf.mxu0
          %v2490 = vadd.f32 0.0, %v2489
          %v2491 = vpop.f32.mrf.mxu0
          %v2492 = vadd.f32 0.0, %v2491
          %v2493 = vpop.f32.mrf.mxu0
          %v2494 = vadd.f32 0.0, %v2493
          %v2495 = vpop.f32.mrf.mxu0
          %v2496 = vadd.f32 0.0, %v2495
          %2497 = vmatprep.mubr.bf16.mxu0 0
          %2498 = vmatmul.mubr.bf16.gmra.mxu0 %v1899
          %v2499 = vpop.f32.mrf.mxu0
          %v2500 = vadd.f32 0.0, %v2499
          %v2501 = vpop.f32.mrf.mxu0
          %v2502 = vadd.f32 0.0, %v2501
          %v2503 = vpop.f32.mrf.mxu0
          %v2504 = vadd.f32 0.0, %v2503
          %v2505 = vpop.f32.mrf.mxu0
          %v2506 = vadd.f32 0.0, %v2505
          %2507 = vmatprep.mubr.bf16.mxu0 0
          %2508 = vmatmul.mubr.bf16.gmra.mxu0 %v1900
          %v2509 = vpop.f32.mrf.mxu0
          %v2510 = vadd.f32 0.0, %v2509
          %v2511 = vpop.f32.mrf.mxu0
          %v2512 = vadd.f32 0.0, %v2511
          %v2513 = vpop.f32.mrf.mxu0
          %v2514 = vadd.f32 0.0, %v2513
          %v2515 = vpop.f32.mrf.mxu0
          %v2516 = vadd.f32 0.0, %v2515
          %2517 = vmatprep.mubr.bf16.mxu0 0
          %2518 = vmatmul.mubr.bf16.gmra.mxu0 %v1901
          %v2519 = vpop.f32.mrf.mxu0
          %v2520 = vadd.f32 0.0, %v2519
          %v2521 = vpop.f32.mrf.mxu0
          %v2522 = vadd.f32 0.0, %v2521
          %v2523 = vpop.f32.mrf.mxu0
          %v2524 = vadd.f32 0.0, %v2523
          %v2525 = vpop.f32.mrf.mxu0
          %v2526 = vadd.f32 0.0, %v2525
          %2527 = vdwg.mxu0
          %v2528 = vadd.bf16 %v1918, %v1934
          %v2529 = vadd.bf16 %v1919, %v1935
          %v2530 = vadd.bf16 %v1920, %v1936
          %v2531 = vadd.bf16 %v1921, %v1937
          %v2532 = vadd.bf16 %v1922, %v1938
          %v2533 = vadd.bf16 %v1923, %v1939
          %v2534 = vadd.bf16 %v1924, %v1940
          %v2535 = vadd.bf16 %v1925, %v1941
          %v2536 = vadd.bf16 %v1926, %v1942
          %v2537 = vadd.bf16 %v1927, %v1943
          %v2538 = vadd.bf16 %v1928, %v1944
          %v2539 = vadd.bf16 %v1929, %v1945
          %v2540 = vadd.bf16 %v1930, %v1946
          %v2541 = vadd.bf16 %v1931, %v1947
          %v2542 = vadd.bf16 %v1932, %v1948
          %v2543 = vadd.bf16 %v1933, %v1949
          %v2560 = vunpack.c.l.b16 %v2528
          %v2561 = vunpack.c.h.b16 %v2528
          %v2562 = vunpack.c.l.b16 %v2529
          %v2563 = vunpack.c.h.b16 %v2529
          %v2564 = vunpack.c.l.b16 %v2530
          %v2565 = vunpack.c.h.b16 %v2530
          %v2566 = vunpack.c.l.b16 %v2531
          %v2567 = vunpack.c.h.b16 %v2531
          %v2568 = vunpack.c.l.b16 %v2532
          %v2569 = vunpack.c.h.b16 %v2532
          %v2570 = vunpack.c.l.b16 %v2533
          %v2571 = vunpack.c.h.b16 %v2533
          %v2572 = vunpack.c.l.b16 %v2534
          %v2573 = vunpack.c.h.b16 %v2534
          %v2574 = vunpack.c.l.b16 %v2535
          %v2575 = vunpack.c.h.b16 %v2535
          %v2576 = vunpack.c.l.b16 %v2536
          %v2577 = vunpack.c.h.b16 %v2536
          %v2578 = vunpack.c.l.b16 %v2537
          %v2579 = vunpack.c.h.b16 %v2537
          %v2580 = vunpack.c.l.b16 %v2538
          %v2581 = vunpack.c.h.b16 %v2538
          %v2582 = vunpack.c.l.b16 %v2539
          %v2583 = vunpack.c.h.b16 %v2539
          %v2584 = vunpack.c.l.b16 %v2540
          %v2585 = vunpack.c.h.b16 %v2540
          %v2586 = vunpack.c.l.b16 %v2541
          %v2587 = vunpack.c.h.b16 %v2541
          %v2588 = vunpack.c.l.b16 %v2542
          %v2589 = vunpack.c.h.b16 %v2542
          %v2590 = vunpack.c.l.b16 %v2543
          %v2591 = vunpack.c.h.b16 %v2543
          %v2592 = vpack.c.b16 %v2562, %v2560
          %v2593 = vpack.c.b16 %v2563, %v2561
          %v2594 = vpack.c.b16 %v2566, %v2564
          %v2595 = vpack.c.b16 %v2567, %v2565
          %v2596 = vpack.c.b16 %v2570, %v2568
          %v2597 = vpack.c.b16 %v2571, %v2569
          %v2598 = vpack.c.b16 %v2574, %v2572
          %v2599 = vpack.c.b16 %v2575, %v2573
          %v2600 = vpack.c.b16 %v2578, %v2576
          %v2601 = vpack.c.b16 %v2579, %v2577
          %v2602 = vpack.c.b16 %v2582, %v2580
          %v2603 = vpack.c.b16 %v2583, %v2581
          %v2604 = vpack.c.b16 %v2586, %v2584
          %v2605 = vpack.c.b16 %v2587, %v2585
          %v2606 = vpack.c.b16 %v2590, %v2588
          %v2607 = vpack.c.b16 %v2591, %v2589
          %2624 = vmatprep.subr.bf16.mxu0 %v2607
          %2625 = vmatpush1.bf16.msra.mxu0 %v2606
          %2626 = vmatprep.subr.bf16.mxu0 %v2605
          %2627 = vmatpush1.bf16.msra.mxu0 %v2604
          %2628 = vmatprep.subr.bf16.mxu0 %v2603
          %2629 = vmatpush1.bf16.msra.mxu0 %v2602
          %2630 = vmatprep.subr.bf16.mxu0 %v2601
          %2631 = vmatpush1.bf16.msra.mxu0 %v2600
          %2632 = vmatprep.subr.bf16.mxu0 %v2599
          %2633 = vmatpush1.bf16.msra.mxu0 %v2598
          %2634 = vmatprep.subr.bf16.mxu0 %v2597
          %2635 = vmatpush1.bf16.msra.mxu0 %v2596
          %2636 = vmatprep.subr.bf16.mxu0 %v2595
          %2637 = vmatpush1.bf16.msra.mxu0 %v2594
          %2638 = vmatprep.subr.bf16.mxu0 %v2593
          %2639 = vmatpush1.bf16.msra.mxu0 %v2592
          %2640 = vmatprep.subr.bf16.mxu0 0
          %2641 = vmatpush2.bf16.msra.mxu0 0
          %2642 = vmatprep.subr.bf16.mxu0 0
          %2643 = vmatpush2.bf16.msra.mxu0 0
          %2644 = vmatprep.subr.bf16.mxu0 0
          %2645 = vmatpush2.bf16.msra.mxu0 0
          %2646 = vmatprep.subr.bf16.mxu0 0
          %2647 = vmatpush2.bf16.msra.mxu0 0
          %2648 = vmatprep.subr.bf16.mxu0 0
          %2649 = vmatpush2.bf16.msra.mxu0 0
          %2650 = vmatprep.subr.bf16.mxu0 0
          %2651 = vmatpush2.bf16.msra.mxu0 0
          %2652 = vmatprep.subr.bf16.mxu0 0
          %2653 = vmatpush2.bf16.msra.mxu0 0
          %2654 = vmatprep.subr.bf16.mxu0 0
          %2655 = vmatpush2.bf16.msra.mxu0 0
          %2656 = vmatprep.mubr.bf16.mxu0 0
          %2657 = vmatmul.mubr.bf16.gmra.mxu0 %v1902
          %v2658 = vpop.f32.mrf.mxu0
          %v2659 = vadd.f32 0.0, %v2658
          %v2660 = vpop.f32.mrf.mxu0
          %v2661 = vadd.f32 0.0, %v2660
          %v2662 = vpop.f32.mrf.mxu0
          %v2663 = vadd.f32 0.0, %v2662
          %v2664 = vpop.f32.mrf.mxu0
          %v2665 = vadd.f32 0.0, %v2664
          %2666 = vmatprep.mubr.bf16.mxu0 0
          %2667 = vmatmul.mubr.bf16.gmra.mxu0 %v1903
          %v2668 = vpop.f32.mrf.mxu0
          %v2669 = vadd.f32 0.0, %v2668
          %v2670 = vpop.f32.mrf.mxu0
          %v2671 = vadd.f32 0.0, %v2670
          %v2672 = vpop.f32.mrf.mxu0
          %v2673 = vadd.f32 0.0, %v2672
          %v2674 = vpop.f32.mrf.mxu0
          %v2675 = vadd.f32 0.0, %v2674
          %2676 = vmatprep.mubr.bf16.mxu0 0
          %2677 = vmatmul.mubr.bf16.gmra.mxu0 %v1904
          %v2678 = vpop.f32.mrf.mxu0
          %v2679 = vadd.f32 0.0, %v2678
          %v2680 = vpop.f32.mrf.mxu0
          %v2681 = vadd.f32 0.0, %v2680
          %v2682 = vpop.f32.mrf.mxu0
          %v2683 = vadd.f32 0.0, %v2682
          %v2684 = vpop.f32.mrf.mxu0
          %v2685 = vadd.f32 0.0, %v2684
          %2686 = vmatprep.mubr.bf16.mxu0 0
          %2687 = vmatmul.mubr.bf16.gmra.mxu0 %v1905
          %v2688 = vpop.f32.mrf.mxu0
          %v2689 = vadd.f32 0.0, %v2688
          %v2690 = vpop.f32.mrf.mxu0
          %v2691 = vadd.f32 0.0, %v2690
          %v2692 = vpop.f32.mrf.mxu0
          %v2693 = vadd.f32 0.0, %v2692
          %v2694 = vpop.f32.mrf.mxu0
          %v2695 = vadd.f32 0.0, %v2694
          %2696 = vmatprep.mubr.bf16.mxu0 0
          %2697 = vmatmul.mubr.bf16.gmra.mxu0 %v1906
          %v2698 = vpop.f32.mrf.mxu0
          %v2699 = vadd.f32 0.0, %v2698
          %v2700 = vpop.f32.mrf.mxu0
          %v2701 = vadd.f32 0.0, %v2700
          %v2702 = vpop.f32.mrf.mxu0
          %v2703 = vadd.f32 0.0, %v2702
          %v2704 = vpop.f32.mrf.mxu0
          %v2705 = vadd.f32 0.0, %v2704
          %2706 = vmatprep.mubr.bf16.mxu0 0
          %2707 = vmatmul.mubr.bf16.gmra.mxu0 %v1907
          %v2708 = vpop.f32.mrf.mxu0
          %v2709 = vadd.f32 0.0, %v2708
          %v2710 = vpop.f32.mrf.mxu0
          %v2711 = vadd.f32 0.0, %v2710
          %v2712 = vpop.f32.mrf.mxu0
          %v2713 = vadd.f32 0.0, %v2712
          %v2714 = vpop.f32.mrf.mxu0
          %v2715 = vadd.f32 0.0, %v2714
          %2716 = vmatprep.mubr.bf16.mxu0 0
          %2717 = vmatmul.mubr.bf16.gmra.mxu0 %v1908
          %v2718 = vpop.f32.mrf.mxu0
          %v2719 = vadd.f32 0.0, %v2718
          %v2720 = vpop.f32.mrf.mxu0
          %v2721 = vadd.f32 0.0, %v2720
          %v2722 = vpop.f32.mrf.mxu0
          %v2723 = vadd.f32 0.0, %v2722
          %v2724 = vpop.f32.mrf.mxu0
          %v2725 = vadd.f32 0.0, %v2724
          %2726 = vmatprep.mubr.bf16.mxu0 0
          %2727 = vmatmul.mubr.bf16.gmra.mxu0 %v1909
          %v2728 = vpop.f32.mrf.mxu0
          %v2729 = vadd.f32 0.0, %v2728
          %v2730 = vpop.f32.mrf.mxu0
          %v2731 = vadd.f32 0.0, %v2730
          %v2732 = vpop.f32.mrf.mxu0
          %v2733 = vadd.f32 0.0, %v2732
          %v2734 = vpop.f32.mrf.mxu0
          %v2735 = vadd.f32 0.0, %v2734
          %2736 = vmatprep.mubr.bf16.mxu0 0
          %2737 = vmatmul.mubr.bf16.gmra.mxu0 %v1910
          %v2738 = vpop.f32.mrf.mxu0
          %v2739 = vadd.f32 0.0, %v2738
          %v2740 = vpop.f32.mrf.mxu0
          %v2741 = vadd.f32 0.0, %v2740
          %v2742 = vpop.f32.mrf.mxu0
          %v2743 = vadd.f32 0.0, %v2742
          %v2744 = vpop.f32.mrf.mxu0
          %v2745 = vadd.f32 0.0, %v2744
          %2746 = vmatprep.mubr.bf16.mxu0 0
          %2747 = vmatmul.mubr.bf16.gmra.mxu0 %v1911
          %v2748 = vpop.f32.mrf.mxu0
          %v2749 = vadd.f32 0.0, %v2748
          %v2750 = vpop.f32.mrf.mxu0
          %v2751 = vadd.f32 0.0, %v2750
          %v2752 = vpop.f32.mrf.mxu0
          %v2753 = vadd.f32 0.0, %v2752
          %v2754 = vpop.f32.mrf.mxu0
          %v2755 = vadd.f32 0.0, %v2754
          %2756 = vmatprep.mubr.bf16.mxu0 0
          %2757 = vmatmul.mubr.bf16.gmra.mxu0 %v1912
          %v2758 = vpop.f32.mrf.mxu0
          %v2759 = vadd.f32 0.0, %v2758
          %v2760 = vpop.f32.mrf.mxu0
          %v2761 = vadd.f32 0.0, %v2760
          %v2762 = vpop.f32.mrf.mxu0
          %v2763 = vadd.f32 0.0, %v2762
          %v2764 = vpop.f32.mrf.mxu0
          %v2765 = vadd.f32 0.0, %v2764
          %2766 = vmatprep.mubr.bf16.mxu0 0
          %2767 = vmatmul.mubr.bf16.gmra.mxu0 %v1913
          %v2768 = vpop.f32.mrf.mxu0
          %v2769 = vadd.f32 0.0, %v2768
          %v2770 = vpop.f32.mrf.mxu0
          %v2771 = vadd.f32 0.0, %v2770
          %v2772 = vpop.f32.mrf.mxu0
          %v2773 = vadd.f32 0.0, %v2772
          %v2774 = vpop.f32.mrf.mxu0
          %v2775 = vadd.f32 0.0, %v2774
          %2776 = vmatprep.mubr.bf16.mxu0 0
          %2777 = vmatmul.mubr.bf16.gmra.mxu0 %v1914
          %v2778 = vpop.f32.mrf.mxu0
          %v2779 = vadd.f32 0.0, %v2778
          %v2780 = vpop.f32.mrf.mxu0
          %v2781 = vadd.f32 0.0, %v2780
          %v2782 = vpop.f32.mrf.mxu0
          %v2783 = vadd.f32 0.0, %v2782
          %v2784 = vpop.f32.mrf.mxu0
          %v2785 = vadd.f32 0.0, %v2784
          %2786 = vmatprep.mubr.bf16.mxu0 0
          %2787 = vmatmul.mubr.bf16.gmra.mxu0 %v1915
          %v2788 = vpop.f32.mrf.mxu0
          %v2789 = vadd.f32 0.0, %v2788
          %v2790 = vpop.f32.mrf.mxu0
          %v2791 = vadd.f32 0.0, %v2790
          %v2792 = vpop.f32.mrf.mxu0
          %v2793 = vadd.f32 0.0, %v2792
          %v2794 = vpop.f32.mrf.mxu0
          %v2795 = vadd.f32 0.0, %v2794
          %2796 = vmatprep.mubr.bf16.mxu0 0
          %2797 = vmatmul.mubr.bf16.gmra.mxu0 %v1916
          %v2798 = vpop.f32.mrf.mxu0
          %v2799 = vadd.f32 0.0, %v2798
          %v2800 = vpop.f32.mrf.mxu0
          %v2801 = vadd.f32 0.0, %v2800
          %v2802 = vpop.f32.mrf.mxu0
          %v2803 = vadd.f32 0.0, %v2802
          %v2804 = vpop.f32.mrf.mxu0
          %v2805 = vadd.f32 0.0, %v2804
          %2806 = vmatprep.mubr.bf16.mxu0 0
          %2807 = vmatmul.mubr.bf16.gmra.mxu0 %v1917
          %v2808 = vpop.f32.mrf.mxu0
          %v2809 = vadd.f32 0.0, %v2808
          %v2810 = vpop.f32.mrf.mxu0
          %v2811 = vadd.f32 0.0, %v2810
          %v2812 = vpop.f32.mrf.mxu0
          %v2813 = vadd.f32 0.0, %v2812
          %v2814 = vpop.f32.mrf.mxu0
          %v2815 = vadd.f32 0.0, %v2814
          %2816 = vdwg.mxu0
          %v2817 = vsub.f32 %v2081, %v2659
          %v2818 = vsub.f32 %v2083, %v2661
          %v2819 = vsub.f32 %v2085, %v2663
          %v2820 = vsub.f32 %v2087, %v2665
          %v2821 = vsub.f32 %v2091, %v2669
          %v2822 = vsub.f32 %v2093, %v2671
          %v2823 = vsub.f32 %v2095, %v2673
          %v2824 = vsub.f32 %v2097, %v2675
          %v2825 = vsub.f32 %v2101, %v2679
          %v2826 = vsub.f32 %v2103, %v2681
          %v2827 = vsub.f32 %v2105, %v2683
          %v2828 = vsub.f32 %v2107, %v2685
          %v2829 = vsub.f32 %v2111, %v2689
          %v2830 = vsub.f32 %v2113, %v2691
          %v2831 = vsub.f32 %v2115, %v2693
          %v2832 = vsub.f32 %v2117, %v2695
          %v2833 = vsub.f32 %v2121, %v2699
          %v2834 = vsub.f32 %v2123, %v2701
          %v2835 = vsub.f32 %v2125, %v2703
          %v2836 = vsub.f32 %v2127, %v2705
          %v2837 = vsub.f32 %v2131, %v2709
          %v2838 = vsub.f32 %v2133, %v2711
          %v2839 = vsub.f32 %v2135, %v2713
          %v2840 = vsub.f32 %v2137, %v2715
          %v2841 = vsub.f32 %v2141, %v2719
          %v2842 = vsub.f32 %v2143, %v2721
          %v2843 = vsub.f32 %v2145, %v2723
          %v2844 = vsub.f32 %v2147, %v2725
          %v2845 = vsub.f32 %v2151, %v2729
          %v2846 = vsub.f32 %v2153, %v2731
          %v2847 = vsub.f32 %v2155, %v2733
          %v2848 = vsub.f32 %v2157, %v2735
          %v2849 = vsub.f32 %v2161, %v2739
          %v2850 = vsub.f32 %v2163, %v2741
          %v2851 = vsub.f32 %v2165, %v2743
          %v2852 = vsub.f32 %v2167, %v2745
          %v2853 = vsub.f32 %v2171, %v2749
          %v2854 = vsub.f32 %v2173, %v2751
          %v2855 = vsub.f32 %v2175, %v2753
          %v2856 = vsub.f32 %v2177, %v2755
          %v2857 = vsub.f32 %v2181, %v2759
          %v2858 = vsub.f32 %v2183, %v2761
          %v2859 = vsub.f32 %v2185, %v2763
          %v2860 = vsub.f32 %v2187, %v2765
          %v2861 = vsub.f32 %v2191, %v2769
          %v2862 = vsub.f32 %v2193, %v2771
          %v2863 = vsub.f32 %v2195, %v2773
          %v2864 = vsub.f32 %v2197, %v2775
          %v2865 = vsub.f32 %v2201, %v2779
          %v2866 = vsub.f32 %v2203, %v2781
          %v2867 = vsub.f32 %v2205, %v2783
          %v2868 = vsub.f32 %v2207, %v2785
          %v2869 = vsub.f32 %v2211, %v2789
          %v2870 = vsub.f32 %v2213, %v2791
          %v2871 = vsub.f32 %v2215, %v2793
          %v2872 = vsub.f32 %v2217, %v2795
          %v2873 = vsub.f32 %v2221, %v2799
          %v2874 = vsub.f32 %v2223, %v2801
          %v2875 = vsub.f32 %v2225, %v2803
          %v2876 = vsub.f32 %v2227, %v2805
          %v2877 = vsub.f32 %v2231, %v2809
          %v2878 = vsub.f32 %v2233, %v2811
          %v2879 = vsub.f32 %v2235, %v2813
          %v2880 = vsub.f32 %v2237, %v2815
          %v2881 = vadd.f32 %v2081, %v2370
          %v2882 = vadd.f32 %v2083, %v2372
          %v2883 = vadd.f32 %v2085, %v2374
          %v2884 = vadd.f32 %v2087, %v2376
          %v2885 = vadd.f32 %v2091, %v2380
          %v2886 = vadd.f32 %v2093, %v2382
          %v2887 = vadd.f32 %v2095, %v2384
          %v2888 = vadd.f32 %v2097, %v2386
          %v2889 = vadd.f32 %v2101, %v2390
          %v2890 = vadd.f32 %v2103, %v2392
          %v2891 = vadd.f32 %v2105, %v2394
          %v2892 = vadd.f32 %v2107, %v2396
          %v2893 = vadd.f32 %v2111, %v2400
          %v2894 = vadd.f32 %v2113, %v2402
          %v2895 = vadd.f32 %v2115, %v2404
          %v2896 = vadd.f32 %v2117, %v2406
          %v2897 = vadd.f32 %v2121, %v2410
          %v2898 = vadd.f32 %v2123, %v2412
          %v2899 = vadd.f32 %v2125, %v2414
          %v2900 = vadd.f32 %v2127, %v2416
          %v2901 = vadd.f32 %v2131, %v2420
          %v2902 = vadd.f32 %v2133, %v2422
          %v2903 = vadd.f32 %v2135, %v2424
          %v2904 = vadd.f32 %v2137, %v2426
          %v2905 = vadd.f32 %v2141, %v2430
          %v2906 = vadd.f32 %v2143, %v2432
          %v2907 = vadd.f32 %v2145, %v2434
          %v2908 = vadd.f32 %v2147, %v2436
          %v2909 = vadd.f32 %v2151, %v2440
          %v2910 = vadd.f32 %v2153, %v2442
          %v2911 = vadd.f32 %v2155, %v2444
          %v2912 = vadd.f32 %v2157, %v2446
          %v2913 = vadd.f32 %v2161, %v2450
          %v2914 = vadd.f32 %v2163, %v2452
          %v2915 = vadd.f32 %v2165, %v2454
          %v2916 = vadd.f32 %v2167, %v2456
          %v2917 = vadd.f32 %v2171, %v2460
          %v2918 = vadd.f32 %v2173, %v2462
          %v2919 = vadd.f32 %v2175, %v2464
          %v2920 = vadd.f32 %v2177, %v2466
          %v2921 = vadd.f32 %v2181, %v2470
          %v2922 = vadd.f32 %v2183, %v2472
          %v2923 = vadd.f32 %v2185, %v2474
          %v2924 = vadd.f32 %v2187, %v2476
          %v2925 = vadd.f32 %v2191, %v2480
          %v2926 = vadd.f32 %v2193, %v2482
          %v2927 = vadd.f32 %v2195, %v2484
          %v2928 = vadd.f32 %v2197, %v2486
          %v2929 = vadd.f32 %v2201, %v2490
          %v2930 = vadd.f32 %v2203, %v2492
          %v2931 = vadd.f32 %v2205, %v2494
          %v2932 = vadd.f32 %v2207, %v2496
          %v2933 = vadd.f32 %v2211, %v2500
          %v2934 = vadd.f32 %v2213, %v2502
          %v2935 = vadd.f32 %v2215, %v2504
          %v2936 = vadd.f32 %v2217, %v2506
          %v2937 = vadd.f32 %v2221, %v2510
          %v2938 = vadd.f32 %v2223, %v2512
          %v2939 = vadd.f32 %v2225, %v2514
          %v2940 = vadd.f32 %v2227, %v2516
          %v2941 = vadd.f32 %v2231, %v2520
          %v2942 = vadd.f32 %v2233, %v2522
          %v2943 = vadd.f32 %v2235, %v2524
          %v2944 = vadd.f32 %v2237, %v2526
          %v2945 = vpack.c.bf16 %v2819, %v2817
          %v2946 = vpack.c.bf16 %v2820, %v2818
          %v2947 = vpack.c.bf16 %v2823, %v2821
          %v2948 = vpack.c.bf16 %v2824, %v2822
          %v2949 = vpack.c.bf16 %v2827, %v2825
          %v2950 = vpack.c.bf16 %v2828, %v2826
          %v2951 = vpack.c.bf16 %v2831, %v2829
          %v2952 = vpack.c.bf16 %v2832, %v2830
          %v2953 = vpack.c.bf16 %v2835, %v2833
          %v2954 = vpack.c.bf16 %v2836, %v2834
          %v2955 = vpack.c.bf16 %v2839, %v2837
          %v2956 = vpack.c.bf16 %v2840, %v2838
          %v2957 = vpack.c.bf16 %v2843, %v2841
          %v2958 = vpack.c.bf16 %v2844, %v2842
          %v2959 = vpack.c.bf16 %v2847, %v2845
          %v2960 = vpack.c.bf16 %v2848, %v2846
          %v2961 = vpack.c.bf16 %v2851, %v2849
          %v2962 = vpack.c.bf16 %v2852, %v2850
          %v2963 = vpack.c.bf16 %v2855, %v2853
          %v2964 = vpack.c.bf16 %v2856, %v2854
          %v2965 = vpack.c.bf16 %v2859, %v2857
          %v2966 = vpack.c.bf16 %v2860, %v2858
          %v2967 = vpack.c.bf16 %v2863, %v2861
          %v2968 = vpack.c.bf16 %v2864, %v2862
          %v2969 = vpack.c.bf16 %v2867, %v2865
          %v2970 = vpack.c.bf16 %v2868, %v2866
          %v2971 = vpack.c.bf16 %v2871, %v2869
          %v2972 = vpack.c.bf16 %v2872, %v2870
          %v2973 = vpack.c.bf16 %v2875, %v2873
          %v2974 = vpack.c.bf16 %v2876, %v2874
          %v2975 = vpack.c.bf16 %v2879, %v2877
          %v2976 = vpack.c.bf16 %v2880, %v2878
          %v3009 = vunpack.c.l.b16 %v2945
          %v3010 = vunpack.c.l.b16 %v2946
          %v3011 = vunpack.c.h.b16 %v2945
          %v3012 = vunpack.c.h.b16 %v2946
          %v3013 = vunpack.c.l.b16 %v2947
          %v3014 = vunpack.c.l.b16 %v2948
          %v3015 = vunpack.c.h.b16 %v2947
          %v3016 = vunpack.c.h.b16 %v2948
          %v3017 = vunpack.c.l.b16 %v2949
          %v3018 = vunpack.c.l.b16 %v2950
          %v3019 = vunpack.c.h.b16 %v2949
          %v3020 = vunpack.c.h.b16 %v2950
          %v3021 = vunpack.c.l.b16 %v2951
          %v3022 = vunpack.c.l.b16 %v2952
          %v3023 = vunpack.c.h.b16 %v2951
          %v3024 = vunpack.c.h.b16 %v2952
          %v3025 = vunpack.c.l.b16 %v2953
          %v3026 = vunpack.c.l.b16 %v2954
          %v3027 = vunpack.c.h.b16 %v2953
          %v3028 = vunpack.c.h.b16 %v2954
          %v3029 = vunpack.c.l.b16 %v2955
          %v3030 = vunpack.c.l.b16 %v2956
          %v3031 = vunpack.c.h.b16 %v2955
          %v3032 = vunpack.c.h.b16 %v2956
          %v3033 = vunpack.c.l.b16 %v2957
          %v3034 = vunpack.c.l.b16 %v2958
          %v3035 = vunpack.c.h.b16 %v2957
          %v3036 = vunpack.c.h.b16 %v2958
          %v3037 = vunpack.c.l.b16 %v2959
          %v3038 = vunpack.c.l.b16 %v2960
          %v3039 = vunpack.c.h.b16 %v2959
          %v3040 = vunpack.c.h.b16 %v2960
          %v3041 = vunpack.c.l.b16 %v2961
          %v3042 = vunpack.c.l.b16 %v2962
          %v3043 = vunpack.c.h.b16 %v2961
          %v3044 = vunpack.c.h.b16 %v2962
          %v3045 = vunpack.c.l.b16 %v2963
          %v3046 = vunpack.c.l.b16 %v2964
          %v3047 = vunpack.c.h.b16 %v2963
          %v3048 = vunpack.c.h.b16 %v2964
          %v3049 = vunpack.c.l.b16 %v2965
          %v3050 = vunpack.c.l.b16 %v2966
          %v3051 = vunpack.c.h.b16 %v2965
          %v3052 = vunpack.c.h.b16 %v2966
          %v3053 = vunpack.c.l.b16 %v2967
          %v3054 = vunpack.c.l.b16 %v2968
          %v3055 = vunpack.c.h.b16 %v2967
          %v3056 = vunpack.c.h.b16 %v2968
          %v3057 = vunpack.c.l.b16 %v2969
          %v3058 = vunpack.c.l.b16 %v2970
          %v3059 = vunpack.c.h.b16 %v2969
          %v3060 = vunpack.c.h.b16 %v2970
          %v3061 = vunpack.c.l.b16 %v2971
          %v3062 = vunpack.c.l.b16 %v2972
          %v3063 = vunpack.c.h.b16 %v2971
          %v3064 = vunpack.c.h.b16 %v2972
          %v3065 = vunpack.c.l.b16 %v2973
          %v3066 = vunpack.c.l.b16 %v2974
          %v3067 = vunpack.c.h.b16 %v2973
          %v3068 = vunpack.c.h.b16 %v2974
          %v3069 = vunpack.c.l.b16 %v2975
          %v3070 = vunpack.c.l.b16 %v2976
          %v3071 = vunpack.c.h.b16 %v2975
          %v3072 = vunpack.c.h.b16 %v2976
          %v3073 = vpack.c.b16 %v3010, %v3009
          %v3074 = vpack.c.b16 %v3012, %v3011
          %v3075 = vpack.c.b16 %v3014, %v3013
          %v3076 = vpack.c.b16 %v3016, %v3015
          %v3077 = vpack.c.b16 %v3018, %v3017
          %v3078 = vpack.c.b16 %v3020, %v3019
          %v3079 = vpack.c.b16 %v3022, %v3021
          %v3080 = vpack.c.b16 %v3024, %v3023
          %v3081 = vpack.c.b16 %v3026, %v3025
          %v3082 = vpack.c.b16 %v3028, %v3027
          %v3083 = vpack.c.b16 %v3030, %v3029
          %v3084 = vpack.c.b16 %v3032, %v3031
          %v3085 = vpack.c.b16 %v3034, %v3033
          %v3086 = vpack.c.b16 %v3036, %v3035
          %v3087 = vpack.c.b16 %v3038, %v3037
          %v3088 = vpack.c.b16 %v3040, %v3039
          %v3089 = vpack.c.b16 %v3042, %v3041
          %v3090 = vpack.c.b16 %v3044, %v3043
          %v3091 = vpack.c.b16 %v3046, %v3045
          %v3092 = vpack.c.b16 %v3048, %v3047
          %v3093 = vpack.c.b16 %v3050, %v3049
          %v3094 = vpack.c.b16 %v3052, %v3051
          %v3095 = vpack.c.b16 %v3054, %v3053
          %v3096 = vpack.c.b16 %v3056, %v3055
          %v3097 = vpack.c.b16 %v3058, %v3057
          %v3098 = vpack.c.b16 %v3060, %v3059
          %v3099 = vpack.c.b16 %v3062, %v3061
          %v3100 = vpack.c.b16 %v3064, %v3063
          %v3101 = vpack.c.b16 %v3066, %v3065
          %v3102 = vpack.c.b16 %v3068, %v3067
          %v3103 = vpack.c.b16 %v3070, %v3069
          %v3104 = vpack.c.b16 %v3072, %v3071
          %3137 = vst [vmem:[#allocation2] sm:$0xff] %v3073
          %3138 = vst [vmem:[#allocation2 + $0x8] sm:$0xff] %v3074
          %3139 = vst [vmem:[#allocation2 + $0x10] sm:$0xff] %v3075
          %3140 = vst [vmem:[#allocation2 + $0x18] sm:$0xff] %v3076
          %3141 = vst [vmem:[#allocation2 + $0x20] sm:$0xff] %v3077
          %3142 = vst [vmem:[#allocation2 + $0x28] sm:$0xff] %v3078
          %3143 = vst [vmem:[#allocation2 + $0x30] sm:$0xff] %v3079
          %3144 = vst [vmem:[#allocation2 + $0x38] sm:$0xff] %v3080
          %3145 = vst [vmem:[#allocation2 + $0x40] sm:$0xff] %v3081
          %3146 = vst [vmem:[#allocation2 + $0x48] sm:$0xff] %v3082
          %3147 = vst [vmem:[#allocation2 + $0x50] sm:$0xff] %v3083
          %3148 = vst [vmem:[#allocation2 + $0x58] sm:$0xff] %v3084
          %3149 = vst [vmem:[#allocation2 + $0x60] sm:$0xff] %v3085
          %3150 = vst [vmem:[#allocation2 + $0x68] sm:$0xff] %v3086
          %3151 = vst [vmem:[#allocation2 + $0x70] sm:$0xff] %v3087
          %3152 = vst [vmem:[#allocation2 + $0x78] sm:$0xff] %v3088
          %3153 = vst [vmem:[#allocation2 + $0x80] sm:$0xff] %v3089
          %3154 = vst [vmem:[#allocation2 + $0x88] sm:$0xff] %v3090
          %3155 = vst [vmem:[#allocation2 + $0x90] sm:$0xff] %v3091
          %3156 = vst [vmem:[#allocation2 + $0x98] sm:$0xff] %v3092
          %3157 = vst [vmem:[#allocation2 + $0xa0] sm:$0xff] %v3093
          %3158 = vst [vmem:[#allocation2 + $0xa8] sm:$0xff] %v3094
          %3159 = vst [vmem:[#allocation2 + $0xb0] sm:$0xff] %v3095
          %3160 = vst [vmem:[#allocation2 + $0xb8] sm:$0xff] %v3096
          %3161 = vst [vmem:[#allocation2 + $0xc0] sm:$0xff] %v3097
          %3162 = vst [vmem:[#allocation2 + $0xc8] sm:$0xff] %v3098
          %3163 = vst [vmem:[#allocation2 + $0xd0] sm:$0xff] %v3099
          %3164 = vst [vmem:[#allocation2 + $0xd8] sm:$0xff] %v3100
          %3165 = vst [vmem:[#allocation2 + $0xe0] sm:$0xff] %v3101
          %3166 = vst [vmem:[#allocation2 + $0xe8] sm:$0xff] %v3102
          %3167 = vst [vmem:[#allocation2 + $0xf0] sm:$0xff] %v3103
          %3168 = vst [vmem:[#allocation2 + $0xf8] sm:$0xff] %v3104
          %v3169 = vpack.c.bf16 %v2883, %v2881
          %v3170 = vpack.c.bf16 %v2884, %v2882
          %v3171 = vpack.c.bf16 %v2887, %v2885
          %v3172 = vpack.c.bf16 %v2888, %v2886
          %v3173 = vpack.c.bf16 %v2891, %v2889
          %v3174 = vpack.c.bf16 %v2892, %v2890
          %v3175 = vpack.c.bf16 %v2895, %v2893
          %v3176 = vpack.c.bf16 %v2896, %v2894
          %v3177 = vpack.c.bf16 %v2899, %v2897
          %v3178 = vpack.c.bf16 %v2900, %v2898
          %v3179 = vpack.c.bf16 %v2903, %v2901
          %v3180 = vpack.c.bf16 %v2904, %v2902
          %v3181 = vpack.c.bf16 %v2907, %v2905
          %v3182 = vpack.c.bf16 %v2908, %v2906
          %v3183 = vpack.c.bf16 %v2911, %v2909
          %v3184 = vpack.c.bf16 %v2912, %v2910
          %v3185 = vpack.c.bf16 %v2915, %v2913
          %v3186 = vpack.c.bf16 %v2916, %v2914
          %v3187 = vpack.c.bf16 %v2919, %v2917
          %v3188 = vpack.c.bf16 %v2920, %v2918
          %v3189 = vpack.c.bf16 %v2923, %v2921
          %v3190 = vpack.c.bf16 %v2924, %v2922
          %v3191 = vpack.c.bf16 %v2927, %v2925
          %v3192 = vpack.c.bf16 %v2928, %v2926
          %v3193 = vpack.c.bf16 %v2931, %v2929
          %v3194 = vpack.c.bf16 %v2932, %v2930
          %v3195 = vpack.c.bf16 %v2935, %v2933
          %v3196 = vpack.c.bf16 %v2936, %v2934
          %v3197 = vpack.c.bf16 %v2939, %v2937
          %v3198 = vpack.c.bf16 %v2940, %v2938
          %v3199 = vpack.c.bf16 %v2943, %v2941
          %v3200 = vpack.c.bf16 %v2944, %v2942
          %v3233 = vunpack.c.l.b16 %v3169
          %v3234 = vunpack.c.l.b16 %v3170
          %v3235 = vunpack.c.h.b16 %v3169
          %v3236 = vunpack.c.h.b16 %v3170
          %v3237 = vunpack.c.l.b16 %v3171
          %v3238 = vunpack.c.l.b16 %v3172
          %v3239 = vunpack.c.h.b16 %v3171
          %v3240 = vunpack.c.h.b16 %v3172
          %v3241 = vunpack.c.l.b16 %v3173
          %v3242 = vunpack.c.l.b16 %v3174
          %v3243 = vunpack.c.h.b16 %v3173
          %v3244 = vunpack.c.h.b16 %v3174
          %v3245 = vunpack.c.l.b16 %v3175
          %v3246 = vunpack.c.l.b16 %v3176
          %v3247 = vunpack.c.h.b16 %v3175
          %v3248 = vunpack.c.h.b16 %v3176
          %v3249 = vunpack.c.l.b16 %v3177
          %v3250 = vunpack.c.l.b16 %v3178
          %v3251 = vunpack.c.h.b16 %v3177
          %v3252 = vunpack.c.h.b16 %v3178
          %v3253 = vunpack.c.l.b16 %v3179
          %v3254 = vunpack.c.l.b16 %v3180
          %v3255 = vunpack.c.h.b16 %v3179
          %v3256 = vunpack.c.h.b16 %v3180
          %v3257 = vunpack.c.l.b16 %v3181
          %v3258 = vunpack.c.l.b16 %v3182
          %v3259 = vunpack.c.h.b16 %v3181
          %v3260 = vunpack.c.h.b16 %v3182
          %v3261 = vunpack.c.l.b16 %v3183
          %v3262 = vunpack.c.l.b16 %v3184
          %v3263 = vunpack.c.h.b16 %v3183
          %v3264 = vunpack.c.h.b16 %v3184
          %v3265 = vunpack.c.l.b16 %v3185
          %v3266 = vunpack.c.l.b16 %v3186
          %v3267 = vunpack.c.h.b16 %v3185
          %v3268 = vunpack.c.h.b16 %v3186
          %v3269 = vunpack.c.l.b16 %v3187
          %v3270 = vunpack.c.l.b16 %v3188
          %v3271 = vunpack.c.h.b16 %v3187
          %v3272 = vunpack.c.h.b16 %v3188
          %v3273 = vunpack.c.l.b16 %v3189
          %v3274 = vunpack.c.l.b16 %v3190
          %v3275 = vunpack.c.h.b16 %v3189
          %v3276 = vunpack.c.h.b16 %v3190
          %v3277 = vunpack.c.l.b16 %v3191
          %v3278 = vunpack.c.l.b16 %v3192
          %v3279 = vunpack.c.h.b16 %v3191
          %v3280 = vunpack.c.h.b16 %v3192
          %v3281 = vunpack.c.l.b16 %v3193
          %v3282 = vunpack.c.l.b16 %v3194
          %v3283 = vunpack.c.h.b16 %v3193
          %v3284 = vunpack.c.h.b16 %v3194
          %v3285 = vunpack.c.l.b16 %v3195
          %v3286 = vunpack.c.l.b16 %v3196
          %v3287 = vunpack.c.h.b16 %v3195
          %v3288 = vunpack.c.h.b16 %v3196
          %v3289 = vunpack.c.l.b16 %v3197
          %v3290 = vunpack.c.l.b16 %v3198
          %v3291 = vunpack.c.h.b16 %v3197
          %v3292 = vunpack.c.h.b16 %v3198
          %v3293 = vunpack.c.l.b16 %v3199
          %v3294 = vunpack.c.l.b16 %v3200
          %v3295 = vunpack.c.h.b16 %v3199
          %v3296 = vunpack.c.h.b16 %v3200
          %v3297 = vpack.c.b16 %v3234, %v3233
          %v3298 = vpack.c.b16 %v3236, %v3235
          %v3299 = vpack.c.b16 %v3238, %v3237
          %v3300 = vpack.c.b16 %v3240, %v3239
          %v3301 = vpack.c.b16 %v3242, %v3241
          %v3302 = vpack.c.b16 %v3244, %v3243
          %v3303 = vpack.c.b16 %v3246, %v3245
          %v3304 = vpack.c.b16 %v3248, %v3247
          %v3305 = vpack.c.b16 %v3250, %v3249
          %v3306 = vpack.c.b16 %v3252, %v3251
          %v3307 = vpack.c.b16 %v3254, %v3253
          %v3308 = vpack.c.b16 %v3256, %v3255
          %v3309 = vpack.c.b16 %v3258, %v3257
          %v3310 = vpack.c.b16 %v3260, %v3259
          %v3311 = vpack.c.b16 %v3262, %v3261
          %v3312 = vpack.c.b16 %v3264, %v3263
          %v3313 = vpack.c.b16 %v3266, %v3265
          %v3314 = vpack.c.b16 %v3268, %v3267
          %v3315 = vpack.c.b16 %v3270, %v3269
          %v3316 = vpack.c.b16 %v3272, %v3271
          %v3317 = vpack.c.b16 %v3274, %v3273
          %v3318 = vpack.c.b16 %v3276, %v3275
          %v3319 = vpack.c.b16 %v3278, %v3277
          %v3320 = vpack.c.b16 %v3280, %v3279
          %v3321 = vpack.c.b16 %v3282, %v3281
          %v3322 = vpack.c.b16 %v3284, %v3283
          %v3323 = vpack.c.b16 %v3286, %v3285
          %v3324 = vpack.c.b16 %v3288, %v3287
          %v3325 = vpack.c.b16 %v3290, %v3289
          %v3326 = vpack.c.b16 %v3292, %v3291
          %v3327 = vpack.c.b16 %v3294, %v3293
          %v3328 = vpack.c.b16 %v3296, %v3295
          %3361 = vst [vmem:[#allocation3] sm:$0xff] %v3297
          %3362 = vst [vmem:[#allocation3 + $0x8] sm:$0xff] %v3298
          %3363 = vst [vmem:[#allocation3 + $0x10] sm:$0xff] %v3299
          %3364 = vst [vmem:[#allocation3 + $0x18] sm:$0xff] %v3300
          %3365 = vst [vmem:[#allocation3 + $0x20] sm:$0xff] %v3301
          %3366 = vst [vmem:[#allocation3 + $0x28] sm:$0xff] %v3302
          %3367 = vst [vmem:[#allocation3 + $0x30] sm:$0xff] %v3303
          %3368 = vst [vmem:[#allocation3 + $0x38] sm:$0xff] %v3304
          %3369 = vst [vmem:[#allocation3 + $0x40] sm:$0xff] %v3305
          %3370 = vst [vmem:[#allocation3 + $0x48] sm:$0xff] %v3306
          %3371 = vst [vmem:[#allocation3 + $0x50] sm:$0xff] %v3307
          %3372 = vst [vmem:[#allocation3 + $0x58] sm:$0xff] %v3308
          %3373 = vst [vmem:[#allocation3 + $0x60] sm:$0xff] %v3309
          %3374 = vst [vmem:[#allocation3 + $0x68] sm:$0xff] %v3310
          %3375 = vst [vmem:[#allocation3 + $0x70] sm:$0xff] %v3311
          %3376 = vst [vmem:[#allocation3 + $0x78] sm:$0xff] %v3312
          %3377 = vst [vmem:[#allocation3 + $0x80] sm:$0xff] %v3313
          %3378 = vst [vmem:[#allocation3 + $0x88] sm:$0xff] %v3314
          %3379 = vst [vmem:[#allocation3 + $0x90] sm:$0xff] %v3315
          %3380 = vst [vmem:[#allocation3 + $0x98] sm:$0xff] %v3316
          %3381 = vst [vmem:[#allocation3 + $0xa0] sm:$0xff] %v3317
          %3382 = vst [vmem:[#allocation3 + $0xa8] sm:$0xff] %v3318
          %3383 = vst [vmem:[#allocation3 + $0xb0] sm:$0xff] %v3319
          %3384 = vst [vmem:[#allocation3 + $0xb8] sm:$0xff] %v3320
          %3385 = vst [vmem:[#allocation3 + $0xc0] sm:$0xff] %v3321
          %3386 = vst [vmem:[#allocation3 + $0xc8] sm:$0xff] %v3322
          %3387 = vst [vmem:[#allocation3 + $0xd0] sm:$0xff] %v3323
          %3388 = vst [vmem:[#allocation3 + $0xd8] sm:$0xff] %v3324
          %3389 = vst [vmem:[#allocation3 + $0xe0] sm:$0xff] %v3325
          %3390 = vst [vmem:[#allocation3 + $0xe8] sm:$0xff] %v3326
          %3391 = vst [vmem:[#allocation3 + $0xf0] sm:$0xff] %v3327
          %3392 = vst [vmem:[#allocation3 + $0xf8] sm:$0xff] %v3328
        $region120: #{tpu_custom_call.1} parent=67 // pred_fallthru
          _
        // Predicated region
        $region121: #{tpu_custom_call.1} parent=67 // pred_check
          %p3393 = pneg %p742
        $region122: #{tpu_custom_call.1} parent=67 // pred_check_branch
          %3395 = sbr.rel (%p3393) target = $region124
        $region123: #{tpu_custom_call.1} parent=67 // pred_region
          %3396 = vst [vmem:[#allocation4] sm:$0xff] 0.0
          %3397 = vst [vmem:[#allocation4 + $0x8] sm:$0xff] 0.0
          %3398 = vst [vmem:[#allocation4 + $0x10] sm:$0xff] 0.0
          %3399 = vst [vmem:[#allocation4 + $0x18] sm:$0xff] 0.0
          %3400 = vst [vmem:[#allocation4 + $0x20] sm:$0xff] 0.0
          %3401 = vst [vmem:[#allocation4 + $0x28] sm:$0xff] 0.0
          %3402 = vst [vmem:[#allocation4 + $0x30] sm:$0xff] 0.0
          %3403 = vst [vmem:[#allocation4 + $0x38] sm:$0xff] 0.0
          %3404 = vst [vmem:[#allocation4 + $0x40] sm:$0xff] 0.0
          %3405 = vst [vmem:[#allocation4 + $0x48] sm:$0xff] 0.0
          %3406 = vst [vmem:[#allocation4 + $0x50] sm:$0xff] 0.0
          %3407 = vst [vmem:[#allocation4 + $0x58] sm:$0xff] 0.0
          %3408 = vst [vmem:[#allocation4 + $0x60] sm:$0xff] 0.0
          %3409 = vst [vmem:[#allocation4 + $0x68] sm:$0xff] 0.0
          %3410 = vst [vmem:[#allocation4 + $0x70] sm:$0xff] 0.0
          %3411 = vst [vmem:[#allocation4 + $0x78] sm:$0xff] 0.0
          %3412 = vst [vmem:[#allocation4 + $0x80] sm:$0xff] 0.0
          %3413 = vst [vmem:[#allocation4 + $0x88] sm:$0xff] 0.0
          %3414 = vst [vmem:[#allocation4 + $0x90] sm:$0xff] 0.0
          %3415 = vst [vmem:[#allocation4 + $0x98] sm:$0xff] 0.0
          %3416 = vst [vmem:[#allocation4 + $0xa0] sm:$0xff] 0.0
          %3417 = vst [vmem:[#allocation4 + $0xa8] sm:$0xff] 0.0
          %3418 = vst [vmem:[#allocation4 + $0xb0] sm:$0xff] 0.0
          %3419 = vst [vmem:[#allocation4 + $0xb8] sm:$0xff] 0.0
          %3420 = vst [vmem:[#allocation4 + $0xc0] sm:$0xff] 0.0
          %3421 = vst [vmem:[#allocation4 + $0xc8] sm:$0xff] 0.0
          %3422 = vst [vmem:[#allocation4 + $0xd0] sm:$0xff] 0.0
          %3423 = vst [vmem:[#allocation4 + $0xd8] sm:$0xff] 0.0
          %3424 = vst [vmem:[#allocation4 + $0xe0] sm:$0xff] 0.0
          %3425 = vst [vmem:[#allocation4 + $0xe8] sm:$0xff] 0.0
          %3426 = vst [vmem:[#allocation4 + $0xf0] sm:$0xff] 0.0
          %3427 = vst [vmem:[#allocation4 + $0xf8] sm:$0xff] 0.0
          %3428 = vst [vmem:[#allocation5] sm:$0xff] 0.0
          %3429 = vst [vmem:[#allocation5 + $0x8] sm:$0xff] 0.0
          %3430 = vst [vmem:[#allocation5 + $0x10] sm:$0xff] 0.0
          %3431 = vst [vmem:[#allocation5 + $0x18] sm:$0xff] 0.0
          %3432 = vst [vmem:[#allocation5 + $0x20] sm:$0xff] 0.0
          %3433 = vst [vmem:[#allocation5 + $0x28] sm:$0xff] 0.0
          %3434 = vst [vmem:[#allocation5 + $0x30] sm:$0xff] 0.0
          %3435 = vst [vmem:[#allocation5 + $0x38] sm:$0xff] 0.0
          %3436 = vst [vmem:[#allocation5 + $0x40] sm:$0xff] 0.0
          %3437 = vst [vmem:[#allocation5 + $0x48] sm:$0xff] 0.0
          %3438 = vst [vmem:[#allocation5 + $0x50] sm:$0xff] 0.0
          %3439 = vst [vmem:[#allocation5 + $0x58] sm:$0xff] 0.0
          %3440 = vst [vmem:[#allocation5 + $0x60] sm:$0xff] 0.0
          %3441 = vst [vmem:[#allocation5 + $0x68] sm:$0xff] 0.0
          %3442 = vst [vmem:[#allocation5 + $0x70] sm:$0xff] 0.0
          %3443 = vst [vmem:[#allocation5 + $0x78] sm:$0xff] 0.0
          %3444 = vst [vmem:[#allocation5 + $0x80] sm:$0xff] 0.0
          %3445 = vst [vmem:[#allocation5 + $0x88] sm:$0xff] 0.0
          %3446 = vst [vmem:[#allocation5 + $0x90] sm:$0xff] 0.0
          %3447 = vst [vmem:[#allocation5 + $0x98] sm:$0xff] 0.0
          %3448 = vst [vmem:[#allocation5 + $0xa0] sm:$0xff] 0.0
          %3449 = vst [vmem:[#allocation5 + $0xa8] sm:$0xff] 0.0
          %3450 = vst [vmem:[#allocation5 + $0xb0] sm:$0xff] 0.0
          %3451 = vst [vmem:[#allocation5 + $0xb8] sm:$0xff] 0.0
          %3452 = vst [vmem:[#allocation5 + $0xc0] sm:$0xff] 0.0
          %3453 = vst [vmem:[#allocation5 + $0xc8] sm:$0xff] 0.0
          %3454 = vst [vmem:[#allocation5 + $0xd0] sm:$0xff] 0.0
          %3455 = vst [vmem:[#allocation5 + $0xd8] sm:$0xff] 0.0
          %3456 = vst [vmem:[#allocation5 + $0xe0] sm:$0xff] 0.0
          %3457 = vst [vmem:[#allocation5 + $0xe8] sm:$0xff] 0.0
          %3458 = vst [vmem:[#allocation5 + $0xf0] sm:$0xff] 0.0
          %3459 = vst [vmem:[#allocation5 + $0xf8] sm:$0xff] 0.0
        $region124: #{tpu_custom_call.1} parent=67 // pred_fallthru
          _
        %s3460 = smul.u32 %s44, 128
        %s3461 = sshra.s32 %s3460, 3
        %s3462 = sand.u32 %s3460, 7
        %s3463 = smul.u32 %s3461, 2
        %s3464 = smul.addr %s3463, 4
        %s3465 = scalar_lea.vmem [#allocation2], %s3464
        %v3466 = vld [vmem:[%s3465] sm:$0xff]
        %v3467 = vld [vmem:[%s3465 + $0x8] sm:$0xff]
        %v3468 = vld [vmem:[%s3465 + $0x10] sm:$0xff]
        %v3469 = vld [vmem:[%s3465 + $0x18] sm:$0xff]
        %v3470 = vld [vmem:[%s3465 + $0x20] sm:$0xff]
        %v3471 = vld [vmem:[%s3465 + $0x28] sm:$0xff]
        %v3472 = vld [vmem:[%s3465 + $0x30] sm:$0xff]
        %v3473 = vld [vmem:[%s3465 + $0x38] sm:$0xff]
        %v3474 = vld [vmem:[%s3465 + $0x40] sm:$0xff]
        %v3475 = vld [vmem:[%s3465 + $0x48] sm:$0xff]
        %v3476 = vld [vmem:[%s3465 + $0x50] sm:$0xff]
        %v3477 = vld [vmem:[%s3465 + $0x58] sm:$0xff]
        %v3478 = vld [vmem:[%s3465 + $0x60] sm:$0xff]
        %v3479 = vld [vmem:[%s3465 + $0x68] sm:$0xff]
        %v3480 = vld [vmem:[%s3465 + $0x70] sm:$0xff]
        %v3481 = vld [vmem:[%s3465 + $0x78] sm:$0xff]
        %v3482 = vunpack.c.l.bf16 %v3466
        %v3483 = vunpack.c.h.bf16 %v3466
        %v3484 = vunpack.c.l.bf16 %v3467
        %v3485 = vunpack.c.h.bf16 %v3467
        %v3486 = vunpack.c.l.bf16 %v3468
        %v3487 = vunpack.c.h.bf16 %v3468
        %v3488 = vunpack.c.l.bf16 %v3469
        %v3489 = vunpack.c.h.bf16 %v3469
        %v3490 = vunpack.c.l.bf16 %v3470
        %v3491 = vunpack.c.h.bf16 %v3470
        %v3492 = vunpack.c.l.bf16 %v3471
        %v3493 = vunpack.c.h.bf16 %v3471
        %v3494 = vunpack.c.l.bf16 %v3472
        %v3495 = vunpack.c.h.bf16 %v3472
        %v3496 = vunpack.c.l.bf16 %v3473
        %v3497 = vunpack.c.h.bf16 %v3473
        %v3498 = vunpack.c.l.bf16 %v3474
        %v3499 = vunpack.c.h.bf16 %v3474
        %v3500 = vunpack.c.l.bf16 %v3475
        %v3501 = vunpack.c.h.bf16 %v3475
        %v3502 = vunpack.c.l.bf16 %v3476
        %v3503 = vunpack.c.h.bf16 %v3476
        %v3504 = vunpack.c.l.bf16 %v3477
        %v3505 = vunpack.c.h.bf16 %v3477
        %v3506 = vunpack.c.l.bf16 %v3478
        %v3507 = vunpack.c.h.bf16 %v3478
        %v3508 = vunpack.c.l.bf16 %v3479
        %v3509 = vunpack.c.h.bf16 %v3479
        %v3510 = vunpack.c.l.bf16 %v3480
        %v3511 = vunpack.c.h.bf16 %v3480
        %v3512 = vunpack.c.l.bf16 %v3481
        %v3513 = vunpack.c.h.bf16 %v3481
        %s3514 = smul.addr %s3463, 4
        %s3515 = scalar_lea.vmem [#allocation3], %s3514
        %v3516 = vld [vmem:[%s3515] sm:$0xff]
        %v3517 = vld [vmem:[%s3515 + $0x8] sm:$0xff]
        %v3518 = vld [vmem:[%s3515 + $0x10] sm:$0xff]
        %v3519 = vld [vmem:[%s3515 + $0x18] sm:$0xff]
        %v3520 = vld [vmem:[%s3515 + $0x20] sm:$0xff]
        %v3521 = vld [vmem:[%s3515 + $0x28] sm:$0xff]
        %v3522 = vld [vmem:[%s3515 + $0x30] sm:$0xff]
        %v3523 = vld [vmem:[%s3515 + $0x38] sm:$0xff]
        %v3524 = vld [vmem:[%s3515 + $0x40] sm:$0xff]
        %v3525 = vld [vmem:[%s3515 + $0x48] sm:$0xff]
        %v3526 = vld [vmem:[%s3515 + $0x50] sm:$0xff]
        %v3527 = vld [vmem:[%s3515 + $0x58] sm:$0xff]
        %v3528 = vld [vmem:[%s3515 + $0x60] sm:$0xff]
        %v3529 = vld [vmem:[%s3515 + $0x68] sm:$0xff]
        %v3530 = vld [vmem:[%s3515 + $0x70] sm:$0xff]
        %v3531 = vld [vmem:[%s3515 + $0x78] sm:$0xff]
        %v3532 = vunpack.c.l.bf16 %v3516
        %v3533 = vunpack.c.h.bf16 %v3516
        %v3534 = vunpack.c.l.bf16 %v3517
        %v3535 = vunpack.c.h.bf16 %v3517
        %v3536 = vunpack.c.l.bf16 %v3518
        %v3537 = vunpack.c.h.bf16 %v3518
        %v3538 = vunpack.c.l.bf16 %v3519
        %v3539 = vunpack.c.h.bf16 %v3519
        %v3540 = vunpack.c.l.bf16 %v3520
        %v3541 = vunpack.c.h.bf16 %v3520
        %v3542 = vunpack.c.l.bf16 %v3521
        %v3543 = vunpack.c.h.bf16 %v3521
        %v3544 = vunpack.c.l.bf16 %v3522
        %v3545 = vunpack.c.h.bf16 %v3522
        %v3546 = vunpack.c.l.bf16 %v3523
        %v3547 = vunpack.c.h.bf16 %v3523
        %v3548 = vunpack.c.l.bf16 %v3524
        %v3549 = vunpack.c.h.bf16 %v3524
        %v3550 = vunpack.c.l.bf16 %v3525
        %v3551 = vunpack.c.h.bf16 %v3525
        %v3552 = vunpack.c.l.bf16 %v3526
        %v3553 = vunpack.c.h.bf16 %v3526
        %v3554 = vunpack.c.l.bf16 %v3527
        %v3555 = vunpack.c.h.bf16 %v3527
        %v3556 = vunpack.c.l.bf16 %v3528
        %v3557 = vunpack.c.h.bf16 %v3528
        %v3558 = vunpack.c.l.bf16 %v3529
        %v3559 = vunpack.c.h.bf16 %v3529
        %v3560 = vunpack.c.l.bf16 %v3530
        %v3561 = vunpack.c.h.bf16 %v3530
        %v3562 = vunpack.c.l.bf16 %v3531
        %v3563 = vunpack.c.h.bf16 %v3531
        %v3564 = vld [vmem:[%s663] sm:$0xff]
        %v3565 = vld [vmem:[%s663 + $0x8] sm:$0xff]
        %v3566 = vld [vmem:[%s663 + $0x10] sm:$0xff]
        %v3567 = vld [vmem:[%s663 + $0x18] sm:$0xff]
        %v3568 = vld [vmem:[%s663 + $0x20] sm:$0xff]
        %v3569 = vld [vmem:[%s663 + $0x28] sm:$0xff]
        %v3570 = vld [vmem:[%s663 + $0x30] sm:$0xff]
        %v3571 = vld [vmem:[%s663 + $0x38] sm:$0xff]
        %v3572 = vld [vmem:[%s663 + $0x40] sm:$0xff]
        %v3573 = vld [vmem:[%s663 + $0x48] sm:$0xff]
        %v3574 = vld [vmem:[%s663 + $0x50] sm:$0xff]
        %v3575 = vld [vmem:[%s663 + $0x58] sm:$0xff]
        %v3576 = vld [vmem:[%s663 + $0x60] sm:$0xff]
        %v3577 = vld [vmem:[%s663 + $0x68] sm:$0xff]
        %v3578 = vld [vmem:[%s663 + $0x70] sm:$0xff]
        %v3579 = vld [vmem:[%s663 + $0x78] sm:$0xff]
        %v3580 = vunpack.c.l.bf16 %v3564
        %v3581 = vunpack.c.h.bf16 %v3564
        %v3582 = vunpack.c.l.bf16 %v3565
        %v3583 = vunpack.c.h.bf16 %v3565
        %v3584 = vunpack.c.l.bf16 %v3566
        %v3585 = vunpack.c.h.bf16 %v3566
        %v3586 = vunpack.c.l.bf16 %v3567
        %v3587 = vunpack.c.h.bf16 %v3567
        %v3588 = vunpack.c.l.bf16 %v3568
        %v3589 = vunpack.c.h.bf16 %v3568
        %v3590 = vunpack.c.l.bf16 %v3569
        %v3591 = vunpack.c.h.bf16 %v3569
        %v3592 = vunpack.c.l.bf16 %v3570
        %v3593 = vunpack.c.h.bf16 %v3570
        %v3594 = vunpack.c.l.bf16 %v3571
        %v3595 = vunpack.c.h.bf16 %v3571
        %v3596 = vunpack.c.l.bf16 %v3572
        %v3597 = vunpack.c.h.bf16 %v3572
        %v3598 = vunpack.c.l.bf16 %v3573
        %v3599 = vunpack.c.h.bf16 %v3573
        %v3600 = vunpack.c.l.bf16 %v3574
        %v3601 = vunpack.c.h.bf16 %v3574
        %v3602 = vunpack.c.l.bf16 %v3575
        %v3603 = vunpack.c.h.bf16 %v3575
        %v3604 = vunpack.c.l.bf16 %v3576
        %v3605 = vunpack.c.h.bf16 %v3576
        %v3606 = vunpack.c.l.bf16 %v3577
        %v3607 = vunpack.c.h.bf16 %v3577
        %v3608 = vunpack.c.l.bf16 %v3578
        %v3609 = vunpack.c.h.bf16 %v3578
        %v3610 = vunpack.c.l.bf16 %v3579
        %v3611 = vunpack.c.h.bf16 %v3579
        %v3612 = vld [vmem:[%s672] sm:$0xff]
        %v3613 = vld [vmem:[%s672 + $0x8] sm:$0xff]
        %v3614 = vld [vmem:[%s672 + $0x10] sm:$0xff]
        %v3615 = vld [vmem:[%s672 + $0x18] sm:$0xff]
        %v3616 = vld [vmem:[%s672 + $0x20] sm:$0xff]
        %v3617 = vld [vmem:[%s672 + $0x28] sm:$0xff]
        %v3618 = vld [vmem:[%s672 + $0x30] sm:$0xff]
        %v3619 = vld [vmem:[%s672 + $0x38] sm:$0xff]
        %v3620 = vld [vmem:[%s672 + $0x40] sm:$0xff]
        %v3621 = vld [vmem:[%s672 + $0x48] sm:$0xff]
        %v3622 = vld [vmem:[%s672 + $0x50] sm:$0xff]
        %v3623 = vld [vmem:[%s672 + $0x58] sm:$0xff]
        %v3624 = vld [vmem:[%s672 + $0x60] sm:$0xff]
        %v3625 = vld [vmem:[%s672 + $0x68] sm:$0xff]
        %v3626 = vld [vmem:[%s672 + $0x70] sm:$0xff]
        %v3627 = vld [vmem:[%s672 + $0x78] sm:$0xff]
        %v3628 = vunpack.c.l.bf16 %v3612
        %v3629 = vunpack.c.h.bf16 %v3612
        %v3630 = vunpack.c.l.bf16 %v3613
        %v3631 = vunpack.c.h.bf16 %v3613
        %v3632 = vunpack.c.l.bf16 %v3614
        %v3633 = vunpack.c.h.bf16 %v3614
        %v3634 = vunpack.c.l.bf16 %v3615
        %v3635 = vunpack.c.h.bf16 %v3615
        %v3636 = vunpack.c.l.bf16 %v3616
        %v3637 = vunpack.c.h.bf16 %v3616
        %v3638 = vunpack.c.l.bf16 %v3617
        %v3639 = vunpack.c.h.bf16 %v3617
        %v3640 = vunpack.c.l.bf16 %v3618
        %v3641 = vunpack.c.h.bf16 %v3618
        %v3642 = vunpack.c.l.bf16 %v3619
        %v3643 = vunpack.c.h.bf16 %v3619
        %v3644 = vunpack.c.l.bf16 %v3620
        %v3645 = vunpack.c.h.bf16 %v3620
        %v3646 = vunpack.c.l.bf16 %v3621
        %v3647 = vunpack.c.h.bf16 %v3621
        %v3648 = vunpack.c.l.bf16 %v3622
        %v3649 = vunpack.c.h.bf16 %v3622
        %v3650 = vunpack.c.l.bf16 %v3623
        %v3651 = vunpack.c.h.bf16 %v3623
        %v3652 = vunpack.c.l.bf16 %v3624
        %v3653 = vunpack.c.h.bf16 %v3624
        %v3654 = vunpack.c.l.bf16 %v3625
        %v3655 = vunpack.c.h.bf16 %v3625
        %v3656 = vunpack.c.l.bf16 %v3626
        %v3657 = vunpack.c.h.bf16 %v3626
        %v3658 = vunpack.c.l.bf16 %v3627
        %v3659 = vunpack.c.h.bf16 %v3627
        %v3660 = vmul.f32 %v3482, %v3580
        %v3661 = vmul.f32 %v3483, %v3581
        %v3662 = vmul.f32 %v3484, %v3582
        %v3663 = vmul.f32 %v3485, %v3583
        %v3664 = vmul.f32 %v3486, %v3584
        %v3665 = vmul.f32 %v3487, %v3585
        %v3666 = vmul.f32 %v3488, %v3586
        %v3667 = vmul.f32 %v3489, %v3587
        %v3668 = vmul.f32 %v3490, %v3588
        %v3669 = vmul.f32 %v3491, %v3589
        %v3670 = vmul.f32 %v3492, %v3590
        %v3671 = vmul.f32 %v3493, %v3591
        %v3672 = vmul.f32 %v3494, %v3592
        %v3673 = vmul.f32 %v3495, %v3593
        %v3674 = vmul.f32 %v3496, %v3594
        %v3675 = vmul.f32 %v3497, %v3595
        %v3676 = vmul.f32 %v3498, %v3596
        %v3677 = vmul.f32 %v3499, %v3597
        %v3678 = vmul.f32 %v3500, %v3598
        %v3679 = vmul.f32 %v3501, %v3599
        %v3680 = vmul.f32 %v3502, %v3600
        %v3681 = vmul.f32 %v3503, %v3601
        %v3682 = vmul.f32 %v3504, %v3602
        %v3683 = vmul.f32 %v3505, %v3603
        %v3684 = vmul.f32 %v3506, %v3604
        %v3685 = vmul.f32 %v3507, %v3605
        %v3686 = vmul.f32 %v3508, %v3606
        %v3687 = vmul.f32 %v3509, %v3607
        %v3688 = vmul.f32 %v3510, %v3608
        %v3689 = vmul.f32 %v3511, %v3609
        %v3690 = vmul.f32 %v3512, %v3610
        %v3691 = vmul.f32 %v3513, %v3611
        %v3692 = vmul.f32 %v3532, %v3628
        %v3693 = vmul.f32 %v3533, %v3629
        %v3694 = vmul.f32 %v3534, %v3630
        %v3695 = vmul.f32 %v3535, %v3631
        %v3696 = vmul.f32 %v3536, %v3632
        %v3697 = vmul.f32 %v3537, %v3633
        %v3698 = vmul.f32 %v3538, %v3634
        %v3699 = vmul.f32 %v3539, %v3635
        %v3700 = vmul.f32 %v3540, %v3636
        %v3701 = vmul.f32 %v3541, %v3637
        %v3702 = vmul.f32 %v3542, %v3638
        %v3703 = vmul.f32 %v3543, %v3639
        %v3704 = vmul.f32 %v3544, %v3640
        %v3705 = vmul.f32 %v3545, %v3641
        %v3706 = vmul.f32 %v3546, %v3642
        %v3707 = vmul.f32 %v3547, %v3643
        %v3708 = vmul.f32 %v3548, %v3644
        %v3709 = vmul.f32 %v3549, %v3645
        %v3710 = vmul.f32 %v3550, %v3646
        %v3711 = vmul.f32 %v3551, %v3647
        %v3712 = vmul.f32 %v3552, %v3648
        %v3713 = vmul.f32 %v3553, %v3649
        %v3714 = vmul.f32 %v3554, %v3650
        %v3715 = vmul.f32 %v3555, %v3651
        %v3716 = vmul.f32 %v3556, %v3652
        %v3717 = vmul.f32 %v3557, %v3653
        %v3718 = vmul.f32 %v3558, %v3654
        %v3719 = vmul.f32 %v3559, %v3655
        %v3720 = vmul.f32 %v3560, %v3656
        %v3721 = vmul.f32 %v3561, %v3657
        %v3722 = vmul.f32 %v3562, %v3658
        %v3723 = vmul.f32 %v3563, %v3659
        %v3724 = vsub.f32 %v3660, %v3692
        %v3725 = vsub.f32 %v3661, %v3693
        %v3726 = vsub.f32 %v3662, %v3694
        %v3727 = vsub.f32 %v3663, %v3695
        %v3728 = vsub.f32 %v3664, %v3696
        %v3729 = vsub.f32 %v3665, %v3697
        %v3730 = vsub.f32 %v3666, %v3698
        %v3731 = vsub.f32 %v3667, %v3699
        %v3732 = vsub.f32 %v3668, %v3700
        %v3733 = vsub.f32 %v3669, %v3701
        %v3734 = vsub.f32 %v3670, %v3702
        %v3735 = vsub.f32 %v3671, %v3703
        %v3736 = vsub.f32 %v3672, %v3704
        %v3737 = vsub.f32 %v3673, %v3705
        %v3738 = vsub.f32 %v3674, %v3706
        %v3739 = vsub.f32 %v3675, %v3707
        %v3740 = vsub.f32 %v3676, %v3708
        %v3741 = vsub.f32 %v3677, %v3709
        %v3742 = vsub.f32 %v3678, %v3710
        %v3743 = vsub.f32 %v3679, %v3711
        %v3744 = vsub.f32 %v3680, %v3712
        %v3745 = vsub.f32 %v3681, %v3713
        %v3746 = vsub.f32 %v3682, %v3714
        %v3747 = vsub.f32 %v3683, %v3715
        %v3748 = vsub.f32 %v3684, %v3716
        %v3749 = vsub.f32 %v3685, %v3717
        %v3750 = vsub.f32 %v3686, %v3718
        %v3751 = vsub.f32 %v3687, %v3719
        %v3752 = vsub.f32 %v3688, %v3720
        %v3753 = vsub.f32 %v3689, %v3721
        %v3754 = vsub.f32 %v3690, %v3722
        %v3755 = vsub.f32 %v3691, %v3723
        %v3756 = vpack.c.bf16 %v3726, %v3724
        %v3757 = vpack.c.bf16 %v3727, %v3725
        %v3758 = vpack.c.bf16 %v3730, %v3728
        %v3759 = vpack.c.bf16 %v3731, %v3729
        %v3760 = vpack.c.bf16 %v3734, %v3732
        %v3761 = vpack.c.bf16 %v3735, %v3733
        %v3762 = vpack.c.bf16 %v3738, %v3736
        %v3763 = vpack.c.bf16 %v3739, %v3737
        %v3764 = vpack.c.bf16 %v3742, %v3740
        %v3765 = vpack.c.bf16 %v3743, %v3741
        %v3766 = vpack.c.bf16 %v3746, %v3744
        %v3767 = vpack.c.bf16 %v3747, %v3745
        %v3768 = vpack.c.bf16 %v3750, %v3748
        %v3769 = vpack.c.bf16 %v3751, %v3749
        %v3770 = vpack.c.bf16 %v3754, %v3752
        %v3771 = vpack.c.bf16 %v3755, %v3753
        %v3772 = vmul.f32 %v3482, %v3628
        %v3773 = vmul.f32 %v3483, %v3629
        %v3774 = vmul.f32 %v3484, %v3630
        %v3775 = vmul.f32 %v3485, %v3631
        %v3776 = vmul.f32 %v3486, %v3632
        %v3777 = vmul.f32 %v3487, %v3633
        %v3778 = vmul.f32 %v3488, %v3634
        %v3779 = vmul.f32 %v3489, %v3635
        %v3780 = vmul.f32 %v3490, %v3636
        %v3781 = vmul.f32 %v3491, %v3637
        %v3782 = vmul.f32 %v3492, %v3638
        %v3783 = vmul.f32 %v3493, %v3639
        %v3784 = vmul.f32 %v3494, %v3640
        %v3785 = vmul.f32 %v3495, %v3641
        %v3786 = vmul.f32 %v3496, %v3642
        %v3787 = vmul.f32 %v3497, %v3643
        %v3788 = vmul.f32 %v3498, %v3644
        %v3789 = vmul.f32 %v3499, %v3645
        %v3790 = vmul.f32 %v3500, %v3646
        %v3791 = vmul.f32 %v3501, %v3647
        %v3792 = vmul.f32 %v3502, %v3648
        %v3793 = vmul.f32 %v3503, %v3649
        %v3794 = vmul.f32 %v3504, %v3650
        %v3795 = vmul.f32 %v3505, %v3651
        %v3796 = vmul.f32 %v3506, %v3652
        %v3797 = vmul.f32 %v3507, %v3653
        %v3798 = vmul.f32 %v3508, %v3654
        %v3799 = vmul.f32 %v3509, %v3655
        %v3800 = vmul.f32 %v3510, %v3656
        %v3801 = vmul.f32 %v3511, %v3657
        %v3802 = vmul.f32 %v3512, %v3658
        %v3803 = vmul.f32 %v3513, %v3659
        %v3804 = vmul.f32 %v3532, %v3580
        %v3805 = vmul.f32 %v3533, %v3581
        %v3806 = vmul.f32 %v3534, %v3582
        %v3807 = vmul.f32 %v3535, %v3583
        %v3808 = vmul.f32 %v3536, %v3584
        %v3809 = vmul.f32 %v3537, %v3585
        %v3810 = vmul.f32 %v3538, %v3586
        %v3811 = vmul.f32 %v3539, %v3587
        %v3812 = vmul.f32 %v3540, %v3588
        %v3813 = vmul.f32 %v3541, %v3589
        %v3814 = vmul.f32 %v3542, %v3590
        %v3815 = vmul.f32 %v3543, %v3591
        %v3816 = vmul.f32 %v3544, %v3592
        %v3817 = vmul.f32 %v3545, %v3593
        %v3818 = vmul.f32 %v3546, %v3594
        %v3819 = vmul.f32 %v3547, %v3595
        %v3820 = vmul.f32 %v3548, %v3596
        %v3821 = vmul.f32 %v3549, %v3597
        %v3822 = vmul.f32 %v3550, %v3598
        %v3823 = vmul.f32 %v3551, %v3599
        %v3824 = vmul.f32 %v3552, %v3600
        %v3825 = vmul.f32 %v3553, %v3601
        %v3826 = vmul.f32 %v3554, %v3602
        %v3827 = vmul.f32 %v3555, %v3603
        %v3828 = vmul.f32 %v3556, %v3604
        %v3829 = vmul.f32 %v3557, %v3605
        %v3830 = vmul.f32 %v3558, %v3606
        %v3831 = vmul.f32 %v3559, %v3607
        %v3832 = vmul.f32 %v3560, %v3608
        %v3833 = vmul.f32 %v3561, %v3609
        %v3834 = vmul.f32 %v3562, %v3610
        %v3835 = vmul.f32 %v3563, %v3611
        %v3836 = vadd.f32 %v3772, %v3804
        %v3837 = vadd.f32 %v3773, %v3805
        %v3838 = vadd.f32 %v3774, %v3806
        %v3839 = vadd.f32 %v3775, %v3807
        %v3840 = vadd.f32 %v3776, %v3808
        %v3841 = vadd.f32 %v3777, %v3809
        %v3842 = vadd.f32 %v3778, %v3810
        %v3843 = vadd.f32 %v3779, %v3811
        %v3844 = vadd.f32 %v3780, %v3812
        %v3845 = vadd.f32 %v3781, %v3813
        %v3846 = vadd.f32 %v3782, %v3814
        %v3847 = vadd.f32 %v3783, %v3815
        %v3848 = vadd.f32 %v3784, %v3816
        %v3849 = vadd.f32 %v3785, %v3817
        %v3850 = vadd.f32 %v3786, %v3818
        %v3851 = vadd.f32 %v3787, %v3819
        %v3852 = vadd.f32 %v3788, %v3820
        %v3853 = vadd.f32 %v3789, %v3821
        %v3854 = vadd.f32 %v3790, %v3822
        %v3855 = vadd.f32 %v3791, %v3823
        %v3856 = vadd.f32 %v3792, %v3824
        %v3857 = vadd.f32 %v3793, %v3825
        %v3858 = vadd.f32 %v3794, %v3826
        %v3859 = vadd.f32 %v3795, %v3827
        %v3860 = vadd.f32 %v3796, %v3828
        %v3861 = vadd.f32 %v3797, %v3829
        %v3862 = vadd.f32 %v3798, %v3830
        %v3863 = vadd.f32 %v3799, %v3831
        %v3864 = vadd.f32 %v3800, %v3832
        %v3865 = vadd.f32 %v3801, %v3833
        %v3866 = vadd.f32 %v3802, %v3834
        %v3867 = vadd.f32 %v3803, %v3835
        %v3868 = vpack.c.bf16 %v3838, %v3836
        %v3869 = vpack.c.bf16 %v3839, %v3837
        %v3870 = vpack.c.bf16 %v3842, %v3840
        %v3871 = vpack.c.bf16 %v3843, %v3841
        %v3872 = vpack.c.bf16 %v3846, %v3844
        %v3873 = vpack.c.bf16 %v3847, %v3845
        %v3874 = vpack.c.bf16 %v3850, %v3848
        %v3875 = vpack.c.bf16 %v3851, %v3849
        %v3876 = vpack.c.bf16 %v3854, %v3852
        %v3877 = vpack.c.bf16 %v3855, %v3853
        %v3878 = vpack.c.bf16 %v3858, %v3856
        %v3879 = vpack.c.bf16 %v3859, %v3857
        %v3880 = vpack.c.bf16 %v3862, %v3860
        %v3881 = vpack.c.bf16 %v3863, %v3861
        %v3882 = vpack.c.bf16 %v3866, %v3864
        %v3883 = vpack.c.bf16 %v3867, %v3865
        %v3884 = vld [vmem:[%s637] sm:$0xf]
        %v3885 = vld [vmem:[%s637 + $0x4] sm:$0xf]
        %v3886 = vld [vmem:[%s637 + $0x8] sm:$0xf]
        %v3887 = vld [vmem:[%s637 + $0xc] sm:$0xf]
        %v3888 = vld [vmem:[%s637 + $0x10] sm:$0xf]
        %v3889 = vld [vmem:[%s637 + $0x14] sm:$0xf]
        %v3890 = vld [vmem:[%s637 + $0x18] sm:$0xf]
        %v3891 = vld [vmem:[%s637 + $0x1c] sm:$0xf]
        %v3892 = vld [vmem:[%s637 + $0x20] sm:$0xf]
        %v3893 = vld [vmem:[%s637 + $0x24] sm:$0xf]
        %v3894 = vld [vmem:[%s637 + $0x28] sm:$0xf]
        %v3895 = vld [vmem:[%s637 + $0x2c] sm:$0xf]
        %v3896 = vld [vmem:[%s637 + $0x30] sm:$0xf]
        %v3897 = vld [vmem:[%s637 + $0x34] sm:$0xf]
        %v3898 = vld [vmem:[%s637 + $0x38] sm:$0xf]
        %v3899 = vld [vmem:[%s637 + $0x3c] sm:$0xf]
        %v3900 = vld [vmem:[%s646] sm:$0xf]
        %v3901 = vld [vmem:[%s646 + $0x4] sm:$0xf]
        %v3902 = vld [vmem:[%s646 + $0x8] sm:$0xf]
        %v3903 = vld [vmem:[%s646 + $0xc] sm:$0xf]
        %v3904 = vld [vmem:[%s646 + $0x10] sm:$0xf]
        %v3905 = vld [vmem:[%s646 + $0x14] sm:$0xf]
        %v3906 = vld [vmem:[%s646 + $0x18] sm:$0xf]
        %v3907 = vld [vmem:[%s646 + $0x1c] sm:$0xf]
        %v3908 = vld [vmem:[%s646 + $0x20] sm:$0xf]
        %v3909 = vld [vmem:[%s646 + $0x24] sm:$0xf]
        %v3910 = vld [vmem:[%s646 + $0x28] sm:$0xf]
        %v3911 = vld [vmem:[%s646 + $0x2c] sm:$0xf]
        %v3912 = vld [vmem:[%s646 + $0x30] sm:$0xf]
        %v3913 = vld [vmem:[%s646 + $0x34] sm:$0xf]
        %v3914 = vld [vmem:[%s646 + $0x38] sm:$0xf]
        %v3915 = vld [vmem:[%s646 + $0x3c] sm:$0xf]
        %v3916 = vadd.bf16 %v3884, %v3900
        %v3917 = vadd.bf16 %v3885, %v3901
        %v3918 = vadd.bf16 %v3886, %v3902
        %v3919 = vadd.bf16 %v3887, %v3903
        %v3920 = vadd.bf16 %v3888, %v3904
        %v3921 = vadd.bf16 %v3889, %v3905
        %v3922 = vadd.bf16 %v3890, %v3906
        %v3923 = vadd.bf16 %v3891, %v3907
        %v3924 = vadd.bf16 %v3892, %v3908
        %v3925 = vadd.bf16 %v3893, %v3909
        %v3926 = vadd.bf16 %v3894, %v3910
        %v3927 = vadd.bf16 %v3895, %v3911
        %v3928 = vadd.bf16 %v3896, %v3912
        %v3929 = vadd.bf16 %v3897, %v3913
        %v3930 = vadd.bf16 %v3898, %v3914
        %v3931 = vadd.bf16 %v3899, %v3915
        %v3948 = vunpack.c.l.b16 %v3916
        %v3949 = vunpack.c.l.b16 %v3917
        %v3950 = vunpack.c.l.b16 %v3918
        %v3951 = vunpack.c.l.b16 %v3919
        %v3952 = vunpack.c.l.b16 %v3920
        %v3953 = vunpack.c.l.b16 %v3921
        %v3954 = vunpack.c.l.b16 %v3922
        %v3955 = vunpack.c.l.b16 %v3923
        %v3956 = vunpack.c.l.b16 %v3924
        %v3957 = vunpack.c.l.b16 %v3925
        %v3958 = vunpack.c.l.b16 %v3926
        %v3959 = vunpack.c.l.b16 %v3927
        %v3960 = vunpack.c.l.b16 %v3928
        %v3961 = vunpack.c.l.b16 %v3929
        %v3962 = vunpack.c.l.b16 %v3930
        %v3963 = vunpack.c.l.b16 %v3931
        %v3964 = vpack.c.b16 %v3949, %v3948
        %v3965 = vpack.c.b16 %v3951, %v3950
        %v3966 = vpack.c.b16 %v3953, %v3952
        %v3967 = vpack.c.b16 %v3955, %v3954
        %v3968 = vpack.c.b16 %v3957, %v3956
        %v3969 = vpack.c.b16 %v3959, %v3958
        %v3970 = vpack.c.b16 %v3961, %v3960
        %v3971 = vpack.c.b16 %v3963, %v3962
        %3980 = vmatprep.subr.bf16.mxu0 %v3771
        %3981 = vmatpush1.bf16.msra.mxu0 %v3770
        %3982 = vmatprep.subr.bf16.mxu0 %v3769
        %3983 = vmatpush1.bf16.msra.mxu0 %v3768
        %3984 = vmatprep.subr.bf16.mxu0 %v3767
        %3985 = vmatpush1.bf16.msra.mxu0 %v3766
        %3986 = vmatprep.subr.bf16.mxu0 %v3765
        %3987 = vmatpush1.bf16.msra.mxu0 %v3764
        %3988 = vmatprep.subr.bf16.mxu0 %v3763
        %3989 = vmatpush1.bf16.msra.mxu0 %v3762
        %3990 = vmatprep.subr.bf16.mxu0 %v3761
        %3991 = vmatpush1.bf16.msra.mxu0 %v3760
        %3992 = vmatprep.subr.bf16.mxu0 %v3759
        %3993 = vmatpush1.bf16.msra.mxu0 %v3758
        %3994 = vmatprep.subr.bf16.mxu0 %v3757
        %3995 = vmatpush1.bf16.msra.mxu0 %v3756
        %3996 = vmatprep.subr.bf16.mxu0 0
        %3997 = vmatpush2.bf16.msra.mxu0 0
        %3998 = vmatprep.subr.bf16.mxu0 0
        %3999 = vmatpush2.bf16.msra.mxu0 0
        %4000 = vmatprep.subr.bf16.mxu0 0
        %4001 = vmatpush2.bf16.msra.mxu0 0
        %4002 = vmatprep.subr.bf16.mxu0 0
        %4003 = vmatpush2.bf16.msra.mxu0 0
        %4004 = vmatprep.subr.bf16.mxu0 0
        %4005 = vmatpush2.bf16.msra.mxu0 0
        %4006 = vmatprep.subr.bf16.mxu0 0
        %4007 = vmatpush2.bf16.msra.mxu0 0
        %4008 = vmatprep.subr.bf16.mxu0 0
        %4009 = vmatpush2.bf16.msra.mxu0 0
        %4010 = vmatprep.subr.bf16.mxu0 0
        %4011 = vmatpush2.bf16.msra.mxu0 0
        %4012 = vmatprep.mubr.bf16.mxu0 0
        %4013 = vmatmul.mubr.bf16.gmra.mxu0 %v3964
        %v4014 = vpop.f32.mrf.mxu0
        %v4015 = vadd.f32 0.0, %v4014
        %v4016 = vpop.f32.mrf.mxu0
        %v4017 = vadd.f32 0.0, %v4016
        %v4018 = vpop.f32.mrf.mxu0
        %v4019 = vadd.f32 0.0, %v4018
        %v4020 = vpop.f32.mrf.mxu0
        %v4021 = vadd.f32 0.0, %v4020
        %4022 = vmatprep.mubr.bf16.mxu0 0
        %4023 = vmatmul.mubr.bf16.gmra.mxu0 %v3965
        %v4024 = vpop.f32.mrf.mxu0
        %v4025 = vadd.f32 0.0, %v4024
        %v4026 = vpop.f32.mrf.mxu0
        %v4027 = vadd.f32 0.0, %v4026
        %v4028 = vpop.f32.mrf.mxu0
        %v4029 = vadd.f32 0.0, %v4028
        %v4030 = vpop.f32.mrf.mxu0
        %v4031 = vadd.f32 0.0, %v4030
        %4032 = vmatprep.mubr.bf16.mxu0 0
        %4033 = vmatmul.mubr.bf16.gmra.mxu0 %v3966
        %v4034 = vpop.f32.mrf.mxu0
        %v4035 = vadd.f32 0.0, %v4034
        %v4036 = vpop.f32.mrf.mxu0
        %v4037 = vadd.f32 0.0, %v4036
        %v4038 = vpop.f32.mrf.mxu0
        %v4039 = vadd.f32 0.0, %v4038
        %v4040 = vpop.f32.mrf.mxu0
        %v4041 = vadd.f32 0.0, %v4040
        %4042 = vmatprep.mubr.bf16.mxu0 0
        %4043 = vmatmul.mubr.bf16.gmra.mxu0 %v3967
        %v4044 = vpop.f32.mrf.mxu0
        %v4045 = vadd.f32 0.0, %v4044
        %v4046 = vpop.f32.mrf.mxu0
        %v4047 = vadd.f32 0.0, %v4046
        %v4048 = vpop.f32.mrf.mxu0
        %v4049 = vadd.f32 0.0, %v4048
        %v4050 = vpop.f32.mrf.mxu0
        %v4051 = vadd.f32 0.0, %v4050
        %4052 = vmatprep.mubr.bf16.mxu0 0
        %4053 = vmatmul.mubr.bf16.gmra.mxu0 %v3968
        %v4054 = vpop.f32.mrf.mxu0
        %v4055 = vadd.f32 0.0, %v4054
        %v4056 = vpop.f32.mrf.mxu0
        %v4057 = vadd.f32 0.0, %v4056
        %v4058 = vpop.f32.mrf.mxu0
        %v4059 = vadd.f32 0.0, %v4058
        %v4060 = vpop.f32.mrf.mxu0
        %v4061 = vadd.f32 0.0, %v4060
        %4062 = vmatprep.mubr.bf16.mxu0 0
        %4063 = vmatmul.mubr.bf16.gmra.mxu0 %v3969
        %v4064 = vpop.f32.mrf.mxu0
        %v4065 = vadd.f32 0.0, %v4064
        %v4066 = vpop.f32.mrf.mxu0
        %v4067 = vadd.f32 0.0, %v4066
        %v4068 = vpop.f32.mrf.mxu0
        %v4069 = vadd.f32 0.0, %v4068
        %v4070 = vpop.f32.mrf.mxu0
        %v4071 = vadd.f32 0.0, %v4070
        %4072 = vmatprep.mubr.bf16.mxu0 0
        %4073 = vmatmul.mubr.bf16.gmra.mxu0 %v3970
        %v4074 = vpop.f32.mrf.mxu0
        %v4075 = vadd.f32 0.0, %v4074
        %v4076 = vpop.f32.mrf.mxu0
        %v4077 = vadd.f32 0.0, %v4076
        %v4078 = vpop.f32.mrf.mxu0
        %v4079 = vadd.f32 0.0, %v4078
        %v4080 = vpop.f32.mrf.mxu0
        %v4081 = vadd.f32 0.0, %v4080
        %4082 = vmatprep.mubr.bf16.mxu0 0
        %4083 = vmatmul.mubr.bf16.gmra.mxu0 %v3971
        %v4084 = vpop.f32.mrf.mxu0
        %v4085 = vadd.f32 0.0, %v4084
        %v4086 = vpop.f32.mrf.mxu0
        %v4087 = vadd.f32 0.0, %v4086
        %v4088 = vpop.f32.mrf.mxu0
        %v4089 = vadd.f32 0.0, %v4088
        %v4090 = vpop.f32.mrf.mxu0
        %v4091 = vadd.f32 0.0, %v4090
        %4092 = vdwg.mxu0
        %v4093 = vsub.bf16 %v3868, %v3756
        %v4094 = vsub.bf16 %v3869, %v3757
        %v4095 = vsub.bf16 %v3870, %v3758
        %v4096 = vsub.bf16 %v3871, %v3759
        %v4097 = vsub.bf16 %v3872, %v3760
        %v4098 = vsub.bf16 %v3873, %v3761
        %v4099 = vsub.bf16 %v3874, %v3762
        %v4100 = vsub.bf16 %v3875, %v3763
        %v4101 = vsub.bf16 %v3876, %v3764
        %v4102 = vsub.bf16 %v3877, %v3765
        %v4103 = vsub.bf16 %v3878, %v3766
        %v4104 = vsub.bf16 %v3879, %v3767
        %v4105 = vsub.bf16 %v3880, %v3768
        %v4106 = vsub.bf16 %v3881, %v3769
        %v4107 = vsub.bf16 %v3882, %v3770
        %v4108 = vsub.bf16 %v3883, %v3771
        %v4125 = vunpack.c.l.b16 %v3884
        %v4126 = vunpack.c.l.b16 %v3885
        %v4127 = vunpack.c.l.b16 %v3886
        %v4128 = vunpack.c.l.b16 %v3887
        %v4129 = vunpack.c.l.b16 %v3888
        %v4130 = vunpack.c.l.b16 %v3889
        %v4131 = vunpack.c.l.b16 %v3890
        %v4132 = vunpack.c.l.b16 %v3891
        %v4133 = vunpack.c.l.b16 %v3892
        %v4134 = vunpack.c.l.b16 %v3893
        %v4135 = vunpack.c.l.b16 %v3894
        %v4136 = vunpack.c.l.b16 %v3895
        %v4137 = vunpack.c.l.b16 %v3896
        %v4138 = vunpack.c.l.b16 %v3897
        %v4139 = vunpack.c.l.b16 %v3898
        %v4140 = vunpack.c.l.b16 %v3899
        %v4141 = vpack.c.b16 %v4126, %v4125
        %v4142 = vpack.c.b16 %v4128, %v4127
        %v4143 = vpack.c.b16 %v4130, %v4129
        %v4144 = vpack.c.b16 %v4132, %v4131
        %v4145 = vpack.c.b16 %v4134, %v4133
        %v4146 = vpack.c.b16 %v4136, %v4135
        %v4147 = vpack.c.b16 %v4138, %v4137
        %v4148 = vpack.c.b16 %v4140, %v4139
        %4157 = vmatprep.subr.bf16.mxu0 %v4108
        %4158 = vmatpush1.bf16.msra.mxu0 %v4107
        %4159 = vmatprep.subr.bf16.mxu0 %v4106
        %4160 = vmatpush1.bf16.msra.mxu0 %v4105
        %4161 = vmatprep.subr.bf16.mxu0 %v4104
        %4162 = vmatpush1.bf16.msra.mxu0 %v4103
        %4163 = vmatprep.subr.bf16.mxu0 %v4102
        %4164 = vmatpush1.bf16.msra.mxu0 %v4101
        %4165 = vmatprep.subr.bf16.mxu0 %v4100
        %4166 = vmatpush1.bf16.msra.mxu0 %v4099
        %4167 = vmatprep.subr.bf16.mxu0 %v4098
        %4168 = vmatpush1.bf16.msra.mxu0 %v4097
        %4169 = vmatprep.subr.bf16.mxu0 %v4096
        %4170 = vmatpush1.bf16.msra.mxu0 %v4095
        %4171 = vmatprep.subr.bf16.mxu0 %v4094
        %4172 = vmatpush1.bf16.msra.mxu0 %v4093
        %4173 = vmatprep.subr.bf16.mxu0 0
        %4174 = vmatpush2.bf16.msra.mxu0 0
        %4175 = vmatprep.subr.bf16.mxu0 0
        %4176 = vmatpush2.bf16.msra.mxu0 0
        %4177 = vmatprep.subr.bf16.mxu0 0
        %4178 = vmatpush2.bf16.msra.mxu0 0
        %4179 = vmatprep.subr.bf16.mxu0 0
        %4180 = vmatpush2.bf16.msra.mxu0 0
        %4181 = vmatprep.subr.bf16.mxu0 0
        %4182 = vmatpush2.bf16.msra.mxu0 0
        %4183 = vmatprep.subr.bf16.mxu0 0
        %4184 = vmatpush2.bf16.msra.mxu0 0
        %4185 = vmatprep.subr.bf16.mxu0 0
        %4186 = vmatpush2.bf16.msra.mxu0 0
        %4187 = vmatprep.subr.bf16.mxu0 0
        %4188 = vmatpush2.bf16.msra.mxu0 0
        %4189 = vmatprep.mubr.bf16.mxu0 0
        %4190 = vmatmul.mubr.bf16.gmra.mxu0 %v4141
        %v4191 = vpop.f32.mrf.mxu0
        %v4192 = vadd.f32 0.0, %v4191
        %v4193 = vpop.f32.mrf.mxu0
        %v4194 = vadd.f32 0.0, %v4193
        %v4195 = vpop.f32.mrf.mxu0
        %v4196 = vadd.f32 0.0, %v4195
        %v4197 = vpop.f32.mrf.mxu0
        %v4198 = vadd.f32 0.0, %v4197
        %4199 = vmatprep.mubr.bf16.mxu0 0
        %4200 = vmatmul.mubr.bf16.gmra.mxu0 %v4142
        %v4201 = vpop.f32.mrf.mxu0
        %v4202 = vadd.f32 0.0, %v4201
        %v4203 = vpop.f32.mrf.mxu0
        %v4204 = vadd.f32 0.0, %v4203
        %v4205 = vpop.f32.mrf.mxu0
        %v4206 = vadd.f32 0.0, %v4205
        %v4207 = vpop.f32.mrf.mxu0
        %v4208 = vadd.f32 0.0, %v4207
        %4209 = vmatprep.mubr.bf16.mxu0 0
        %4210 = vmatmul.mubr.bf16.gmra.mxu0 %v4143
        %v4211 = vpop.f32.mrf.mxu0
        %v4212 = vadd.f32 0.0, %v4211
        %v4213 = vpop.f32.mrf.mxu0
        %v4214 = vadd.f32 0.0, %v4213
        %v4215 = vpop.f32.mrf.mxu0
        %v4216 = vadd.f32 0.0, %v4215
        %v4217 = vpop.f32.mrf.mxu0
        %v4218 = vadd.f32 0.0, %v4217
        %4219 = vmatprep.mubr.bf16.mxu0 0
        %4220 = vmatmul.mubr.bf16.gmra.mxu0 %v4144
        %v4221 = vpop.f32.mrf.mxu0
        %v4222 = vadd.f32 0.0, %v4221
        %v4223 = vpop.f32.mrf.mxu0
        %v4224 = vadd.f32 0.0, %v4223
        %v4225 = vpop.f32.mrf.mxu0
        %v4226 = vadd.f32 0.0, %v4225
        %v4227 = vpop.f32.mrf.mxu0
        %v4228 = vadd.f32 0.0, %v4227
        %4229 = vmatprep.mubr.bf16.mxu0 0
        %4230 = vmatmul.mubr.bf16.gmra.mxu0 %v4145
        %v4231 = vpop.f32.mrf.mxu0
        %v4232 = vadd.f32 0.0, %v4231
        %v4233 = vpop.f32.mrf.mxu0
        %v4234 = vadd.f32 0.0, %v4233
        %v4235 = vpop.f32.mrf.mxu0
        %v4236 = vadd.f32 0.0, %v4235
        %v4237 = vpop.f32.mrf.mxu0
        %v4238 = vadd.f32 0.0, %v4237
        %4239 = vmatprep.mubr.bf16.mxu0 0
        %4240 = vmatmul.mubr.bf16.gmra.mxu0 %v4146
        %v4241 = vpop.f32.mrf.mxu0
        %v4242 = vadd.f32 0.0, %v4241
        %v4243 = vpop.f32.mrf.mxu0
        %v4244 = vadd.f32 0.0, %v4243
        %v4245 = vpop.f32.mrf.mxu0
        %v4246 = vadd.f32 0.0, %v4245
        %v4247 = vpop.f32.mrf.mxu0
        %v4248 = vadd.f32 0.0, %v4247
        %4249 = vmatprep.mubr.bf16.mxu0 0
        %4250 = vmatmul.mubr.bf16.gmra.mxu0 %v4147
        %v4251 = vpop.f32.mrf.mxu0
        %v4252 = vadd.f32 0.0, %v4251
        %v4253 = vpop.f32.mrf.mxu0
        %v4254 = vadd.f32 0.0, %v4253
        %v4255 = vpop.f32.mrf.mxu0
        %v4256 = vadd.f32 0.0, %v4255
        %v4257 = vpop.f32.mrf.mxu0
        %v4258 = vadd.f32 0.0, %v4257
        %4259 = vmatprep.mubr.bf16.mxu0 0
        %4260 = vmatmul.mubr.bf16.gmra.mxu0 %v4148
        %v4261 = vpop.f32.mrf.mxu0
        %v4262 = vadd.f32 0.0, %v4261
        %v4263 = vpop.f32.mrf.mxu0
        %v4264 = vadd.f32 0.0, %v4263
        %v4265 = vpop.f32.mrf.mxu0
        %v4266 = vadd.f32 0.0, %v4265
        %v4267 = vpop.f32.mrf.mxu0
        %v4268 = vadd.f32 0.0, %v4267
        %4269 = vdwg.mxu0
        %v4270 = vadd.bf16 %v3756, %v3868
        %v4271 = vadd.bf16 %v3757, %v3869
        %v4272 = vadd.bf16 %v3758, %v3870
        %v4273 = vadd.bf16 %v3759, %v3871
        %v4274 = vadd.bf16 %v3760, %v3872
        %v4275 = vadd.bf16 %v3761, %v3873
        %v4276 = vadd.bf16 %v3762, %v3874
        %v4277 = vadd.bf16 %v3763, %v3875
        %v4278 = vadd.bf16 %v3764, %v3876
        %v4279 = vadd.bf16 %v3765, %v3877
        %v4280 = vadd.bf16 %v3766, %v3878
        %v4281 = vadd.bf16 %v3767, %v3879
        %v4282 = vadd.bf16 %v3768, %v3880
        %v4283 = vadd.bf16 %v3769, %v3881
        %v4284 = vadd.bf16 %v3770, %v3882
        %v4285 = vadd.bf16 %v3771, %v3883
        %v4302 = vunpack.c.l.b16 %v3900
        %v4303 = vunpack.c.l.b16 %v3901
        %v4304 = vunpack.c.l.b16 %v3902
        %v4305 = vunpack.c.l.b16 %v3903
        %v4306 = vunpack.c.l.b16 %v3904
        %v4307 = vunpack.c.l.b16 %v3905
        %v4308 = vunpack.c.l.b16 %v3906
        %v4309 = vunpack.c.l.b16 %v3907
        %v4310 = vunpack.c.l.b16 %v3908
        %v4311 = vunpack.c.l.b16 %v3909
        %v4312 = vunpack.c.l.b16 %v3910
        %v4313 = vunpack.c.l.b16 %v3911
        %v4314 = vunpack.c.l.b16 %v3912
        %v4315 = vunpack.c.l.b16 %v3913
        %v4316 = vunpack.c.l.b16 %v3914
        %v4317 = vunpack.c.l.b16 %v3915
        %v4318 = vpack.c.b16 %v4303, %v4302
        %v4319 = vpack.c.b16 %v4305, %v4304
        %v4320 = vpack.c.b16 %v4307, %v4306
        %v4321 = vpack.c.b16 %v4309, %v4308
        %v4322 = vpack.c.b16 %v4311, %v4310
        %v4323 = vpack.c.b16 %v4313, %v4312
        %v4324 = vpack.c.b16 %v4315, %v4314
        %v4325 = vpack.c.b16 %v4317, %v4316
        %4334 = vmatprep.subr.bf16.mxu0 %v4285
        %4335 = vmatpush1.bf16.msra.mxu0 %v4284
        %4336 = vmatprep.subr.bf16.mxu0 %v4283
        %4337 = vmatpush1.bf16.msra.mxu0 %v4282
        %4338 = vmatprep.subr.bf16.mxu0 %v4281
        %4339 = vmatpush1.bf16.msra.mxu0 %v4280
        %4340 = vmatprep.subr.bf16.mxu0 %v4279
        %4341 = vmatpush1.bf16.msra.mxu0 %v4278
        %4342 = vmatprep.subr.bf16.mxu0 %v4277
        %4343 = vmatpush1.bf16.msra.mxu0 %v4276
        %4344 = vmatprep.subr.bf16.mxu0 %v4275
        %4345 = vmatpush1.bf16.msra.mxu0 %v4274
        %4346 = vmatprep.subr.bf16.mxu0 %v4273
        %4347 = vmatpush1.bf16.msra.mxu0 %v4272
        %4348 = vmatprep.subr.bf16.mxu0 %v4271
        %4349 = vmatpush1.bf16.msra.mxu0 %v4270
        %4350 = vmatprep.subr.bf16.mxu0 0
        %4351 = vmatpush2.bf16.msra.mxu0 0
        %4352 = vmatprep.subr.bf16.mxu0 0
        %4353 = vmatpush2.bf16.msra.mxu0 0
        %4354 = vmatprep.subr.bf16.mxu0 0
        %4355 = vmatpush2.bf16.msra.mxu0 0
        %4356 = vmatprep.subr.bf16.mxu0 0
        %4357 = vmatpush2.bf16.msra.mxu0 0
        %4358 = vmatprep.subr.bf16.mxu0 0
        %4359 = vmatpush2.bf16.msra.mxu0 0
        %4360 = vmatprep.subr.bf16.mxu0 0
        %4361 = vmatpush2.bf16.msra.mxu0 0
        %4362 = vmatprep.subr.bf16.mxu0 0
        %4363 = vmatpush2.bf16.msra.mxu0 0
        %4364 = vmatprep.subr.bf16.mxu0 0
        %4365 = vmatpush2.bf16.msra.mxu0 0
        %4366 = vmatprep.mubr.bf16.mxu0 0
        %4367 = vmatmul.mubr.bf16.gmra.mxu0 %v4318
        %v4368 = vpop.f32.mrf.mxu0
        %v4369 = vadd.f32 0.0, %v4368
        %v4370 = vpop.f32.mrf.mxu0
        %v4371 = vadd.f32 0.0, %v4370
        %v4372 = vpop.f32.mrf.mxu0
        %v4373 = vadd.f32 0.0, %v4372
        %v4374 = vpop.f32.mrf.mxu0
        %v4375 = vadd.f32 0.0, %v4374
        %4376 = vmatprep.mubr.bf16.mxu0 0
        %4377 = vmatmul.mubr.bf16.gmra.mxu0 %v4319
        %v4378 = vpop.f32.mrf.mxu0
        %v4379 = vadd.f32 0.0, %v4378
        %v4380 = vpop.f32.mrf.mxu0
        %v4381 = vadd.f32 0.0, %v4380
        %v4382 = vpop.f32.mrf.mxu0
        %v4383 = vadd.f32 0.0, %v4382
        %v4384 = vpop.f32.mrf.mxu0
        %v4385 = vadd.f32 0.0, %v4384
        %4386 = vmatprep.mubr.bf16.mxu0 0
        %4387 = vmatmul.mubr.bf16.gmra.mxu0 %v4320
        %v4388 = vpop.f32.mrf.mxu0
        %v4389 = vadd.f32 0.0, %v4388
        %v4390 = vpop.f32.mrf.mxu0
        %v4391 = vadd.f32 0.0, %v4390
        %v4392 = vpop.f32.mrf.mxu0
        %v4393 = vadd.f32 0.0, %v4392
        %v4394 = vpop.f32.mrf.mxu0
        %v4395 = vadd.f32 0.0, %v4394
        %4396 = vmatprep.mubr.bf16.mxu0 0
        %4397 = vmatmul.mubr.bf16.gmra.mxu0 %v4321
        %v4398 = vpop.f32.mrf.mxu0
        %v4399 = vadd.f32 0.0, %v4398
        %v4400 = vpop.f32.mrf.mxu0
        %v4401 = vadd.f32 0.0, %v4400
        %v4402 = vpop.f32.mrf.mxu0
        %v4403 = vadd.f32 0.0, %v4402
        %v4404 = vpop.f32.mrf.mxu0
        %v4405 = vadd.f32 0.0, %v4404
        %4406 = vmatprep.mubr.bf16.mxu0 0
        %4407 = vmatmul.mubr.bf16.gmra.mxu0 %v4322
        %v4408 = vpop.f32.mrf.mxu0
        %v4409 = vadd.f32 0.0, %v4408
        %v4410 = vpop.f32.mrf.mxu0
        %v4411 = vadd.f32 0.0, %v4410
        %v4412 = vpop.f32.mrf.mxu0
        %v4413 = vadd.f32 0.0, %v4412
        %v4414 = vpop.f32.mrf.mxu0
        %v4415 = vadd.f32 0.0, %v4414
        %4416 = vmatprep.mubr.bf16.mxu0 0
        %4417 = vmatmul.mubr.bf16.gmra.mxu0 %v4323
        %v4418 = vpop.f32.mrf.mxu0
        %v4419 = vadd.f32 0.0, %v4418
        %v4420 = vpop.f32.mrf.mxu0
        %v4421 = vadd.f32 0.0, %v4420
        %v4422 = vpop.f32.mrf.mxu0
        %v4423 = vadd.f32 0.0, %v4422
        %v4424 = vpop.f32.mrf.mxu0
        %v4425 = vadd.f32 0.0, %v4424
        %4426 = vmatprep.mubr.bf16.mxu0 0
        %4427 = vmatmul.mubr.bf16.gmra.mxu0 %v4324
        %v4428 = vpop.f32.mrf.mxu0
        %v4429 = vadd.f32 0.0, %v4428
        %v4430 = vpop.f32.mrf.mxu0
        %v4431 = vadd.f32 0.0, %v4430
        %v4432 = vpop.f32.mrf.mxu0
        %v4433 = vadd.f32 0.0, %v4432
        %v4434 = vpop.f32.mrf.mxu0
        %v4435 = vadd.f32 0.0, %v4434
        %4436 = vmatprep.mubr.bf16.mxu0 0
        %4437 = vmatmul.mubr.bf16.gmra.mxu0 %v4325
        %v4438 = vpop.f32.mrf.mxu0
        %v4439 = vadd.f32 0.0, %v4438
        %v4440 = vpop.f32.mrf.mxu0
        %v4441 = vadd.f32 0.0, %v4440
        %v4442 = vpop.f32.mrf.mxu0
        %v4443 = vadd.f32 0.0, %v4442
        %v4444 = vpop.f32.mrf.mxu0
        %v4445 = vadd.f32 0.0, %v4444
        %4446 = vdwg.mxu0
        %v4447 = vsub.f32 %v4015, %v4369
        %v4448 = vsub.f32 %v4017, %v4371
        %v4449 = vsub.f32 %v4019, %v4373
        %v4450 = vsub.f32 %v4021, %v4375
        %v4451 = vsub.f32 %v4025, %v4379
        %v4452 = vsub.f32 %v4027, %v4381
        %v4453 = vsub.f32 %v4029, %v4383
        %v4454 = vsub.f32 %v4031, %v4385
        %v4455 = vsub.f32 %v4035, %v4389
        %v4456 = vsub.f32 %v4037, %v4391
        %v4457 = vsub.f32 %v4039, %v4393
        %v4458 = vsub.f32 %v4041, %v4395
        %v4459 = vsub.f32 %v4045, %v4399
        %v4460 = vsub.f32 %v4047, %v4401
        %v4461 = vsub.f32 %v4049, %v4403
        %v4462 = vsub.f32 %v4051, %v4405
        %v4463 = vsub.f32 %v4055, %v4409
        %v4464 = vsub.f32 %v4057, %v4411
        %v4465 = vsub.f32 %v4059, %v4413
        %v4466 = vsub.f32 %v4061, %v4415
        %v4467 = vsub.f32 %v4065, %v4419
        %v4468 = vsub.f32 %v4067, %v4421
        %v4469 = vsub.f32 %v4069, %v4423
        %v4470 = vsub.f32 %v4071, %v4425
        %v4471 = vsub.f32 %v4075, %v4429
        %v4472 = vsub.f32 %v4077, %v4431
        %v4473 = vsub.f32 %v4079, %v4433
        %v4474 = vsub.f32 %v4081, %v4435
        %v4475 = vsub.f32 %v4085, %v4439
        %v4476 = vsub.f32 %v4087, %v4441
        %v4477 = vsub.f32 %v4089, %v4443
        %v4478 = vsub.f32 %v4091, %v4445
        %v4479 = vadd.f32 %v4015, %v4192
        %v4480 = vadd.f32 %v4017, %v4194
        %v4481 = vadd.f32 %v4019, %v4196
        %v4482 = vadd.f32 %v4021, %v4198
        %v4483 = vadd.f32 %v4025, %v4202
        %v4484 = vadd.f32 %v4027, %v4204
        %v4485 = vadd.f32 %v4029, %v4206
        %v4486 = vadd.f32 %v4031, %v4208
        %v4487 = vadd.f32 %v4035, %v4212
        %v4488 = vadd.f32 %v4037, %v4214
        %v4489 = vadd.f32 %v4039, %v4216
        %v4490 = vadd.f32 %v4041, %v4218
        %v4491 = vadd.f32 %v4045, %v4222
        %v4492 = vadd.f32 %v4047, %v4224
        %v4493 = vadd.f32 %v4049, %v4226
        %v4494 = vadd.f32 %v4051, %v4228
        %v4495 = vadd.f32 %v4055, %v4232
        %v4496 = vadd.f32 %v4057, %v4234
        %v4497 = vadd.f32 %v4059, %v4236
        %v4498 = vadd.f32 %v4061, %v4238
        %v4499 = vadd.f32 %v4065, %v4242
        %v4500 = vadd.f32 %v4067, %v4244
        %v4501 = vadd.f32 %v4069, %v4246
        %v4502 = vadd.f32 %v4071, %v4248
        %v4503 = vadd.f32 %v4075, %v4252
        %v4504 = vadd.f32 %v4077, %v4254
        %v4505 = vadd.f32 %v4079, %v4256
        %v4506 = vadd.f32 %v4081, %v4258
        %v4507 = vadd.f32 %v4085, %v4262
        %v4508 = vadd.f32 %v4087, %v4264
        %v4509 = vadd.f32 %v4089, %v4266
        %v4510 = vadd.f32 %v4091, %v4268
        %v4511 = vld [vmem:[#allocation4] sm:$0xff]
        %v4512 = vld [vmem:[#allocation4 + $0x8] sm:$0xff]
        %v4513 = vld [vmem:[#allocation4 + $0x10] sm:$0xff]
        %v4514 = vld [vmem:[#allocation4 + $0x18] sm:$0xff]
        %v4515 = vld [vmem:[#allocation4 + $0x20] sm:$0xff]
        %v4516 = vld [vmem:[#allocation4 + $0x28] sm:$0xff]
        %v4517 = vld [vmem:[#allocation4 + $0x30] sm:$0xff]
        %v4518 = vld [vmem:[#allocation4 + $0x38] sm:$0xff]
        %v4519 = vld [vmem:[#allocation4 + $0x40] sm:$0xff]
        %v4520 = vld [vmem:[#allocation4 + $0x48] sm:$0xff]
        %v4521 = vld [vmem:[#allocation4 + $0x50] sm:$0xff]
        %v4522 = vld [vmem:[#allocation4 + $0x58] sm:$0xff]
        %v4523 = vld [vmem:[#allocation4 + $0x60] sm:$0xff]
        %v4524 = vld [vmem:[#allocation4 + $0x68] sm:$0xff]
        %v4525 = vld [vmem:[#allocation4 + $0x70] sm:$0xff]
        %v4526 = vld [vmem:[#allocation4 + $0x78] sm:$0xff]
        %v4527 = vld [vmem:[#allocation4 + $0x80] sm:$0xff]
        %v4528 = vld [vmem:[#allocation4 + $0x88] sm:$0xff]
        %v4529 = vld [vmem:[#allocation4 + $0x90] sm:$0xff]
        %v4530 = vld [vmem:[#allocation4 + $0x98] sm:$0xff]
        %v4531 = vld [vmem:[#allocation4 + $0xa0] sm:$0xff]
        %v4532 = vld [vmem:[#allocation4 + $0xa8] sm:$0xff]
        %v4533 = vld [vmem:[#allocation4 + $0xb0] sm:$0xff]
        %v4534 = vld [vmem:[#allocation4 + $0xb8] sm:$0xff]
        %v4535 = vld [vmem:[#allocation4 + $0xc0] sm:$0xff]
        %v4536 = vld [vmem:[#allocation4 + $0xc8] sm:$0xff]
        %v4537 = vld [vmem:[#allocation4 + $0xd0] sm:$0xff]
        %v4538 = vld [vmem:[#allocation4 + $0xd8] sm:$0xff]
        %v4539 = vld [vmem:[#allocation4 + $0xe0] sm:$0xff]
        %v4540 = vld [vmem:[#allocation4 + $0xe8] sm:$0xff]
        %v4541 = vld [vmem:[#allocation4 + $0xf0] sm:$0xff]
        %v4542 = vld [vmem:[#allocation4 + $0xf8] sm:$0xff]
        %v4543 = vadd.f32 %v4511, %v4447
        %v4544 = vadd.f32 %v4512, %v4448
        %v4545 = vadd.f32 %v4513, %v4449
        %v4546 = vadd.f32 %v4514, %v4450
        %v4547 = vadd.f32 %v4515, %v4451
        %v4548 = vadd.f32 %v4516, %v4452
        %v4549 = vadd.f32 %v4517, %v4453
        %v4550 = vadd.f32 %v4518, %v4454
        %v4551 = vadd.f32 %v4519, %v4455
        %v4552 = vadd.f32 %v4520, %v4456
        %v4553 = vadd.f32 %v4521, %v4457
        %v4554 = vadd.f32 %v4522, %v4458
        %v4555 = vadd.f32 %v4523, %v4459
        %v4556 = vadd.f32 %v4524, %v4460
        %v4557 = vadd.f32 %v4525, %v4461
        %v4558 = vadd.f32 %v4526, %v4462
        %v4559 = vadd.f32 %v4527, %v4463
        %v4560 = vadd.f32 %v4528, %v4464
        %v4561 = vadd.f32 %v4529, %v4465
        %v4562 = vadd.f32 %v4530, %v4466
        %v4563 = vadd.f32 %v4531, %v4467
        %v4564 = vadd.f32 %v4532, %v4468
        %v4565 = vadd.f32 %v4533, %v4469
        %v4566 = vadd.f32 %v4534, %v4470
        %v4567 = vadd.f32 %v4535, %v4471
        %v4568 = vadd.f32 %v4536, %v4472
        %v4569 = vadd.f32 %v4537, %v4473
        %v4570 = vadd.f32 %v4538, %v4474
        %v4571 = vadd.f32 %v4539, %v4475
        %v4572 = vadd.f32 %v4540, %v4476
        %v4573 = vadd.f32 %v4541, %v4477
        %v4574 = vadd.f32 %v4542, %v4478
        %4575 = vst [vmem:[#allocation4] sm:$0xff] %v4543
        %4576 = vst [vmem:[#allocation4 + $0x8] sm:$0xff] %v4544
        %4577 = vst [vmem:[#allocation4 + $0x10] sm:$0xff] %v4545
        %4578 = vst [vmem:[#allocation4 + $0x18] sm:$0xff] %v4546
        %4579 = vst [vmem:[#allocation4 + $0x20] sm:$0xff] %v4547
        %4580 = vst [vmem:[#allocation4 + $0x28] sm:$0xff] %v4548
        %4581 = vst [vmem:[#allocation4 + $0x30] sm:$0xff] %v4549
        %4582 = vst [vmem:[#allocation4 + $0x38] sm:$0xff] %v4550
        %4583 = vst [vmem:[#allocation4 + $0x40] sm:$0xff] %v4551
        %4584 = vst [vmem:[#allocation4 + $0x48] sm:$0xff] %v4552
        %4585 = vst [vmem:[#allocation4 + $0x50] sm:$0xff] %v4553
        %4586 = vst [vmem:[#allocation4 + $0x58] sm:$0xff] %v4554
        %4587 = vst [vmem:[#allocation4 + $0x60] sm:$0xff] %v4555
        %4588 = vst [vmem:[#allocation4 + $0x68] sm:$0xff] %v4556
        %4589 = vst [vmem:[#allocation4 + $0x70] sm:$0xff] %v4557
        %4590 = vst [vmem:[#allocation4 + $0x78] sm:$0xff] %v4558
        %4591 = vst [vmem:[#allocation4 + $0x80] sm:$0xff] %v4559
        %4592 = vst [vmem:[#allocation4 + $0x88] sm:$0xff] %v4560
        %4593 = vst [vmem:[#allocation4 + $0x90] sm:$0xff] %v4561
        %4594 = vst [vmem:[#allocation4 + $0x98] sm:$0xff] %v4562
        %4595 = vst [vmem:[#allocation4 + $0xa0] sm:$0xff] %v4563
        %4596 = vst [vmem:[#allocation4 + $0xa8] sm:$0xff] %v4564
        %4597 = vst [vmem:[#allocation4 + $0xb0] sm:$0xff] %v4565
        %4598 = vst [vmem:[#allocation4 + $0xb8] sm:$0xff] %v4566
        %4599 = vst [vmem:[#allocation4 + $0xc0] sm:$0xff] %v4567
        %4600 = vst [vmem:[#allocation4 + $0xc8] sm:$0xff] %v4568
        %4601 = vst [vmem:[#allocation4 + $0xd0] sm:$0xff] %v4569
        %4602 = vst [vmem:[#allocation4 + $0xd8] sm:$0xff] %v4570
        %4603 = vst [vmem:[#allocation4 + $0xe0] sm:$0xff] %v4571
        %4604 = vst [vmem:[#allocation4 + $0xe8] sm:$0xff] %v4572
        %4605 = vst [vmem:[#allocation4 + $0xf0] sm:$0xff] %v4573
        %4606 = vst [vmem:[#allocation4 + $0xf8] sm:$0xff] %v4574
        %v4607 = vld [vmem:[#allocation5] sm:$0xff]
        %v4608 = vld [vmem:[#allocation5 + $0x8] sm:$0xff]
        %v4609 = vld [vmem:[#allocation5 + $0x10] sm:$0xff]
        %v4610 = vld [vmem:[#allocation5 + $0x18] sm:$0xff]
        %v4611 = vld [vmem:[#allocation5 + $0x20] sm:$0xff]
        %v4612 = vld [vmem:[#allocation5 + $0x28] sm:$0xff]
        %v4613 = vld [vmem:[#allocation5 + $0x30] sm:$0xff]
        %v4614 = vld [vmem:[#allocation5 + $0x38] sm:$0xff]
        %v4615 = vld [vmem:[#allocation5 + $0x40] sm:$0xff]
        %v4616 = vld [vmem:[#allocation5 + $0x48] sm:$0xff]
        %v4617 = vld [vmem:[#allocation5 + $0x50] sm:$0xff]
        %v4618 = vld [vmem:[#allocation5 + $0x58] sm:$0xff]
        %v4619 = vld [vmem:[#allocation5 + $0x60] sm:$0xff]
        %v4620 = vld [vmem:[#allocation5 + $0x68] sm:$0xff]
        %v4621 = vld [vmem:[#allocation5 + $0x70] sm:$0xff]
        %v4622 = vld [vmem:[#allocation5 + $0x78] sm:$0xff]
        %v4623 = vld [vmem:[#allocation5 + $0x80] sm:$0xff]
        %v4624 = vld [vmem:[#allocation5 + $0x88] sm:$0xff]
        %v4625 = vld [vmem:[#allocation5 + $0x90] sm:$0xff]
        %v4626 = vld [vmem:[#allocation5 + $0x98] sm:$0xff]
        %v4627 = vld [vmem:[#allocation5 + $0xa0] sm:$0xff]
        %v4628 = vld [vmem:[#allocation5 + $0xa8] sm:$0xff]
        %v4629 = vld [vmem:[#allocation5 + $0xb0] sm:$0xff]
        %v4630 = vld [vmem:[#allocation5 + $0xb8] sm:$0xff]
        %v4631 = vld [vmem:[#allocation5 + $0xc0] sm:$0xff]
        %v4632 = vld [vmem:[#allocation5 + $0xc8] sm:$0xff]
        %v4633 = vld [vmem:[#allocation5 + $0xd0] sm:$0xff]
        %v4634 = vld [vmem:[#allocation5 + $0xd8] sm:$0xff]
        %v4635 = vld [vmem:[#allocation5 + $0xe0] sm:$0xff]
        %v4636 = vld [vmem:[#allocation5 + $0xe8] sm:$0xff]
        %v4637 = vld [vmem:[#allocation5 + $0xf0] sm:$0xff]
        %v4638 = vld [vmem:[#allocation5 + $0xf8] sm:$0xff]
        %v4639 = vadd.f32 %v4607, %v4479
        %v4640 = vadd.f32 %v4608, %v4480
        %v4641 = vadd.f32 %v4609, %v4481
        %v4642 = vadd.f32 %v4610, %v4482
        %v4643 = vadd.f32 %v4611, %v4483
        %v4644 = vadd.f32 %v4612, %v4484
        %v4645 = vadd.f32 %v4613, %v4485
        %v4646 = vadd.f32 %v4614, %v4486
        %v4647 = vadd.f32 %v4615, %v4487
        %v4648 = vadd.f32 %v4616, %v4488
        %v4649 = vadd.f32 %v4617, %v4489
        %v4650 = vadd.f32 %v4618, %v4490
        %v4651 = vadd.f32 %v4619, %v4491
        %v4652 = vadd.f32 %v4620, %v4492
        %v4653 = vadd.f32 %v4621, %v4493
        %v4654 = vadd.f32 %v4622, %v4494
        %v4655 = vadd.f32 %v4623, %v4495
        %v4656 = vadd.f32 %v4624, %v4496
        %v4657 = vadd.f32 %v4625, %v4497
        %v4658 = vadd.f32 %v4626, %v4498
        %v4659 = vadd.f32 %v4627, %v4499
        %v4660 = vadd.f32 %v4628, %v4500
        %v4661 = vadd.f32 %v4629, %v4501
        %v4662 = vadd.f32 %v4630, %v4502
        %v4663 = vadd.f32 %v4631, %v4503
        %v4664 = vadd.f32 %v4632, %v4504
        %v4665 = vadd.f32 %v4633, %v4505
        %v4666 = vadd.f32 %v4634, %v4506
        %v4667 = vadd.f32 %v4635, %v4507
        %v4668 = vadd.f32 %v4636, %v4508
        %v4669 = vadd.f32 %v4637, %v4509
        %v4670 = vadd.f32 %v4638, %v4510
        %4671 = vst [vmem:[#allocation5] sm:$0xff] %v4639
        %4672 = vst [vmem:[#allocation5 + $0x8] sm:$0xff] %v4640
        %4673 = vst [vmem:[#allocation5 + $0x10] sm:$0xff] %v4641
        %4674 = vst [vmem:[#allocation5 + $0x18] sm:$0xff] %v4642
        %4675 = vst [vmem:[#allocation5 + $0x20] sm:$0xff] %v4643
        %4676 = vst [vmem:[#allocation5 + $0x28] sm:$0xff] %v4644
        %4677 = vst [vmem:[#allocation5 + $0x30] sm:$0xff] %v4645
        %4678 = vst [vmem:[#allocation5 + $0x38] sm:$0xff] %v4646
        %4679 = vst [vmem:[#allocation5 + $0x40] sm:$0xff] %v4647
        %4680 = vst [vmem:[#allocation5 + $0x48] sm:$0xff] %v4648
        %4681 = vst [vmem:[#allocation5 + $0x50] sm:$0xff] %v4649
        %4682 = vst [vmem:[#allocation5 + $0x58] sm:$0xff] %v4650
        %4683 = vst [vmem:[#allocation5 + $0x60] sm:$0xff] %v4651
        %4684 = vst [vmem:[#allocation5 + $0x68] sm:$0xff] %v4652
        %4685 = vst [vmem:[#allocation5 + $0x70] sm:$0xff] %v4653
        %4686 = vst [vmem:[#allocation5 + $0x78] sm:$0xff] %v4654
        %4687 = vst [vmem:[#allocation5 + $0x80] sm:$0xff] %v4655
        %4688 = vst [vmem:[#allocation5 + $0x88] sm:$0xff] %v4656
        %4689 = vst [vmem:[#allocation5 + $0x90] sm:$0xff] %v4657
        %4690 = vst [vmem:[#allocation5 + $0x98] sm:$0xff] %v4658
        %4691 = vst [vmem:[#allocation5 + $0xa0] sm:$0xff] %v4659
        %4692 = vst [vmem:[#allocation5 + $0xa8] sm:$0xff] %v4660
        %4693 = vst [vmem:[#allocation5 + $0xb0] sm:$0xff] %v4661
        %4694 = vst [vmem:[#allocation5 + $0xb8] sm:$0xff] %v4662
        %4695 = vst [vmem:[#allocation5 + $0xc0] sm:$0xff] %v4663
        %4696 = vst [vmem:[#allocation5 + $0xc8] sm:$0xff] %v4664
        %4697 = vst [vmem:[#allocation5 + $0xd0] sm:$0xff] %v4665
        %4698 = vst [vmem:[#allocation5 + $0xd8] sm:$0xff] %v4666
        %4699 = vst [vmem:[#allocation5 + $0xe0] sm:$0xff] %v4667
        %4700 = vst [vmem:[#allocation5 + $0xe8] sm:$0xff] %v4668
        %4701 = vst [vmem:[#allocation5 + $0xf0] sm:$0xff] %v4669
        %4702 = vst [vmem:[#allocation5 + $0xf8] sm:$0xff] %v4670
        %p4703 = scmp.eq.s32.totalorder %s44, 1
        // Predicated region
        $region125: #{tpu_custom_call.1} parent=67 // pred_check
          %p4704 = pneg %p4703
        $region126: #{tpu_custom_call.1} parent=67 // pred_check_branch
          %4706 = sbr.rel (%p4704) target = $region128
        $region127: #{tpu_custom_call.1} parent=67 // pred_region
          %v4707 = vld [vmem:[#allocation4] sm:$0xff]
          %v4708 = vld [vmem:[#allocation4 + $0x8] sm:$0xff]
          %v4709 = vld [vmem:[#allocation4 + $0x10] sm:$0xff]
          %v4710 = vld [vmem:[#allocation4 + $0x18] sm:$0xff]
          %v4711 = vld [vmem:[#allocation4 + $0x20] sm:$0xff]
          %v4712 = vld [vmem:[#allocation4 + $0x28] sm:$0xff]
          %v4713 = vld [vmem:[#allocation4 + $0x30] sm:$0xff]
          %v4714 = vld [vmem:[#allocation4 + $0x38] sm:$0xff]
          %v4715 = vld [vmem:[#allocation4 + $0x40] sm:$0xff]
          %v4716 = vld [vmem:[#allocation4 + $0x48] sm:$0xff]
          %v4717 = vld [vmem:[#allocation4 + $0x50] sm:$0xff]
          %v4718 = vld [vmem:[#allocation4 + $0x58] sm:$0xff]
          %v4719 = vld [vmem:[#allocation4 + $0x60] sm:$0xff]
          %v4720 = vld [vmem:[#allocation4 + $0x68] sm:$0xff]
          %v4721 = vld [vmem:[#allocation4 + $0x70] sm:$0xff]
          %v4722 = vld [vmem:[#allocation4 + $0x78] sm:$0xff]
          %v4723 = vld [vmem:[#allocation4 + $0x80] sm:$0xff]
          %v4724 = vld [vmem:[#allocation4 + $0x88] sm:$0xff]
          %v4725 = vld [vmem:[#allocation4 + $0x90] sm:$0xff]
          %v4726 = vld [vmem:[#allocation4 + $0x98] sm:$0xff]
          %v4727 = vld [vmem:[#allocation4 + $0xa0] sm:$0xff]
          %v4728 = vld [vmem:[#allocation4 + $0xa8] sm:$0xff]
          %v4729 = vld [vmem:[#allocation4 + $0xb0] sm:$0xff]
          %v4730 = vld [vmem:[#allocation4 + $0xb8] sm:$0xff]
          %v4731 = vld [vmem:[#allocation4 + $0xc0] sm:$0xff]
          %v4732 = vld [vmem:[#allocation4 + $0xc8] sm:$0xff]
          %v4733 = vld [vmem:[#allocation4 + $0xd0] sm:$0xff]
          %v4734 = vld [vmem:[#allocation4 + $0xd8] sm:$0xff]
          %v4735 = vld [vmem:[#allocation4 + $0xe0] sm:$0xff]
          %v4736 = vld [vmem:[#allocation4 + $0xe8] sm:$0xff]
          %v4737 = vld [vmem:[#allocation4 + $0xf0] sm:$0xff]
          %v4738 = vld [vmem:[#allocation4 + $0xf8] sm:$0xff]
          %v4739 = vpack.c.bf16 %v4709, %v4707
          %v4740 = vpack.c.bf16 %v4710, %v4708
          %v4741 = vpack.c.bf16 %v4713, %v4711
          %v4742 = vpack.c.bf16 %v4714, %v4712
          %v4743 = vpack.c.bf16 %v4717, %v4715
          %v4744 = vpack.c.bf16 %v4718, %v4716
          %v4745 = vpack.c.bf16 %v4721, %v4719
          %v4746 = vpack.c.bf16 %v4722, %v4720
          %v4747 = vpack.c.bf16 %v4725, %v4723
          %v4748 = vpack.c.bf16 %v4726, %v4724
          %v4749 = vpack.c.bf16 %v4729, %v4727
          %v4750 = vpack.c.bf16 %v4730, %v4728
          %v4751 = vpack.c.bf16 %v4733, %v4731
          %v4752 = vpack.c.bf16 %v4734, %v4732
          %v4753 = vpack.c.bf16 %v4737, %v4735
          %v4754 = vpack.c.bf16 %v4738, %v4736
          %v4755 = vld [vmem:[#allocation5] sm:$0xff]
          %v4756 = vld [vmem:[#allocation5 + $0x8] sm:$0xff]
          %v4757 = vld [vmem:[#allocation5 + $0x10] sm:$0xff]
          %v4758 = vld [vmem:[#allocation5 + $0x18] sm:$0xff]
          %v4759 = vld [vmem:[#allocation5 + $0x20] sm:$0xff]
          %v4760 = vld [vmem:[#allocation5 + $0x28] sm:$0xff]
          %v4761 = vld [vmem:[#allocation5 + $0x30] sm:$0xff]
          %v4762 = vld [vmem:[#allocation5 + $0x38] sm:$0xff]
          %v4763 = vld [vmem:[#allocation5 + $0x40] sm:$0xff]
          %v4764 = vld [vmem:[#allocation5 + $0x48] sm:$0xff]
          %v4765 = vld [vmem:[#allocation5 + $0x50] sm:$0xff]
          %v4766 = vld [vmem:[#allocation5 + $0x58] sm:$0xff]
          %v4767 = vld [vmem:[#allocation5 + $0x60] sm:$0xff]
          %v4768 = vld [vmem:[#allocation5 + $0x68] sm:$0xff]
          %v4769 = vld [vmem:[#allocation5 + $0x70] sm:$0xff]
          %v4770 = vld [vmem:[#allocation5 + $0x78] sm:$0xff]
          %v4771 = vld [vmem:[#allocation5 + $0x80] sm:$0xff]
          %v4772 = vld [vmem:[#allocation5 + $0x88] sm:$0xff]
          %v4773 = vld [vmem:[#allocation5 + $0x90] sm:$0xff]
          %v4774 = vld [vmem:[#allocation5 + $0x98] sm:$0xff]
          %v4775 = vld [vmem:[#allocation5 + $0xa0] sm:$0xff]
          %v4776 = vld [vmem:[#allocation5 + $0xa8] sm:$0xff]
          %v4777 = vld [vmem:[#allocation5 + $0xb0] sm:$0xff]
          %v4778 = vld [vmem:[#allocation5 + $0xb8] sm:$0xff]
          %v4779 = vld [vmem:[#allocation5 + $0xc0] sm:$0xff]
          %v4780 = vld [vmem:[#allocation5 + $0xc8] sm:$0xff]
          %v4781 = vld [vmem:[#allocation5 + $0xd0] sm:$0xff]
          %v4782 = vld [vmem:[#allocation5 + $0xd8] sm:$0xff]
          %v4783 = vld [vmem:[#allocation5 + $0xe0] sm:$0xff]
          %v4784 = vld [vmem:[#allocation5 + $0xe8] sm:$0xff]
          %v4785 = vld [vmem:[#allocation5 + $0xf0] sm:$0xff]
          %v4786 = vld [vmem:[#allocation5 + $0xf8] sm:$0xff]
          %v4787 = vpack.c.bf16 %v4757, %v4755
          %v4788 = vpack.c.bf16 %v4758, %v4756
          %v4789 = vpack.c.bf16 %v4761, %v4759
          %v4790 = vpack.c.bf16 %v4762, %v4760
          %v4791 = vpack.c.bf16 %v4765, %v4763
          %v4792 = vpack.c.bf16 %v4766, %v4764
          %v4793 = vpack.c.bf16 %v4769, %v4767
          %v4794 = vpack.c.bf16 %v4770, %v4768
          %v4795 = vpack.c.bf16 %v4773, %v4771
          %v4796 = vpack.c.bf16 %v4774, %v4772
          %v4797 = vpack.c.bf16 %v4777, %v4775
          %v4798 = vpack.c.bf16 %v4778, %v4776
          %v4799 = vpack.c.bf16 %v4781, %v4779
          %v4800 = vpack.c.bf16 %v4782, %v4780
          %v4801 = vpack.c.bf16 %v4785, %v4783
          %v4802 = vpack.c.bf16 %v4786, %v4784
          %v4803 = vld [vmem:[#allocation19] sm:$0xf]
          %v4804 = vld [vmem:[#allocation19 + $0x4] sm:$0xf]
          %v4805 = vld [vmem:[#allocation19 + $0x8] sm:$0xf]
          %v4806 = vld [vmem:[#allocation19 + $0xc] sm:$0xf]
          %v4807 = vld [vmem:[#allocation19 + $0x10] sm:$0xf]
          %v4808 = vld [vmem:[#allocation19 + $0x14] sm:$0xf]
          %v4809 = vld [vmem:[#allocation19 + $0x18] sm:$0xf]
          %v4810 = vld [vmem:[#allocation19 + $0x1c] sm:$0xf]
          %v4811 = vld [vmem:[#allocation19 + $0x20] sm:$0xf]
          %v4812 = vld [vmem:[#allocation19 + $0x24] sm:$0xf]
          %v4813 = vld [vmem:[#allocation19 + $0x28] sm:$0xf]
          %v4814 = vld [vmem:[#allocation19 + $0x2c] sm:$0xf]
          %v4815 = vld [vmem:[#allocation19 + $0x30] sm:$0xf]
          %v4816 = vld [vmem:[#allocation19 + $0x34] sm:$0xf]
          %v4817 = vld [vmem:[#allocation19 + $0x38] sm:$0xf]
          %v4818 = vld [vmem:[#allocation19 + $0x3c] sm:$0xf]
          %v4819 = vld [vmem:[#allocation19 + $0x40] sm:$0xf]
          %v4820 = vld [vmem:[#allocation19 + $0x44] sm:$0xf]
          %v4821 = vld [vmem:[#allocation19 + $0x48] sm:$0xf]
          %v4822 = vld [vmem:[#allocation19 + $0x4c] sm:$0xf]
          %v4823 = vld [vmem:[#allocation19 + $0x50] sm:$0xf]
          %v4824 = vld [vmem:[#allocation19 + $0x54] sm:$0xf]
          %v4825 = vld [vmem:[#allocation19 + $0x58] sm:$0xf]
          %v4826 = vld [vmem:[#allocation19 + $0x5c] sm:$0xf]
          %v4827 = vld [vmem:[#allocation19 + $0x60] sm:$0xf]
          %v4828 = vld [vmem:[#allocation19 + $0x64] sm:$0xf]
          %v4829 = vld [vmem:[#allocation19 + $0x68] sm:$0xf]
          %v4830 = vld [vmem:[#allocation19 + $0x6c] sm:$0xf]
          %v4831 = vld [vmem:[#allocation19 + $0x70] sm:$0xf]
          %v4832 = vld [vmem:[#allocation19 + $0x74] sm:$0xf]
          %v4833 = vld [vmem:[#allocation19 + $0x78] sm:$0xf]
          %v4834 = vld [vmem:[#allocation19 + $0x7c] sm:$0xf]
          %v4835 = vld [vmem:[#allocation20] sm:$0xf]
          %v4836 = vld [vmem:[#allocation20 + $0x4] sm:$0xf]
          %v4837 = vld [vmem:[#allocation20 + $0x8] sm:$0xf]
          %v4838 = vld [vmem:[#allocation20 + $0xc] sm:$0xf]
          %v4839 = vld [vmem:[#allocation20 + $0x10] sm:$0xf]
          %v4840 = vld [vmem:[#allocation20 + $0x14] sm:$0xf]
          %v4841 = vld [vmem:[#allocation20 + $0x18] sm:$0xf]
          %v4842 = vld [vmem:[#allocation20 + $0x1c] sm:$0xf]
          %v4843 = vld [vmem:[#allocation20 + $0x20] sm:$0xf]
          %v4844 = vld [vmem:[#allocation20 + $0x24] sm:$0xf]
          %v4845 = vld [vmem:[#allocation20 + $0x28] sm:$0xf]
          %v4846 = vld [vmem:[#allocation20 + $0x2c] sm:$0xf]
          %v4847 = vld [vmem:[#allocation20 + $0x30] sm:$0xf]
          %v4848 = vld [vmem:[#allocation20 + $0x34] sm:$0xf]
          %v4849 = vld [vmem:[#allocation20 + $0x38] sm:$0xf]
          %v4850 = vld [vmem:[#allocation20 + $0x3c] sm:$0xf]
          %v4851 = vld [vmem:[#allocation20 + $0x40] sm:$0xf]
          %v4852 = vld [vmem:[#allocation20 + $0x44] sm:$0xf]
          %v4853 = vld [vmem:[#allocation20 + $0x48] sm:$0xf]
          %v4854 = vld [vmem:[#allocation20 + $0x4c] sm:$0xf]
          %v4855 = vld [vmem:[#allocation20 + $0x50] sm:$0xf]
          %v4856 = vld [vmem:[#allocation20 + $0x54] sm:$0xf]
          %v4857 = vld [vmem:[#allocation20 + $0x58] sm:$0xf]
          %v4858 = vld [vmem:[#allocation20 + $0x5c] sm:$0xf]
          %v4859 = vld [vmem:[#allocation20 + $0x60] sm:$0xf]
          %v4860 = vld [vmem:[#allocation20 + $0x64] sm:$0xf]
          %v4861 = vld [vmem:[#allocation20 + $0x68] sm:$0xf]
          %v4862 = vld [vmem:[#allocation20 + $0x6c] sm:$0xf]
          %v4863 = vld [vmem:[#allocation20 + $0x70] sm:$0xf]
          %v4864 = vld [vmem:[#allocation20 + $0x74] sm:$0xf]
          %v4865 = vld [vmem:[#allocation20 + $0x78] sm:$0xf]
          %v4866 = vld [vmem:[#allocation20 + $0x7c] sm:$0xf]
          %v4867 = vadd.bf16 %v4739, %v4787
          %v4868 = vadd.bf16 %v4740, %v4788
          %v4869 = vadd.bf16 %v4741, %v4789
          %v4870 = vadd.bf16 %v4742, %v4790
          %v4871 = vadd.bf16 %v4743, %v4791
          %v4872 = vadd.bf16 %v4744, %v4792
          %v4873 = vadd.bf16 %v4745, %v4793
          %v4874 = vadd.bf16 %v4746, %v4794
          %v4875 = vadd.bf16 %v4747, %v4795
          %v4876 = vadd.bf16 %v4748, %v4796
          %v4877 = vadd.bf16 %v4749, %v4797
          %v4878 = vadd.bf16 %v4750, %v4798
          %v4879 = vadd.bf16 %v4751, %v4799
          %v4880 = vadd.bf16 %v4752, %v4800
          %v4881 = vadd.bf16 %v4753, %v4801
          %v4882 = vadd.bf16 %v4754, %v4802
          %v4915 = vunpack.c.l.b16 %v4803
          %v4916 = vunpack.c.l.b16 %v4804
          %v4917 = vunpack.c.l.b16 %v4805
          %v4918 = vunpack.c.l.b16 %v4806
          %v4919 = vunpack.c.l.b16 %v4807
          %v4920 = vunpack.c.l.b16 %v4808
          %v4921 = vunpack.c.l.b16 %v4809
          %v4922 = vunpack.c.l.b16 %v4810
          %v4923 = vunpack.c.l.b16 %v4811
          %v4924 = vunpack.c.l.b16 %v4812
          %v4925 = vunpack.c.l.b16 %v4813
          %v4926 = vunpack.c.l.b16 %v4814
          %v4927 = vunpack.c.l.b16 %v4815
          %v4928 = vunpack.c.l.b16 %v4816
          %v4929 = vunpack.c.l.b16 %v4817
          %v4930 = vunpack.c.l.b16 %v4818
          %v4931 = vunpack.c.l.b16 %v4819
          %v4932 = vunpack.c.l.b16 %v4820
          %v4933 = vunpack.c.l.b16 %v4821
          %v4934 = vunpack.c.l.b16 %v4822
          %v4935 = vunpack.c.l.b16 %v4823
          %v4936 = vunpack.c.l.b16 %v4824
          %v4937 = vunpack.c.l.b16 %v4825
          %v4938 = vunpack.c.l.b16 %v4826
          %v4939 = vunpack.c.l.b16 %v4827
          %v4940 = vunpack.c.l.b16 %v4828
          %v4941 = vunpack.c.l.b16 %v4829
          %v4942 = vunpack.c.l.b16 %v4830
          %v4943 = vunpack.c.l.b16 %v4831
          %v4944 = vunpack.c.l.b16 %v4832
          %v4945 = vunpack.c.l.b16 %v4833
          %v4946 = vunpack.c.l.b16 %v4834
          %v4947 = vpack.c.b16 %v4916, %v4915
          %v4948 = vpack.c.b16 %v4918, %v4917
          %v4949 = vpack.c.b16 %v4920, %v4919
          %v4950 = vpack.c.b16 %v4922, %v4921
          %v4951 = vpack.c.b16 %v4924, %v4923
          %v4952 = vpack.c.b16 %v4926, %v4925
          %v4953 = vpack.c.b16 %v4928, %v4927
          %v4954 = vpack.c.b16 %v4930, %v4929
          %v4955 = vpack.c.b16 %v4932, %v4931
          %v4956 = vpack.c.b16 %v4934, %v4933
          %v4957 = vpack.c.b16 %v4936, %v4935
          %v4958 = vpack.c.b16 %v4938, %v4937
          %v4959 = vpack.c.b16 %v4940, %v4939
          %v4960 = vpack.c.b16 %v4942, %v4941
          %v4961 = vpack.c.b16 %v4944, %v4943
          %v4962 = vpack.c.b16 %v4946, %v4945
          %4979 = vmatprep.subr.bf16.mxu0 0
          %4980 = vmatpush1.bf16.msra.mxu0 %v4954
          %4981 = vmatprep.subr.bf16.mxu0 0
          %4982 = vmatpush1.bf16.msra.mxu0 %v4953
          %4983 = vmatprep.subr.bf16.mxu0 0
          %4984 = vmatpush1.bf16.msra.mxu0 %v4952
          %4985 = vmatprep.subr.bf16.mxu0 0
          %4986 = vmatpush1.bf16.msra.mxu0 %v4951
          %4987 = vmatprep.subr.bf16.mxu0 0
          %4988 = vmatpush1.bf16.msra.mxu0 %v4950
          %4989 = vmatprep.subr.bf16.mxu0 0
          %4990 = vmatpush1.bf16.msra.mxu0 %v4949
          %4991 = vmatprep.subr.bf16.mxu0 0
          %4992 = vmatpush1.bf16.msra.mxu0 %v4948
          %4993 = vmatprep.subr.bf16.mxu0 0
          %4994 = vmatpush1.bf16.msra.mxu0 %v4947
          %4995 = vmatprep.subr.bf16.mxu0 0
          %4996 = vmatpush2.bf16.msra.mxu0 %v4962
          %4997 = vmatprep.subr.bf16.mxu0 0
          %4998 = vmatpush2.bf16.msra.mxu0 %v4961
          %4999 = vmatprep.subr.bf16.mxu0 0
          %5000 = vmatpush2.bf16.msra.mxu0 %v4960
          %5001 = vmatprep.subr.bf16.mxu0 0
          %5002 = vmatpush2.bf16.msra.mxu0 %v4959
          %5003 = vmatprep.subr.bf16.mxu0 0
          %5004 = vmatpush2.bf16.msra.mxu0 %v4958
          %5005 = vmatprep.subr.bf16.mxu0 0
          %5006 = vmatpush2.bf16.msra.mxu0 %v4957
          %5007 = vmatprep.subr.bf16.mxu0 0
          %5008 = vmatpush2.bf16.msra.mxu0 %v4956
          %5009 = vmatprep.subr.bf16.mxu0 0
          %5010 = vmatpush2.bf16.msra.mxu0 %v4955
          %5011 = vmatprep.mubr.bf16.mxu0 %v4868
          %5012 = vmatmul.mubr.bf16.gmra.mxu0 %v4867
          %v5013 = vpop.f32.mrf.mxu0
          %v5014 = vadd.f32 0.0, %v5013
          %v5015 = vpop.f32.mrf.mxu0
          %v5016 = vpop.f32.mrf.mxu0
          %v5017 = vadd.f32 0.0, %v5016
          %v5018 = vpop.f32.mrf.mxu0
          %5019 = vmatprep.mubr.bf16.mxu0 %v4870
          %5020 = vmatmul.mubr.bf16.gmra.mxu0 %v4869
          %v5021 = vpop.f32.mrf.mxu0
          %v5022 = vadd.f32 0.0, %v5021
          %v5023 = vpop.f32.mrf.mxu0
          %v5024 = vpop.f32.mrf.mxu0
          %v5025 = vadd.f32 0.0, %v5024
          %v5026 = vpop.f32.mrf.mxu0
          %5027 = vmatprep.mubr.bf16.mxu0 %v4872
          %5028 = vmatmul.mubr.bf16.gmra.mxu0 %v4871
          %v5029 = vpop.f32.mrf.mxu0
          %v5030 = vadd.f32 0.0, %v5029
          %v5031 = vpop.f32.mrf.mxu0
          %v5032 = vpop.f32.mrf.mxu0
          %v5033 = vadd.f32 0.0, %v5032
          %v5034 = vpop.f32.mrf.mxu0
          %5035 = vmatprep.mubr.bf16.mxu0 %v4874
          %5036 = vmatmul.mubr.bf16.gmra.mxu0 %v4873
          %v5037 = vpop.f32.mrf.mxu0
          %v5038 = vadd.f32 0.0, %v5037
          %v5039 = vpop.f32.mrf.mxu0
          %v5040 = vpop.f32.mrf.mxu0
          %v5041 = vadd.f32 0.0, %v5040
          %v5042 = vpop.f32.mrf.mxu0
          %5043 = vmatprep.mubr.bf16.mxu0 %v4876
          %5044 = vmatmul.mubr.bf16.gmra.mxu0 %v4875
          %v5045 = vpop.f32.mrf.mxu0
          %v5046 = vadd.f32 0.0, %v5045
          %v5047 = vpop.f32.mrf.mxu0
          %v5048 = vpop.f32.mrf.mxu0
          %v5049 = vadd.f32 0.0, %v5048
          %v5050 = vpop.f32.mrf.mxu0
          %5051 = vmatprep.mubr.bf16.mxu0 %v4878
          %5052 = vmatmul.mubr.bf16.gmra.mxu0 %v4877
          %v5053 = vpop.f32.mrf.mxu0
          %v5054 = vadd.f32 0.0, %v5053
          %v5055 = vpop.f32.mrf.mxu0
          %v5056 = vpop.f32.mrf.mxu0
          %v5057 = vadd.f32 0.0, %v5056
          %v5058 = vpop.f32.mrf.mxu0
          %5059 = vmatprep.mubr.bf16.mxu0 %v4880
          %5060 = vmatmul.mubr.bf16.gmra.mxu0 %v4879
          %v5061 = vpop.f32.mrf.mxu0
          %v5062 = vadd.f32 0.0, %v5061
          %v5063 = vpop.f32.mrf.mxu0
          %v5064 = vpop.f32.mrf.mxu0
          %v5065 = vadd.f32 0.0, %v5064
          %v5066 = vpop.f32.mrf.mxu0
          %5067 = vmatprep.mubr.bf16.mxu0 %v4882
          %5068 = vmatmul.mubr.bf16.gmra.mxu0 %v4881
          %v5069 = vpop.f32.mrf.mxu0
          %v5070 = vadd.f32 0.0, %v5069
          %v5071 = vpop.f32.mrf.mxu0
          %v5072 = vpop.f32.mrf.mxu0
          %v5073 = vadd.f32 0.0, %v5072
          %v5074 = vpop.f32.mrf.mxu0
          %5075 = vdwg.mxu0
          %v5076 = vsub.bf16 %v4835, %v4803
          %v5077 = vsub.bf16 %v4836, %v4804
          %v5078 = vsub.bf16 %v4837, %v4805
          %v5079 = vsub.bf16 %v4838, %v4806
          %v5080 = vsub.bf16 %v4839, %v4807
          %v5081 = vsub.bf16 %v4840, %v4808
          %v5082 = vsub.bf16 %v4841, %v4809
          %v5083 = vsub.bf16 %v4842, %v4810
          %v5084 = vsub.bf16 %v4843, %v4811
          %v5085 = vsub.bf16 %v4844, %v4812
          %v5086 = vsub.bf16 %v4845, %v4813
          %v5087 = vsub.bf16 %v4846, %v4814
          %v5088 = vsub.bf16 %v4847, %v4815
          %v5089 = vsub.bf16 %v4848, %v4816
          %v5090 = vsub.bf16 %v4849, %v4817
          %v5091 = vsub.bf16 %v4850, %v4818
          %v5092 = vsub.bf16 %v4851, %v4819
          %v5093 = vsub.bf16 %v4852, %v4820
          %v5094 = vsub.bf16 %v4853, %v4821
          %v5095 = vsub.bf16 %v4854, %v4822
          %v5096 = vsub.bf16 %v4855, %v4823
          %v5097 = vsub.bf16 %v4856, %v4824
          %v5098 = vsub.bf16 %v4857, %v4825
          %v5099 = vsub.bf16 %v4858, %v4826
          %v5100 = vsub.bf16 %v4859, %v4827
          %v5101 = vsub.bf16 %v4860, %v4828
          %v5102 = vsub.bf16 %v4861, %v4829
          %v5103 = vsub.bf16 %v4862, %v4830
          %v5104 = vsub.bf16 %v4863, %v4831
          %v5105 = vsub.bf16 %v4864, %v4832
          %v5106 = vsub.bf16 %v4865, %v4833
          %v5107 = vsub.bf16 %v4866, %v4834
          %v5140 = vunpack.c.l.b16 %v5076
          %v5141 = vunpack.c.l.b16 %v5077
          %v5142 = vunpack.c.l.b16 %v5078
          %v5143 = vunpack.c.l.b16 %v5079
          %v5144 = vunpack.c.l.b16 %v5080
          %v5145 = vunpack.c.l.b16 %v5081
          %v5146 = vunpack.c.l.b16 %v5082
          %v5147 = vunpack.c.l.b16 %v5083
          %v5148 = vunpack.c.l.b16 %v5084
          %v5149 = vunpack.c.l.b16 %v5085
          %v5150 = vunpack.c.l.b16 %v5086
          %v5151 = vunpack.c.l.b16 %v5087
          %v5152 = vunpack.c.l.b16 %v5088
          %v5153 = vunpack.c.l.b16 %v5089
          %v5154 = vunpack.c.l.b16 %v5090
          %v5155 = vunpack.c.l.b16 %v5091
          %v5156 = vunpack.c.l.b16 %v5092
          %v5157 = vunpack.c.l.b16 %v5093
          %v5158 = vunpack.c.l.b16 %v5094
          %v5159 = vunpack.c.l.b16 %v5095
          %v5160 = vunpack.c.l.b16 %v5096
          %v5161 = vunpack.c.l.b16 %v5097
          %v5162 = vunpack.c.l.b16 %v5098
          %v5163 = vunpack.c.l.b16 %v5099
          %v5164 = vunpack.c.l.b16 %v5100
          %v5165 = vunpack.c.l.b16 %v5101
          %v5166 = vunpack.c.l.b16 %v5102
          %v5167 = vunpack.c.l.b16 %v5103
          %v5168 = vunpack.c.l.b16 %v5104
          %v5169 = vunpack.c.l.b16 %v5105
          %v5170 = vunpack.c.l.b16 %v5106
          %v5171 = vunpack.c.l.b16 %v5107
          %v5172 = vpack.c.b16 %v5141, %v5140
          %v5173 = vpack.c.b16 %v5143, %v5142
          %v5174 = vpack.c.b16 %v5145, %v5144
          %v5175 = vpack.c.b16 %v5147, %v5146
          %v5176 = vpack.c.b16 %v5149, %v5148
          %v5177 = vpack.c.b16 %v5151, %v5150
          %v5178 = vpack.c.b16 %v5153, %v5152
          %v5179 = vpack.c.b16 %v5155, %v5154
          %v5180 = vpack.c.b16 %v5157, %v5156
          %v5181 = vpack.c.b16 %v5159, %v5158
          %v5182 = vpack.c.b16 %v5161, %v5160
          %v5183 = vpack.c.b16 %v5163, %v5162
          %v5184 = vpack.c.b16 %v5165, %v5164
          %v5185 = vpack.c.b16 %v5167, %v5166
          %v5186 = vpack.c.b16 %v5169, %v5168
          %v5187 = vpack.c.b16 %v5171, %v5170
          %5204 = vmatprep.subr.bf16.mxu0 0
          %5205 = vmatpush1.bf16.msra.mxu0 %v5179
          %5206 = vmatprep.subr.bf16.mxu0 0
          %5207 = vmatpush1.bf16.msra.mxu0 %v5178
          %5208 = vmatprep.subr.bf16.mxu0 0
          %5209 = vmatpush1.bf16.msra.mxu0 %v5177
          %5210 = vmatprep.subr.bf16.mxu0 0
          %5211 = vmatpush1.bf16.msra.mxu0 %v5176
          %5212 = vmatprep.subr.bf16.mxu0 0
          %5213 = vmatpush1.bf16.msra.mxu0 %v5175
          %5214 = vmatprep.subr.bf16.mxu0 0
          %5215 = vmatpush1.bf16.msra.mxu0 %v5174
          %5216 = vmatprep.subr.bf16.mxu0 0
          %5217 = vmatpush1.bf16.msra.mxu0 %v5173
          %5218 = vmatprep.subr.bf16.mxu0 0
          %5219 = vmatpush1.bf16.msra.mxu0 %v5172
          %5220 = vmatprep.subr.bf16.mxu0 0
          %5221 = vmatpush2.bf16.msra.mxu0 %v5187
          %5222 = vmatprep.subr.bf16.mxu0 0
          %5223 = vmatpush2.bf16.msra.mxu0 %v5186
          %5224 = vmatprep.subr.bf16.mxu0 0
          %5225 = vmatpush2.bf16.msra.mxu0 %v5185
          %5226 = vmatprep.subr.bf16.mxu0 0
          %5227 = vmatpush2.bf16.msra.mxu0 %v5184
          %5228 = vmatprep.subr.bf16.mxu0 0
          %5229 = vmatpush2.bf16.msra.mxu0 %v5183
          %5230 = vmatprep.subr.bf16.mxu0 0
          %5231 = vmatpush2.bf16.msra.mxu0 %v5182
          %5232 = vmatprep.subr.bf16.mxu0 0
          %5233 = vmatpush2.bf16.msra.mxu0 %v5181
          %5234 = vmatprep.subr.bf16.mxu0 0
          %5235 = vmatpush2.bf16.msra.mxu0 %v5180
          %5236 = vmatprep.mubr.bf16.mxu0 %v4740
          %5237 = vmatmul.mubr.bf16.gmra.mxu0 %v4739
          %v5238 = vpop.f32.mrf.mxu0
          %v5239 = vadd.f32 0.0, %v5238
          %v5240 = vpop.f32.mrf.mxu0
          %v5241 = vpop.f32.mrf.mxu0
          %v5242 = vadd.f32 0.0, %v5241
          %v5243 = vpop.f32.mrf.mxu0
          %5244 = vmatprep.mubr.bf16.mxu0 %v4742
          %5245 = vmatmul.mubr.bf16.gmra.mxu0 %v4741
          %v5246 = vpop.f32.mrf.mxu0
          %v5247 = vadd.f32 0.0, %v5246
          %v5248 = vpop.f32.mrf.mxu0
          %v5249 = vpop.f32.mrf.mxu0
          %v5250 = vadd.f32 0.0, %v5249
          %v5251 = vpop.f32.mrf.mxu0
          %5252 = vmatprep.mubr.bf16.mxu0 %v4744
          %5253 = vmatmul.mubr.bf16.gmra.mxu0 %v4743
          %v5254 = vpop.f32.mrf.mxu0
          %v5255 = vadd.f32 0.0, %v5254
          %v5256 = vpop.f32.mrf.mxu0
          %v5257 = vpop.f32.mrf.mxu0
          %v5258 = vadd.f32 0.0, %v5257
          %v5259 = vpop.f32.mrf.mxu0
          %5260 = vmatprep.mubr.bf16.mxu0 %v4746
          %5261 = vmatmul.mubr.bf16.gmra.mxu0 %v4745
          %v5262 = vpop.f32.mrf.mxu0
          %v5263 = vadd.f32 0.0, %v5262
          %v5264 = vpop.f32.mrf.mxu0
          %v5265 = vpop.f32.mrf.mxu0
          %v5266 = vadd.f32 0.0, %v5265
          %v5267 = vpop.f32.mrf.mxu0
          %5268 = vmatprep.mubr.bf16.mxu0 %v4748
          %5269 = vmatmul.mubr.bf16.gmra.mxu0 %v4747
          %v5270 = vpop.f32.mrf.mxu0
          %v5271 = vadd.f32 0.0, %v5270
          %v5272 = vpop.f32.mrf.mxu0
          %v5273 = vpop.f32.mrf.mxu0
          %v5274 = vadd.f32 0.0, %v5273
          %v5275 = vpop.f32.mrf.mxu0
          %5276 = vmatprep.mubr.bf16.mxu0 %v4750
          %5277 = vmatmul.mubr.bf16.gmra.mxu0 %v4749
          %v5278 = vpop.f32.mrf.mxu0
          %v5279 = vadd.f32 0.0, %v5278
          %v5280 = vpop.f32.mrf.mxu0
          %v5281 = vpop.f32.mrf.mxu0
          %v5282 = vadd.f32 0.0, %v5281
          %v5283 = vpop.f32.mrf.mxu0
          %5284 = vmatprep.mubr.bf16.mxu0 %v4752
          %5285 = vmatmul.mubr.bf16.gmra.mxu0 %v4751
          %v5286 = vpop.f32.mrf.mxu0
          %v5287 = vadd.f32 0.0, %v5286
          %v5288 = vpop.f32.mrf.mxu0
          %v5289 = vpop.f32.mrf.mxu0
          %v5290 = vadd.f32 0.0, %v5289
          %v5291 = vpop.f32.mrf.mxu0
          %5292 = vmatprep.mubr.bf16.mxu0 %v4754
          %5293 = vmatmul.mubr.bf16.gmra.mxu0 %v4753
          %v5294 = vpop.f32.mrf.mxu0
          %v5295 = vadd.f32 0.0, %v5294
          %v5296 = vpop.f32.mrf.mxu0
          %v5297 = vpop.f32.mrf.mxu0
          %v5298 = vadd.f32 0.0, %v5297
          %v5299 = vpop.f32.mrf.mxu0
          %5300 = vdwg.mxu0
          %v5301 = vadd.bf16 %v4803, %v4835
          %v5302 = vadd.bf16 %v4804, %v4836
          %v5303 = vadd.bf16 %v4805, %v4837
          %v5304 = vadd.bf16 %v4806, %v4838
          %v5305 = vadd.bf16 %v4807, %v4839
          %v5306 = vadd.bf16 %v4808, %v4840
          %v5307 = vadd.bf16 %v4809, %v4841
          %v5308 = vadd.bf16 %v4810, %v4842
          %v5309 = vadd.bf16 %v4811, %v4843
          %v5310 = vadd.bf16 %v4812, %v4844
          %v5311 = vadd.bf16 %v4813, %v4845
          %v5312 = vadd.bf16 %v4814, %v4846
          %v5313 = vadd.bf16 %v4815, %v4847
          %v5314 = vadd.bf16 %v4816, %v4848
          %v5315 = vadd.bf16 %v4817, %v4849
          %v5316 = vadd.bf16 %v4818, %v4850
          %v5317 = vadd.bf16 %v4819, %v4851
          %v5318 = vadd.bf16 %v4820, %v4852
          %v5319 = vadd.bf16 %v4821, %v4853
          %v5320 = vadd.bf16 %v4822, %v4854
          %v5321 = vadd.bf16 %v4823, %v4855
          %v5322 = vadd.bf16 %v4824, %v4856
          %v5323 = vadd.bf16 %v4825, %v4857
          %v5324 = vadd.bf16 %v4826, %v4858
          %v5325 = vadd.bf16 %v4827, %v4859
          %v5326 = vadd.bf16 %v4828, %v4860
          %v5327 = vadd.bf16 %v4829, %v4861
          %v5328 = vadd.bf16 %v4830, %v4862
          %v5329 = vadd.bf16 %v4831, %v4863
          %v5330 = vadd.bf16 %v4832, %v4864
          %v5331 = vadd.bf16 %v4833, %v4865
          %v5332 = vadd.bf16 %v4834, %v4866
          %v5365 = vunpack.c.l.b16 %v5301
          %v5366 = vunpack.c.l.b16 %v5302
          %v5367 = vunpack.c.l.b16 %v5303
          %v5368 = vunpack.c.l.b16 %v5304
          %v5369 = vunpack.c.l.b16 %v5305
          %v5370 = vunpack.c.l.b16 %v5306
          %v5371 = vunpack.c.l.b16 %v5307
          %v5372 = vunpack.c.l.b16 %v5308
          %v5373 = vunpack.c.l.b16 %v5309
          %v5374 = vunpack.c.l.b16 %v5310
          %v5375 = vunpack.c.l.b16 %v5311
          %v5376 = vunpack.c.l.b16 %v5312
          %v5377 = vunpack.c.l.b16 %v5313
          %v5378 = vunpack.c.l.b16 %v5314
          %v5379 = vunpack.c.l.b16 %v5315
          %v5380 = vunpack.c.l.b16 %v5316
          %v5381 = vunpack.c.l.b16 %v5317
          %v5382 = vunpack.c.l.b16 %v5318
          %v5383 = vunpack.c.l.b16 %v5319
          %v5384 = vunpack.c.l.b16 %v5320
          %v5385 = vunpack.c.l.b16 %v5321
          %v5386 = vunpack.c.l.b16 %v5322
          %v5387 = vunpack.c.l.b16 %v5323
          %v5388 = vunpack.c.l.b16 %v5324
          %v5389 = vunpack.c.l.b16 %v5325
          %v5390 = vunpack.c.l.b16 %v5326
          %v5391 = vunpack.c.l.b16 %v5327
          %v5392 = vunpack.c.l.b16 %v5328
          %v5393 = vunpack.c.l.b16 %v5329
          %v5394 = vunpack.c.l.b16 %v5330
          %v5395 = vunpack.c.l.b16 %v5331
          %v5396 = vunpack.c.l.b16 %v5332
          %v5397 = vpack.c.b16 %v5366, %v5365
          %v5398 = vpack.c.b16 %v5368, %v5367
          %v5399 = vpack.c.b16 %v5370, %v5369
          %v5400 = vpack.c.b16 %v5372, %v5371
          %v5401 = vpack.c.b16 %v5374, %v5373
          %v5402 = vpack.c.b16 %v5376, %v5375
          %v5403 = vpack.c.b16 %v5378, %v5377
          %v5404 = vpack.c.b16 %v5380, %v5379
          %v5405 = vpack.c.b16 %v5382, %v5381
          %v5406 = vpack.c.b16 %v5384, %v5383
          %v5407 = vpack.c.b16 %v5386, %v5385
          %v5408 = vpack.c.b16 %v5388, %v5387
          %v5409 = vpack.c.b16 %v5390, %v5389
          %v5410 = vpack.c.b16 %v5392, %v5391
          %v5411 = vpack.c.b16 %v5394, %v5393
          %v5412 = vpack.c.b16 %v5396, %v5395
          %5429 = vmatprep.subr.bf16.mxu0 0
          %5430 = vmatpush1.bf16.msra.mxu0 %v5404
          %5431 = vmatprep.subr.bf16.mxu0 0
          %5432 = vmatpush1.bf16.msra.mxu0 %v5403
          %5433 = vmatprep.subr.bf16.mxu0 0
          %5434 = vmatpush1.bf16.msra.mxu0 %v5402
          %5435 = vmatprep.subr.bf16.mxu0 0
          %5436 = vmatpush1.bf16.msra.mxu0 %v5401
          %5437 = vmatprep.subr.bf16.mxu0 0
          %5438 = vmatpush1.bf16.msra.mxu0 %v5400
          %5439 = vmatprep.subr.bf16.mxu0 0
          %5440 = vmatpush1.bf16.msra.mxu0 %v5399
          %5441 = vmatprep.subr.bf16.mxu0 0
          %5442 = vmatpush1.bf16.msra.mxu0 %v5398
          %5443 = vmatprep.subr.bf16.mxu0 0
          %5444 = vmatpush1.bf16.msra.mxu0 %v5397
          %5445 = vmatprep.subr.bf16.mxu0 0
          %5446 = vmatpush2.bf16.msra.mxu0 %v5412
          %5447 = vmatprep.subr.bf16.mxu0 0
          %5448 = vmatpush2.bf16.msra.mxu0 %v5411
          %5449 = vmatprep.subr.bf16.mxu0 0
          %5450 = vmatpush2.bf16.msra.mxu0 %v5410
          %5451 = vmatprep.subr.bf16.mxu0 0
          %5452 = vmatpush2.bf16.msra.mxu0 %v5409
          %5453 = vmatprep.subr.bf16.mxu0 0
          %5454 = vmatpush2.bf16.msra.mxu0 %v5408
          %5455 = vmatprep.subr.bf16.mxu0 0
          %5456 = vmatpush2.bf16.msra.mxu0 %v5407
          %5457 = vmatprep.subr.bf16.mxu0 0
          %5458 = vmatpush2.bf16.msra.mxu0 %v5406
          %5459 = vmatprep.subr.bf16.mxu0 0
          %5460 = vmatpush2.bf16.msra.mxu0 %v5405
          %5461 = vmatprep.mubr.bf16.mxu0 %v4788
          %5462 = vmatmul.mubr.bf16.gmra.mxu0 %v4787
          %v5463 = vpop.f32.mrf.mxu0
          %v5464 = vadd.f32 0.0, %v5463
          %v5465 = vpop.f32.mrf.mxu0
          %v5466 = vpop.f32.mrf.mxu0
          %v5467 = vadd.f32 0.0, %v5466
          %v5468 = vpop.f32.mrf.mxu0
          %5469 = vmatprep.mubr.bf16.mxu0 %v4790
          %5470 = vmatmul.mubr.bf16.gmra.mxu0 %v4789
          %v5471 = vpop.f32.mrf.mxu0
          %v5472 = vadd.f32 0.0, %v5471
          %v5473 = vpop.f32.mrf.mxu0
          %v5474 = vpop.f32.mrf.mxu0
          %v5475 = vadd.f32 0.0, %v5474
          %v5476 = vpop.f32.mrf.mxu0
          %5477 = vmatprep.mubr.bf16.mxu0 %v4792
          %5478 = vmatmul.mubr.bf16.gmra.mxu0 %v4791
          %v5479 = vpop.f32.mrf.mxu0
          %v5480 = vadd.f32 0.0, %v5479
          %v5481 = vpop.f32.mrf.mxu0
          %v5482 = vpop.f32.mrf.mxu0
          %v5483 = vadd.f32 0.0, %v5482
          %v5484 = vpop.f32.mrf.mxu0
          %5485 = vmatprep.mubr.bf16.mxu0 %v4794
          %5486 = vmatmul.mubr.bf16.gmra.mxu0 %v4793
          %v5487 = vpop.f32.mrf.mxu0
          %v5488 = vadd.f32 0.0, %v5487
          %v5489 = vpop.f32.mrf.mxu0
          %v5490 = vpop.f32.mrf.mxu0
          %v5491 = vadd.f32 0.0, %v5490
          %v5492 = vpop.f32.mrf.mxu0
          %5493 = vmatprep.mubr.bf16.mxu0 %v4796
          %5494 = vmatmul.mubr.bf16.gmra.mxu0 %v4795
          %v5495 = vpop.f32.mrf.mxu0
          %v5496 = vadd.f32 0.0, %v5495
          %v5497 = vpop.f32.mrf.mxu0
          %v5498 = vpop.f32.mrf.mxu0
          %v5499 = vadd.f32 0.0, %v5498
          %v5500 = vpop.f32.mrf.mxu0
          %5501 = vmatprep.mubr.bf16.mxu0 %v4798
          %5502 = vmatmul.mubr.bf16.gmra.mxu0 %v4797
          %v5503 = vpop.f32.mrf.mxu0
          %v5504 = vadd.f32 0.0, %v5503
          %v5505 = vpop.f32.mrf.mxu0
          %v5506 = vpop.f32.mrf.mxu0
          %v5507 = vadd.f32 0.0, %v5506
          %v5508 = vpop.f32.mrf.mxu0
          %5509 = vmatprep.mubr.bf16.mxu0 %v4800
          %5510 = vmatmul.mubr.bf16.gmra.mxu0 %v4799
          %v5511 = vpop.f32.mrf.mxu0
          %v5512 = vadd.f32 0.0, %v5511
          %v5513 = vpop.f32.mrf.mxu0
          %v5514 = vpop.f32.mrf.mxu0
          %v5515 = vadd.f32 0.0, %v5514
          %v5516 = vpop.f32.mrf.mxu0
          %5517 = vmatprep.mubr.bf16.mxu0 %v4802
          %5518 = vmatmul.mubr.bf16.gmra.mxu0 %v4801
          %v5519 = vpop.f32.mrf.mxu0
          %v5520 = vadd.f32 0.0, %v5519
          %v5521 = vpop.f32.mrf.mxu0
          %v5522 = vpop.f32.mrf.mxu0
          %v5523 = vadd.f32 0.0, %v5522
          %v5524 = vpop.f32.mrf.mxu0
          %5525 = vdwg.mxu0
          %v5526 = vsub.f32 %v5014, %v5464
          %v5527 = vsub.f32 %v5017, %v5467
          %v5528 = vsub.f32 %v5022, %v5472
          %v5529 = vsub.f32 %v5025, %v5475
          %v5530 = vsub.f32 %v5030, %v5480
          %v5531 = vsub.f32 %v5033, %v5483
          %v5532 = vsub.f32 %v5038, %v5488
          %v5533 = vsub.f32 %v5041, %v5491
          %v5534 = vsub.f32 %v5046, %v5496
          %v5535 = vsub.f32 %v5049, %v5499
          %v5536 = vsub.f32 %v5054, %v5504
          %v5537 = vsub.f32 %v5057, %v5507
          %v5538 = vsub.f32 %v5062, %v5512
          %v5539 = vsub.f32 %v5065, %v5515
          %v5540 = vsub.f32 %v5070, %v5520
          %v5541 = vsub.f32 %v5073, %v5523
          %v5542 = vadd.f32 %v5014, %v5239
          %v5543 = vadd.f32 %v5017, %v5242
          %v5544 = vadd.f32 %v5022, %v5247
          %v5545 = vadd.f32 %v5025, %v5250
          %v5546 = vadd.f32 %v5030, %v5255
          %v5547 = vadd.f32 %v5033, %v5258
          %v5548 = vadd.f32 %v5038, %v5263
          %v5549 = vadd.f32 %v5041, %v5266
          %v5550 = vadd.f32 %v5046, %v5271
          %v5551 = vadd.f32 %v5049, %v5274
          %v5552 = vadd.f32 %v5054, %v5279
          %v5553 = vadd.f32 %v5057, %v5282
          %v5554 = vadd.f32 %v5062, %v5287
          %v5555 = vadd.f32 %v5065, %v5290
          %v5556 = vadd.f32 %v5070, %v5295
          %v5557 = vadd.f32 %v5073, %v5298
          %5558 = vst [vmem:[%s737] sm:$0xff] %v5526
          %5559 = vst [vmem:[%s737 + $0x8] sm:$0xff] %v5542
          %5560 = vst [vmem:[%s737 + $0x10] sm:$0xff] %v5527
          %5561 = vst [vmem:[%s737 + $0x18] sm:$0xff] %v5543
          %5562 = vst [vmem:[%s737 + $0x20] sm:$0xff] %v5528
          %5563 = vst [vmem:[%s737 + $0x28] sm:$0xff] %v5544
          %5564 = vst [vmem:[%s737 + $0x30] sm:$0xff] %v5529
          %5565 = vst [vmem:[%s737 + $0x38] sm:$0xff] %v5545
          %5566 = vst [vmem:[%s737 + $0x40] sm:$0xff] %v5530
          %5567 = vst [vmem:[%s737 + $0x48] sm:$0xff] %v5546
          %5568 = vst [vmem:[%s737 + $0x50] sm:$0xff] %v5531
          %5569 = vst [vmem:[%s737 + $0x58] sm:$0xff] %v5547
          %5570 = vst [vmem:[%s737 + $0x60] sm:$0xff] %v5532
          %5571 = vst [vmem:[%s737 + $0x68] sm:$0xff] %v5548
          %5572 = vst [vmem:[%s737 + $0x70] sm:$0xff] %v5533
          %5573 = vst [vmem:[%s737 + $0x78] sm:$0xff] %v5549
          %5574 = vst [vmem:[%s737 + $0x80] sm:$0xff] %v5534
          %5575 = vst [vmem:[%s737 + $0x88] sm:$0xff] %v5550
          %5576 = vst [vmem:[%s737 + $0x90] sm:$0xff] %v5535
          %5577 = vst [vmem:[%s737 + $0x98] sm:$0xff] %v5551
          %5578 = vst [vmem:[%s737 + $0xa0] sm:$0xff] %v5536
          %5579 = vst [vmem:[%s737 + $0xa8] sm:$0xff] %v5552
          %5580 = vst [vmem:[%s737 + $0xb0] sm:$0xff] %v5537
          %5581 = vst [vmem:[%s737 + $0xb8] sm:$0xff] %v5553
          %5582 = vst [vmem:[%s737 + $0xc0] sm:$0xff] %v5538
          %5583 = vst [vmem:[%s737 + $0xc8] sm:$0xff] %v5554
          %5584 = vst [vmem:[%s737 + $0xd0] sm:$0xff] %v5539
          %5585 = vst [vmem:[%s737 + $0xd8] sm:$0xff] %v5555
          %5586 = vst [vmem:[%s737 + $0xe0] sm:$0xff] %v5540
          %5587 = vst [vmem:[%s737 + $0xe8] sm:$0xff] %v5556
          %5588 = vst [vmem:[%s737 + $0xf0] sm:$0xff] %v5541
          %5589 = vst [vmem:[%s737 + $0xf8] sm:$0xff] %v5557
        $region128: #{tpu_custom_call.1} parent=67 // pred_fallthru
          _
        %s5590 = sand.u32 %s352, 1
        %s5591 = scalar_lea.sflag [#allocation8], %s5590
        %s5592 = sand.u32 %s352, 1
        %s5593 = smul.addr %s5592, 256
        %s5594 = scalar_lea.vmem [#allocation24], %s5593
        // Predicated region
        $region129: #{tpu_custom_call.1} parent=67 // pred_check
          %p5595 = pneg %p362
        $region130: #{tpu_custom_call.1} parent=67 // pred_check_branch
          %5597 = sbr.rel (%p5595) target = $region132
        $region131: #{tpu_custom_call.1} parent=67 // pred_region
          %s5599 = ssub.s32 4096, 4096
          %5600 = vsyncadd %s5591, %s5599
          %s5601 = smul.addr %s43, 32
          %s5602 = smul.addr %s42, 64
          %s5603 = sadd.s32 %s5601, %s5602
          %s5604 = smul.addr %s5603, 128
          %s5605 = scalar_lea.hbm %s12, %s5604
          %s5606 = sshll.u32 %s5594, 4
          %s5607 = int_to_ptr.vmem [resolvable:$true] %s5606
          %5612 = dma.vmem_to_hbm [thread:$0]  %s5607, 4096, %s5605, %s5591, 256, 256, 16
        $region132: #{tpu_custom_call.1} parent=67 // pred_fallthru
          _
      $region68: #{tpu_custom_call.1} parent=5 // pred_fallthru
        _
      %p5613 = scmp.le.s32.totalorder 2, %s32
      // Predicated region
      $region133: #{tpu_custom_call.1} parent=5 // pred_check
        %p5614 = pneg %p5613
      $region134: #{tpu_custom_call.1} parent=5 // pred_check_branch
        %5616 = sbr.rel (%p5614) target = $region136
      $region135: #{tpu_custom_call.1} parent=5 // pred_region
        %s5617 = ssub.s32 %s32, 2
        // Predicated region
        $region137: #{tpu_custom_call.1} parent=135 // pred_check
          %p5618 = pneg %p368
        $region138: #{tpu_custom_call.1} parent=135 // pred_check_branch
          %5620 = sbr.rel (%p5618) target = $region140
        $region139: #{tpu_custom_call.1} parent=135 // pred_region
          %s5621 = sand.u32 %s353, 1
          %s5622 = scalar_lea.sflag [#allocation8], %s5621
          %s5623 = sand.u32 %s353, 1
          %s5624 = smul.addr %s5623, 256
          %s5625 = scalar_lea.vmem [#allocation24], %s5624
          %5626 = dma.done %s5622, 4096
        $region140: #{tpu_custom_call.1} parent=135 // pred_fallthru
          _
      $region136: #{tpu_custom_call.1} parent=5 // pred_fallthru
        _
    $region6: #{tpu_custom_call.1} parent=1 // loop_footer
      %s36 = sadd.s32 1, %s32
    $region7: #{tpu_custom_call.1} parent=1 // loop_footer_branch
      %31 = sbr.rel target = $region3
    $region8: #{tpu_custom_call.1} parent=1 // loop_exit
      _
    %5627 = vsyncpa [#allocation7], 1
    %s5628 = scalar_lea.sflag [#allocation7], 1
    %5629 = vsyncpa %s5628, 1
    %5630 = vsyncpa [#allocation10], 1
    %s5631 = scalar_lea.sflag [#allocation10], 1
    %5632 = vsyncpa %s5631, 1
    %5633 = vsyncpa [#allocation13], 1
    %5634 = vsyncpa [#allocation16], 1
    %5635 = vsyncpa [#allocation22], 1
    %s5636 = scalar_lea.sflag [#allocation22], 1
    %5637 = vsyncpa %s5636, 1
    %5638 = vsyncpa [#allocation8], 1
    %s5639 = scalar_lea.sflag [#allocation8], 1
    %5640 = vsyncpa %s5639, 1

</llo_original>
